<compile_context>
chip_gen: v7x
topology: tpu7x:2x2x1
jax: 0.10.0
libtpu: 0.0.40
codegen_flags: <defaults>
</compile_context>

<pallas_src>
import jax
import jax.numpy as jnp
from jax import lax
from jax.experimental import pallas as pl
from jax.experimental.pallas import tpu as pltpu

BN_EPS = 1e-3  # EfficientNet batch_norm_epsilon

STEM_OUT = 8
HEAD_OUT = 32
NUM_CLASSES = 10
CFGS = [
    dict(expand=1, k=3, s=1, cin=8,  cout=8,  se=0.25, id_skip=True),
    dict(expand=2, k=3, s=2, cin=8,  cout=16, se=0.25, id_skip=True),
    dict(expand=2, k=3, s=1, cin=16, cout=16, se=0.25, id_skip=True),
]


# ----------------------------------------------------------------------------
# geometry helpers
# ----------------------------------------------------------------------------
def _same_pad(size, k, s):
    """TF-style 'same' padding (matches Conv2dStaticSamePadding)."""
    out = -(-size // s)
    pad = max((out - 1) * s + k - size, 0)
    return pad // 2, pad - pad // 2


def _block_geoms(H, W):
    geoms = []
    for cfg in CFGS:
        k, s = cfg["k"], cfg["s"]
        cin, cout, expand = cfg["cin"], cfg["cout"], cfg["expand"]
        cexp = cin * expand
        csq = max(1, int(cin * cfg["se"]))
        pt, pb = _same_pad(H, k, s)
        plft, pr = _same_pad(W, k, s)
        Hp, Wp = H + pt + pb, W + plft + pr
        Ho, Wo = (Hp - k) // s + 1, (Wp - k) // s + 1
        # flattened (row-major) buffer with left guard (plft rows) folded into
        # the tap offsets and a zero tail covering the maximum tap over-read.
        buf_rows = H * W + (k - 1) * W + (k - 1)
        geoms.append(dict(
            k=k, s=s, cin=cin, cout=cout, expand=expand, cexp=cexp, csq=csq,
            H=H, W=W, pt=pt, plft=plft, Ho=Ho, Wo=Wo, buf_rows=buf_rows,
            use_skip=cfg["id_skip"] and s == 1 and cin == cout))
        H, W = Ho, Wo
    return geoms, H, W


# ----------------------------------------------------------------------------
# single fused kernel: stem matmul + MBConv blocks + head + FC
# ----------------------------------------------------------------------------
def _make_fused_kernel(geoms, head_hw):
    def kernel(*refs):
        refs = list(refs)
        cur = [0]

        def nxt():
            r = refs[cur[0]]
            cur[0] += 1
            return r

        patches_ref, stem_w_ref, stem_b_ref = nxt(), nxt(), nxt()
        blk = []
        for g in geoms:
            d = {}
            if g["expand"] != 1:
                d["ew"], d["eb"] = nxt(), nxt()
            d["dw"], d["db"] = nxt(), nxt()
            if g["s"] > 1:
                d["sel"] = nxt()
            d["srw"], d["srb"], d["sew"], d["seb"] = nxt(), nxt(), nxt(), nxt()
            d["pw"], d["pb"] = nxt(), nxt()
            blk.append(d)
        hw_ref, hb_ref, fw_ref, fb_ref = nxt(), nxt(), nxt(), nxt()
        o_ref = nxt()
        bufs = [nxt() for _ in geoms]

        # ---- stem: single matmul over pre-extracted 3x3x3 patches + swish ----
        x = jnp.dot(patches_ref[0], stem_w_ref[...],
                    preferred_element_type=jnp.float32) + stem_b_ref[...]
        x = x * jax.nn.sigmoid(x)                    # (Ho0*Wo0, STEM_OUT) f32

        # ---- MBConv blocks (activations stay in registers between blocks) ----
        for g, d, buf in zip(geoms, blk, bufs):
            k, s, W = g["k"], g["s"], g["W"]
            HW = g["H"] * g["W"]
            HoWo = g["Ho"] * g["Wo"]
            cexp, plft, pt = g["cexp"], g["plft"], g["pt"]
            x_in = x

            # expand 1x1 conv (BN folded) + swish
            if g["expand"] != 1:
                xe = jnp.dot(x_in.astype(jnp.bfloat16), d["ew"][...],
                             preferred_element_type=jnp.float32) + d["eb"][...]
                xe = xe * jax.nn.sigmoid(xe)
            else:
                xe = x_in                            # (HW, cexp) f32

            # flattened, guard-padded buffer: zero halo/guards + one slab store
            lo = plft + pt * W
            if lo > 0:
                buf[0:lo, :] = jnp.zeros((lo, cexp), jnp.float32)
            buf[lo:lo + HW, :] = xe
            hi = g["buf_rows"] - lo - HW
            if hi > 0:
                buf[lo + HW:g["buf_rows"], :] = jnp.zeros((hi, cexp), jnp.float32)

            # depthwise kxk conv (BN folded): whole-image per-tap VPU FMAs
            wdw = d["dw"][...]                       # (k*k, cexp) f32
            col = lax.broadcasted_iota(jnp.int32, (HW, 1), 0) % W
            acc = None
            for kh in range(k):
                for kw in range(k):
                    t = kh * k + kw
                    start = kh * W + kw
                    contrib = buf[start:start + HW, :] * wdw[t:t + 1, :]
                    if kw != plft:                   # 'same' horizontal pad mask
                        off = kw - plft
                        valid = jnp.logical_and(col + off >= 0, col + off < W)
                        contrib = jnp.where(valid, contrib, 0.0)
                    acc = contrib if acc is None else acc + contrib
            if s > 1:                                # one whole-image subsample
                acc = jnp.dot(d["sel"][...], acc,
                              preferred_element_type=jnp.float32)
            dws = acc + d["db"][...]
            dws = dws * jax.nn.sigmoid(dws)          # (Ho*Wo, cexp) f32

            # squeeze & excite (kept in f32)
            pooled = jnp.sum(dws, axis=0, keepdims=True) * (1.0 / HoWo)
            se = jnp.dot(pooled, d["srw"][...],
                         preferred_element_type=jnp.float32) + d["srb"][...]
            se = se * jax.nn.sigmoid(se)
            se = jnp.dot(se, d["sew"][...],
                         preferred_element_type=jnp.float32) + d["seb"][...]
            gated = dws * jax.nn.sigmoid(se)

            # project 1x1 conv (BN folded) [+ identity skip]
            out = jnp.dot(gated.astype(jnp.bfloat16), d["pw"][...],
                          preferred_element_type=jnp.float32) + d["pb"][...]
            if g["use_skip"]:
                # TODO(synk): drop_connect is identity in eval mode.
                out = out + x_in
            x = out

        # ---- head: 1x1 conv + folded-BN + swish + global avg pool + FC ----
        h = jnp.dot(x.astype(jnp.bfloat16), hw_ref[...],
                    preferred_element_type=jnp.float32) + hb_ref[...]
        h = h * jax.nn.sigmoid(h)
        pooled = jnp.sum(h, axis=0, keepdims=True) * (1.0 / head_hw)
        # TODO(synk): dropout before the FC is identity in eval mode.
        logits = jnp.dot(pooled, fw_ref[...],
                         preferred_element_type=jnp.float32) + fb_ref[...]
        o_ref[0, :, :] = logits

    return kernel


# ----------------------------------------------------------------------------
# wrapper
# ----------------------------------------------------------------------------
def _stem_im2col(x_nhwc, k=3, s=2):
    """Extract the stem's kxk/stride-s 'same' patches (layout plumbing only)."""
    N, H, W, C = x_nhwc.shape
    pt, pb = _same_pad(H, k, s)
    plft, pr = _same_pad(W, k, s)
    xp = jnp.pad(x_nhwc, ((0, 0), (pt, pb), (plft, pr), (0, 0)))
    Hp, Wp = H + pt + pb, W + plft + pr
    Ho, Wo = (Hp - k) // s + 1, (Wp - k) // s + 1
    taps = []
    for kh in range(k):
        for kw in range(k):
            taps.append(xp[:, kh:kh + s * (Ho - 1) + 1:s,
                           kw:kw + s * (Wo - 1) + 1:s, :])
    pat = jnp.concatenate(taps, axis=-1)             # (N, Ho, Wo, k*k*C)
    return pat.reshape(N, Ho * Wo, k * k * C).astype(jnp.bfloat16), Ho, Wo


def _sel_matrix(Ho, Wo, H, W, s):
    """(Ho*Wo, H*W) 0/1 matrix selecting flat positions (s*oh)*W + s*ow."""
    rows = jnp.arange(Ho * Wo)
    src = (s * (rows // Wo)) * W + s * (rows % Wo)
    return (jnp.arange(H * W)[None, :] == src[:, None]).astype(jnp.float32)


def _full_spec(arr):
    zeros = (0,) * arr.ndim
    return pl.BlockSpec(arr.shape, lambda n, _z=zeros: _z)


def efficientnet_forward(x_nchw, params):
    # NCHW (PyTorch) -> NHWC and stem patch extraction, once at the boundary.
    x = jnp.transpose(x_nchw, (0, 2, 3, 1)).astype(jnp.float32)
    patches, H0, W0 = _stem_im2col(x)
    N, P, KKC = patches.shape
    geoms, Hh, Wh = _block_geoms(H0, W0)
    head_hw = Hh * Wh

    args = [patches, params["stem"]["w"], params["stem"]["b"]]
    for g, bp in zip(geoms, params["blocks"]):
        if g["expand"] != 1:
            args += [bp["expand_w"], bp["expand_b"]]
        args += [bp["dw_w"], bp["dw_b"]]
        if g["s"] > 1:
            args.append(_sel_matrix(g["Ho"], g["Wo"], g["H"], g["W"], g["s"]))
        args += [bp["se_red_w"], bp["se_red_b"], bp["se_exp_w"], bp["se_exp_b"],
                 bp["project_w"], bp["project_b"]]
    args += [params["head_w"], params["head_b"], params["fc_w"], params["fc_b"]]

    in_specs = [pl.BlockSpec((1, P, KKC), lambda n: (n, 0, 0))]
    in_specs += [_full_spec(a) for a in args[1:]]

    # advisory cost estimate (per image, scaled by N)
    flops = 2 * P * KKC * STEM_OUT
    trans = P * STEM_OUT
    for g in geoms:
        HW, HoWo = g["H"] * g["W"], g["Ho"] * g["Wo"]
        if g["expand"] != 1:
            flops += 2 * HW * g["cin"] * g["cexp"]
            trans += HW * g["cexp"]
        flops += 2 * HW * g["k"] * g["k"] * g["cexp"]
        if g["s"] > 1:
            flops += 2 * HoWo * HW * g["cexp"]
        flops += 4 * g["cexp"] * g["csq"] + 2 * HoWo * g["cexp"] * g["cout"]
        trans += 2 * HoWo * g["cexp"] + g["csq"] + g["cexp"]
    flops += 2 * head_hw * CFGS[-1]["cout"] * HEAD_OUT + 2 * HEAD_OUT * NUM_CLASSES
    trans += head_hw * HEAD_OUT
    bytes_acc = sum(int(a.size) * a.dtype.itemsize for a in args) \
        + N * NUM_CLASSES * 4
    cost = pl.CostEstimate(flops=int(N * flops), transcendentals=int(N * trans),
                           bytes_accessed=int(bytes_acc))

    out = pl.pallas_call(
        _make_fused_kernel(geoms, head_hw),
        grid=(N,),
        in_specs=in_specs,
        out_specs=pl.BlockSpec((1, 1, NUM_CLASSES), lambda n: (n, 0, 0)),
        out_shape=jax.ShapeDtypeStruct((N, 1, NUM_CLASSES), jnp.float32),
        scratch_shapes=[pltpu.VMEM((g["buf_rows"], g["cexp"]), jnp.float32)
                        for g in geoms],
        compiler_params=pltpu.CompilerParams(dimension_semantics=("parallel",)),
        cost_estimate=cost,
    )(*args)
    return out[:, 0, :]


# ----------------------------------------------------------------------------
# parameters (BN running stats folded into weights at init)
# ----------------------------------------------------------------------------
def init_params():
    base = jax.random.PRNGKey(42)
    ctr = [0]

    def nk():
        ctr[0] += 1
        return jax.random.fold_in(base, ctr[0])

    def w_init(shape):
        return 0.1 * jax.random.normal(nk(), shape, jnp.float32)

    def bn(c):
        gamma = 1.0 + 0.1 * jax.random.normal(nk(), (c,), jnp.float32)
        beta = 0.1 * jax.random.normal(nk(), (c,), jnp.float32)
        mean = 0.1 * jax.random.normal(nk(), (c,), jnp.float32)
        var = 1.0 + 0.1 * jnp.abs(jax.random.normal(nk(), (c,), jnp.float32))
        scale = gamma / jnp.sqrt(var + BN_EPS)
        return scale, beta - mean * scale

    params = {}
    # stem: (k, k, Cin, Cout) scaled per out channel, reshaped to (k*k*Cin, Cout)
    sw = w_init((3, 3, 3, STEM_OUT))
    s_sc, s_b = bn(STEM_OUT)
    params["stem"] = dict(
        w=(sw * s_sc[None, None, None, :]).reshape(27, STEM_OUT)
          .astype(jnp.bfloat16),
        b=s_b.reshape(1, STEM_OUT))

    blocks = []
    for cfg in CFGS:
        cin, k = cfg["cin"], cfg["k"]
        cexp = cin * cfg["expand"]
        csq = max(1, int(cin * cfg["se"]))
        p = {}
        if cfg["expand"] != 1:
            ew = w_init((cin, cexp))
            sc0, b0 = bn(cexp)
            p["expand_w"] = (ew * sc0[None, :]).astype(jnp.bfloat16)
            p["expand_b"] = b0.reshape(1, cexp)
        dw = w_init((k, k, cexp))
        sc1, b1 = bn(cexp)
        p["dw_w"] = (dw * sc1[None, None, :]).reshape(k * k, cexp)  # f32 (VPU)
        p["dw_b"] = b1.reshape(1, cexp)
        p["se_red_w"] = w_init((cexp, csq))                         # SE kept f32
        p["se_red_b"] = w_init((csq,)).reshape(1, csq)
        p["se_exp_w"] = w_init((csq, cexp))
        p["se_exp_b"] = w_init((cexp,)).reshape(1, cexp)
        pw = w_init((cexp, cfg["cout"]))
        sc2, b2 = bn(cfg["cout"])
        p["project_w"] = (pw * sc2[None, :]).astype(jnp.bfloat16)
        p["project_b"] = b2.reshape(1, cfg["cout"])
        blocks.append(p)
    params["blocks"] = blocks

    hw = w_init((CFGS[-1]["cout"], HEAD_OUT))
    h_sc, h_b = bn(HEAD_OUT)
    params["head_w"] = (hw * h_sc[None, :]).astype(jnp.bfloat16)
    params["head_b"] = h_b.reshape(1, HEAD_OUT)
    params["fc_w"] = w_init((HEAD_OUT, NUM_CLASSES))                # FC kept f32
    params["fc_b"] = w_init((NUM_CLASSES,)).reshape(1, NUM_CLASSES)
    return params


if __name__ == "__main__":
    params = init_params()
    x = jax.random.normal(jax.random.PRNGKey(0), (2, 3, 16, 16), jnp.float32)
    fwd = jax.jit(lambda inp: efficientnet_forward(inp, params))
    out = jax.block_until_ready(fwd(x))
    assert out.shape == (2, NUM_CLASSES) and out.dtype == jnp.float32
    print("KERNEL_OK")
</pallas_src>

<mosaic_0001>
module attributes {stable_mosaic.version = 11 : i64} {
  func.func @kernel(%arg0: i32, %arg1: memref<1x64x27xbf16, #tpu.memory_space<vmem>>, %arg2: memref<27x8xbf16, #tpu.memory_space<vmem>>, %arg3: memref<1x8xf32, #tpu.memory_space<vmem>>, %arg4: memref<9x8xf32, #tpu.memory_space<vmem>>, %arg5: memref<1x8xf32, #tpu.memory_space<vmem>>, %arg6: memref<8x2xf32, #tpu.memory_space<vmem>>, %arg7: memref<1x2xf32, #tpu.memory_space<vmem>>, %arg8: memref<2x8xf32, #tpu.memory_space<vmem>>, %arg9: memref<1x8xf32, #tpu.memory_space<vmem>>, %arg10: memref<8x8xbf16, #tpu.memory_space<vmem>>, %arg11: memref<1x8xf32, #tpu.memory_space<vmem>>, %arg12: memref<8x16xbf16, #tpu.memory_space<vmem>>, %arg13: memref<1x16xf32, #tpu.memory_space<vmem>>, %arg14: memref<9x16xf32, #tpu.memory_space<vmem>>, %arg15: memref<1x16xf32, #tpu.memory_space<vmem>>, %arg16: memref<16x64xf32, #tpu.memory_space<vmem>>, %arg17: memref<16x2xf32, #tpu.memory_space<vmem>>, %arg18: memref<1x2xf32, #tpu.memory_space<vmem>>, %arg19: memref<2x16xf32, #tpu.memory_space<vmem>>, %arg20: memref<1x16xf32, #tpu.memory_space<vmem>>, %arg21: memref<16x16xbf16, #tpu.memory_space<vmem>>, %arg22: memref<1x16xf32, #tpu.memory_space<vmem>>, %arg23: memref<16x32xbf16, #tpu.memory_space<vmem>>, %arg24: memref<1x32xf32, #tpu.memory_space<vmem>>, %arg25: memref<9x32xf32, #tpu.memory_space<vmem>>, %arg26: memref<1x32xf32, #tpu.memory_space<vmem>>, %arg27: memref<32x4xf32, #tpu.memory_space<vmem>>, %arg28: memref<1x4xf32, #tpu.memory_space<vmem>>, %arg29: memref<4x32xf32, #tpu.memory_space<vmem>>, %arg30: memref<1x32xf32, #tpu.memory_space<vmem>>, %arg31: memref<32x16xbf16, #tpu.memory_space<vmem>>, %arg32: memref<1x16xf32, #tpu.memory_space<vmem>>, %arg33: memref<16x32xbf16, #tpu.memory_space<vmem>>, %arg34: memref<1x32xf32, #tpu.memory_space<vmem>>, %arg35: memref<32x10xf32, #tpu.memory_space<vmem>>, %arg36: memref<1x10xf32, #tpu.memory_space<vmem>>, %arg37: memref<1x1x10xf32, #tpu.memory_space<vmem>>, %arg38: memref<82x8xf32, #tpu.memory_space<vmem>>, %arg39: memref<82x16xf32, #tpu.memory_space<vmem>>, %arg40: memref<26x32xf32, #tpu.memory_space<vmem>>) attributes {dimension_semantics = [#tpu.dimension_semantics<parallel>], iteration_bounds = array<i64: 2>, scalar_prefetch = 0 : i64, scratch_operands = 3 : i64, tpu.core_type = #tpu.core_type<tc>, window_params = [{transform_indices = @transform_0, window_bounds = array<i64: 1, 64, 27>}, {pipeline_mode = #tpu.pipeline_mode<synchronous>, transform_indices = @transform_1, window_bounds = array<i64: 27, 8>}, {pipeline_mode = #tpu.pipeline_mode<synchronous>, transform_indices = @transform_2, window_bounds = array<i64: 1, 8>}, {pipeline_mode = #tpu.pipeline_mode<synchronous>, transform_indices = @transform_3, window_bounds = array<i64: 9, 8>}, {pipeline_mode = #tpu.pipeline_mode<synchronous>, transform_indices = @transform_4, window_bounds = array<i64: 1, 8>}, {pipeline_mode = #tpu.pipeline_mode<synchronous>, transform_indices = @transform_5, window_bounds = array<i64: 8, 2>}, {pipeline_mode = #tpu.pipeline_mode<synchronous>, transform_indices = @transform_6, window_bounds = array<i64: 1, 2>}, {pipeline_mode = #tpu.pipeline_mode<synchronous>, transform_indices = @transform_7, window_bounds = array<i64: 2, 8>}, {pipeline_mode = #tpu.pipeline_mode<synchronous>, transform_indices = @transform_8, window_bounds = array<i64: 1, 8>}, {pipeline_mode = #tpu.pipeline_mode<synchronous>, transform_indices = @transform_9, window_bounds = array<i64: 8, 8>}, {pipeline_mode = #tpu.pipeline_mode<synchronous>, transform_indices = @transform_10, window_bounds = array<i64: 1, 8>}, {pipeline_mode = #tpu.pipeline_mode<synchronous>, transform_indices = @transform_11, window_bounds = array<i64: 8, 16>}, {pipeline_mode = #tpu.pipeline_mode<synchronous>, transform_indices = @transform_12, window_bounds = array<i64: 1, 16>}, {pipeline_mode = #tpu.pipeline_mode<synchronous>, transform_indices = @transform_13, window_bounds = array<i64: 9, 16>}, {pipeline_mode = #tpu.pipeline_mode<synchronous>, transform_indices = @transform_14, window_bounds = array<i64: 1, 16>}, {pipeline_mode = #tpu.pipeline_mode<synchronous>, transform_indices = @transform_15, window_bounds = array<i64: 16, 64>}, {pipeline_mode = #tpu.pipeline_mode<synchronous>, transform_indices = @transform_16, window_bounds = array<i64: 16, 2>}, {pipeline_mode = #tpu.pipeline_mode<synchronous>, transform_indices = @transform_17, window_bounds = array<i64: 1, 2>}, {pipeline_mode = #tpu.pipeline_mode<synchronous>, transform_indices = @transform_18, window_bounds = array<i64: 2, 16>}, {pipeline_mode = #tpu.pipeline_mode<synchronous>, transform_indices = @transform_19, window_bounds = array<i64: 1, 16>}, {pipeline_mode = #tpu.pipeline_mode<synchronous>, transform_indices = @transform_20, window_bounds = array<i64: 16, 16>}, {pipeline_mode = #tpu.pipeline_mode<synchronous>, transform_indices = @transform_21, window_bounds = array<i64: 1, 16>}, {pipeline_mode = #tpu.pipeline_mode<synchronous>, transform_indices = @transform_22, window_bounds = array<i64: 16, 32>}, {pipeline_mode = #tpu.pipeline_mode<synchronous>, transform_indices = @transform_23, window_bounds = array<i64: 1, 32>}, {pipeline_mode = #tpu.pipeline_mode<synchronous>, transform_indices = @transform_24, window_bounds = array<i64: 9, 32>}, {pipeline_mode = #tpu.pipeline_mode<synchronous>, transform_indices = @transform_25, window_bounds = array<i64: 1, 32>}, {pipeline_mode = #tpu.pipeline_mode<synchronous>, transform_indices = @transform_26, window_bounds = array<i64: 32, 4>}, {pipeline_mode = #tpu.pipeline_mode<synchronous>, transform_indices = @transform_27, window_bounds = array<i64: 1, 4>}, {pipeline_mode = #tpu.pipeline_mode<synchronous>, transform_indices = @transform_28, window_bounds = array<i64: 4, 32>}, {pipeline_mode = #tpu.pipeline_mode<synchronous>, transform_indices = @transform_29, window_bounds = array<i64: 1, 32>}, {pipeline_mode = #tpu.pipeline_mode<synchronous>, transform_indices = @transform_30, window_bounds = array<i64: 32, 16>}, {pipeline_mode = #tpu.pipeline_mode<synchronous>, transform_indices = @transform_31, window_bounds = array<i64: 1, 16>}, {pipeline_mode = #tpu.pipeline_mode<synchronous>, transform_indices = @transform_32, window_bounds = array<i64: 16, 32>}, {pipeline_mode = #tpu.pipeline_mode<synchronous>, transform_indices = @transform_33, window_bounds = array<i64: 1, 32>}, {pipeline_mode = #tpu.pipeline_mode<synchronous>, transform_indices = @transform_34, window_bounds = array<i64: 32, 10>}, {pipeline_mode = #tpu.pipeline_mode<synchronous>, transform_indices = @transform_35, window_bounds = array<i64: 1, 10>}, {transform_indices = @transform_36, window_bounds = array<i64: 1, 1, 10>}]} {
    %c0 = arith.constant 0 : index
    %c0_0 = arith.constant 0 : index
    %c0_1 = arith.constant 0 : index
    %0 = vector.load %arg1[%c0, %c0_0, %c0_1] : memref<1x64x27xbf16, #tpu.memory_space<vmem>>, vector<1x64x27xbf16>
    %1 = vector.shape_cast %0 : vector<1x64x27xbf16> to vector<64x27xbf16>
    %c0_2 = arith.constant 0 : index
    %c0_3 = arith.constant 0 : index
    %2 = vector.load %arg2[%c0_2, %c0_3] : memref<27x8xbf16, #tpu.memory_space<vmem>>, vector<27x8xbf16>
    %cst = arith.constant dense<0.000000e+00> : vector<64x8xf32>
    %3 = tpu.matmul %1, %2, %cst {dimension_numbers = #tpu.dot_dimension_numbers<[1], [0], [0], [1], [0, 0, 1, 1], [], []>} : vector<64x27xbf16>, vector<27x8xbf16>, vector<64x8xf32> -> vector<64x8xf32>
    %c0_4 = arith.constant 0 : index
    %c0_5 = arith.constant 0 : index
    %4 = vector.load %arg3[%c0_4, %c0_5] : memref<1x8xf32, #tpu.memory_space<vmem>>, vector<1x8xf32>
    %5 = vector.broadcast %4 : vector<1x8xf32> to vector<64x8xf32>
    %6 = arith.addf %3, %5 : vector<64x8xf32>
    %7 = arith.negf %6 : vector<64x8xf32>
    %8 = math.exp %7 : vector<64x8xf32>
    %cst_6 = arith.constant 1.000000e+00 : f32
    %9 = vector.broadcast %cst_6 : f32 to vector<64x8xf32>
    %10 = arith.addf %9, %8 : vector<64x8xf32>
    %11 = arith.divf %9, %10 : vector<64x8xf32>
    %12 = arith.mulf %6, %11 : vector<64x8xf32>
    %cst_7 = arith.constant 0.000000e+00 : f32
    %13 = vector.broadcast %cst_7 : f32 to vector<9x8xf32>
    %c0_8 = arith.constant 0 : index
    %c0_9 = arith.constant 0 : index
    %14 = vector.load %arg38[%c0_8, %c0_9] : memref<82x8xf32, #tpu.memory_space<vmem>>, vector<9x8xf32>
    tpu.vector_store %arg38[%c0_8, %c0_9], %13 {strides = array<i32>} : memref<82x8xf32, #tpu.memory_space<vmem>>, vector<9x8xf32>,
    %c9 = arith.constant 9 : index
    %c0_10 = arith.constant 0 : index
    %15 = vector.load %arg38[%c9, %c0_10] : memref<82x8xf32, #tpu.memory_space<vmem>>, vector<64x8xf32>
    tpu.vector_store %arg38[%c9, %c0_10], %12 {strides = array<i32>} : memref<82x8xf32, #tpu.memory_space<vmem>>, vector<64x8xf32>,
    %cst_11 = arith.constant 0.000000e+00 : f32
    %16 = vector.broadcast %cst_11 : f32 to vector<9x8xf32>
    %c73 = arith.constant 73 : index
    %c0_12 = arith.constant 0 : index
    %17 = vector.load %arg38[%c73, %c0_12] : memref<82x8xf32, #tpu.memory_space<vmem>>, vector<9x8xf32>
    tpu.vector_store %arg38[%c73, %c0_12], %16 {strides = array<i32>} : memref<82x8xf32, #tpu.memory_space<vmem>>, vector<9x8xf32>,
    %c0_13 = arith.constant 0 : index
    %c0_14 = arith.constant 0 : index
    %18 = vector.load %arg4[%c0_13, %c0_14] : memref<9x8xf32, #tpu.memory_space<vmem>>, vector<9x8xf32>
    %19 = tpu.iota {dimensions = array<i32: 0>} : vector<64x1xi32>
    %c8_i32 = arith.constant 8 : i32
    %c0_i32 = arith.constant 0 : i32
    %20 = arith.cmpi eq, %c8_i32, %c0_i32 : i32
    %c1_i32 = arith.constant 1 : i32
    %21 = arith.select %20, %c1_i32, %c8_i32 : i32
    %22 = vector.broadcast %21 : i32 to vector<64x1xi32>
    %23 = arith.remsi %19, %22 : vector<64x1xi32>
    %c0_i32_15 = arith.constant 0 : i32
    %24 = vector.broadcast %c0_i32_15 : i32 to vector<64x1xi32>
    %25 = arith.cmpi ne, %23, %24 : vector<64x1xi32>
    %c0_i32_16 = arith.constant 0 : i32
    %26 = vector.broadcast %c0_i32_16 : i32 to vector<64x1xi32>
    %27 = arith.cmpi slt, %23, %26 : vector<64x1xi32>
    %c0_i32_17 = arith.constant 0 : i32
    %28 = arith.cmpi slt, %21, %c0_i32_17 : i32
    %29 = vector.broadcast %28 : i1 to vector<64x1xi1>
    %30 = vector.broadcast %29 : vector<64x1xi1> to vector<64x1xi1>
    %31 = arith.xori %27, %30 : vector<64x1xi1>
    %32 = arith.andi %31, %25 : vector<64x1xi1>
    %33 = vector.broadcast %21 : i32 to vector<64x1xi32>
    %34 = arith.addi %23, %33 : vector<64x1xi32>
    %35 = arith.select %32, %34, %23 : vector<64x1xi1>, vector<64x1xi32>
    %c0_18 = arith.constant 0 : index
    %c0_19 = arith.constant 0 : index
    %36 = vector.load %arg38[%c0_18, %c0_19] : memref<82x8xf32, #tpu.memory_space<vmem>>, vector<64x8xf32>
    %37 = vector.extract_strided_slice %18 {offsets = [0, 0], sizes = [1, 8], strides = [1, 1]} : vector<9x8xf32> to vector<1x8xf32>
    %38 = vector.broadcast %37 : vector<1x8xf32> to vector<64x8xf32>
    %39 = arith.mulf %36, %38 : vector<64x8xf32>
    %c-1_i32 = arith.constant -1 : i32
    %40 = vector.broadcast %c-1_i32 : i32 to vector<64x1xi32>
    %41 = arith.addi %35, %40 : vector<64x1xi32>
    %c0_i32_20 = arith.constant 0 : i32
    %42 = vector.broadcast %c0_i32_20 : i32 to vector<64x1xi32>
    %43 = arith.cmpi sge, %41, %42 : vector<64x1xi32>
    %c-1_i32_21 = arith.constant -1 : i32
    %44 = vector.broadcast %c-1_i32_21 : i32 to vector<64x1xi32>
    %45 = arith.addi %35, %44 : vector<64x1xi32>
    %c8_i32_22 = arith.constant 8 : i32
    %46 = vector.broadcast %c8_i32_22 : i32 to vector<64x1xi32>
    %47 = arith.cmpi slt, %45, %46 : vector<64x1xi32>
    %48 = arith.andi %43, %47 : vector<64x1xi1>
    %cst_23 = arith.constant 0.000000e+00 : f32
    %49 = vector.shape_cast %48 : vector<64x1xi1> to vector<64x1xi1>
    %50 = vector.broadcast %49 : vector<64x1xi1> to vector<64x8xi1>
    %51 = vector.broadcast %cst_23 : f32 to vector<64x8xf32>
    %52 = arith.select %50, %39, %51 : vector<64x8xi1>, vector<64x8xf32>
    %c1 = arith.constant 1 : index
    %c0_24 = arith.constant 0 : index
    %53 = vector.load %arg38[%c1, %c0_24] : memref<82x8xf32, #tpu.memory_space<vmem>>, vector<64x8xf32>
    %54 = vector.extract_strided_slice %18 {offsets = [1, 0], sizes = [1, 8], strides = [1, 1]} : vector<9x8xf32> to vector<1x8xf32>
    %55 = vector.broadcast %54 : vector<1x8xf32> to vector<64x8xf32>
    %56 = arith.mulf %53, %55 : vector<64x8xf32>
    %57 = arith.addf %52, %56 : vector<64x8xf32>
    %c2 = arith.constant 2 : index
    %c0_25 = arith.constant 0 : index
    %58 = vector.load %arg38[%c2, %c0_25] : memref<82x8xf32, #tpu.memory_space<vmem>>, vector<64x8xf32>
    %59 = vector.extract_strided_slice %18 {offsets = [2, 0], sizes = [1, 8], strides = [1, 1]} : vector<9x8xf32> to vector<1x8xf32>
    %60 = vector.broadcast %59 : vector<1x8xf32> to vector<64x8xf32>
    %61 = arith.mulf %58, %60 : vector<64x8xf32>
    %c1_i32_26 = arith.constant 1 : i32
    %62 = vector.broadcast %c1_i32_26 : i32 to vector<64x1xi32>
    %63 = arith.addi %35, %62 : vector<64x1xi32>
    %c0_i32_27 = arith.constant 0 : i32
    %64 = vector.broadcast %c0_i32_27 : i32 to vector<64x1xi32>
    %65 = arith.cmpi sge, %63, %64 : vector<64x1xi32>
    %c1_i32_28 = arith.constant 1 : i32
    %66 = vector.broadcast %c1_i32_28 : i32 to vector<64x1xi32>
    %67 = arith.addi %35, %66 : vector<64x1xi32>
    %c8_i32_29 = arith.constant 8 : i32
    %68 = vector.broadcast %c8_i32_29 : i32 to vector<64x1xi32>
    %69 = arith.cmpi slt, %67, %68 : vector<64x1xi32>
    %70 = arith.andi %65, %69 : vector<64x1xi1>
    %cst_30 = arith.constant 0.000000e+00 : f32
    %71 = vector.shape_cast %70 : vector<64x1xi1> to vector<64x1xi1>
    %72 = vector.broadcast %71 : vector<64x1xi1> to vector<64x8xi1>
    %73 = vector.broadcast %cst_30 : f32 to vector<64x8xf32>
    %74 = arith.select %72, %61, %73 : vector<64x8xi1>, vector<64x8xf32>
    %75 = arith.addf %57, %74 : vector<64x8xf32>
    %c8 = arith.constant 8 : index
    %c0_31 = arith.constant 0 : index
    %76 = vector.load %arg38[%c8, %c0_31] : memref<82x8xf32, #tpu.memory_space<vmem>>, vector<64x8xf32>
    %77 = vector.extract_strided_slice %18 {offsets = [3, 0], sizes = [1, 8], strides = [1, 1]} : vector<9x8xf32> to vector<1x8xf32>
    %78 = vector.broadcast %77 : vector<1x8xf32> to vector<64x8xf32>
    %79 = arith.mulf %76, %78 : vector<64x8xf32>
    %c-1_i32_32 = arith.constant -1 : i32
    %80 = vector.broadcast %c-1_i32_32 : i32 to vector<64x1xi32>
    %81 = arith.addi %35, %80 : vector<64x1xi32>
    %c0_i32_33 = arith.constant 0 : i32
    %82 = vector.broadcast %c0_i32_33 : i32 to vector<64x1xi32>
    %83 = arith.cmpi sge, %81, %82 : vector<64x1xi32>
    %c-1_i32_34 = arith.constant -1 : i32
    %84 = vector.broadcast %c-1_i32_34 : i32 to vector<64x1xi32>
    %85 = arith.addi %35, %84 : vector<64x1xi32>
    %c8_i32_35 = arith.constant 8 : i32
    %86 = vector.broadcast %c8_i32_35 : i32 to vector<64x1xi32>
    %87 = arith.cmpi slt, %85, %86 : vector<64x1xi32>
    %88 = arith.andi %83, %87 : vector<64x1xi1>
    %cst_36 = arith.constant 0.000000e+00 : f32
    %89 = vector.shape_cast %88 : vector<64x1xi1> to vector<64x1xi1>
    %90 = vector.broadcast %89 : vector<64x1xi1> to vector<64x8xi1>
    %91 = vector.broadcast %cst_36 : f32 to vector<64x8xf32>
    %92 = arith.select %90, %79, %91 : vector<64x8xi1>, vector<64x8xf32>
    %93 = arith.addf %75, %92 : vector<64x8xf32>
    %c9_37 = arith.constant 9 : index
    %c0_38 = arith.constant 0 : index
    %94 = vector.load %arg38[%c9_37, %c0_38] : memref<82x8xf32, #tpu.memory_space<vmem>>, vector<64x8xf32>
    %95 = vector.extract_strided_slice %18 {offsets = [4, 0], sizes = [1, 8], strides = [1, 1]} : vector<9x8xf32> to vector<1x8xf32>
    %96 = vector.broadcast %95 : vector<1x8xf32> to vector<64x8xf32>
    %97 = arith.mulf %94, %96 : vector<64x8xf32>
    %98 = arith.addf %93, %97 : vector<64x8xf32>
    %c10 = arith.constant 10 : index
    %c0_39 = arith.constant 0 : index
    %99 = vector.load %arg38[%c10, %c0_39] : memref<82x8xf32, #tpu.memory_space<vmem>>, vector<64x8xf32>
    %100 = vector.extract_strided_slice %18 {offsets = [5, 0], sizes = [1, 8], strides = [1, 1]} : vector<9x8xf32> to vector<1x8xf32>
    %101 = vector.broadcast %100 : vector<1x8xf32> to vector<64x8xf32>
    %102 = arith.mulf %99, %101 : vector<64x8xf32>
    %c1_i32_40 = arith.constant 1 : i32
    %103 = vector.broadcast %c1_i32_40 : i32 to vector<64x1xi32>
    %104 = arith.addi %35, %103 : vector<64x1xi32>
    %c0_i32_41 = arith.constant 0 : i32
    %105 = vector.broadcast %c0_i32_41 : i32 to vector<64x1xi32>
    %106 = arith.cmpi sge, %104, %105 : vector<64x1xi32>
    %c1_i32_42 = arith.constant 1 : i32
    %107 = vector.broadcast %c1_i32_42 : i32 to vector<64x1xi32>
    %108 = arith.addi %35, %107 : vector<64x1xi32>
    %c8_i32_43 = arith.constant 8 : i32
    %109 = vector.broadcast %c8_i32_43 : i32 to vector<64x1xi32>
    %110 = arith.cmpi slt, %108, %109 : vector<64x1xi32>
    %111 = arith.andi %106, %110 : vector<64x1xi1>
    %cst_44 = arith.constant 0.000000e+00 : f32
    %112 = vector.shape_cast %111 : vector<64x1xi1> to vector<64x1xi1>
    %113 = vector.broadcast %112 : vector<64x1xi1> to vector<64x8xi1>
    %114 = vector.broadcast %cst_44 : f32 to vector<64x8xf32>
    %115 = arith.select %113, %102, %114 : vector<64x8xi1>, vector<64x8xf32>
    %116 = arith.addf %98, %115 : vector<64x8xf32>
    %c16 = arith.constant 16 : index
    %c0_45 = arith.constant 0 : index
    %117 = vector.load %arg38[%c16, %c0_45] : memref<82x8xf32, #tpu.memory_space<vmem>>, vector<64x8xf32>
    %118 = vector.extract_strided_slice %18 {offsets = [6, 0], sizes = [1, 8], strides = [1, 1]} : vector<9x8xf32> to vector<1x8xf32>
    %119 = vector.broadcast %118 : vector<1x8xf32> to vector<64x8xf32>
    %120 = arith.mulf %117, %119 : vector<64x8xf32>
    %c-1_i32_46 = arith.constant -1 : i32
    %121 = vector.broadcast %c-1_i32_46 : i32 to vector<64x1xi32>
    %122 = arith.addi %35, %121 : vector<64x1xi32>
    %c0_i32_47 = arith.constant 0 : i32
    %123 = vector.broadcast %c0_i32_47 : i32 to vector<64x1xi32>
    %124 = arith.cmpi sge, %122, %123 : vector<64x1xi32>
    %c-1_i32_48 = arith.constant -1 : i32
    %125 = vector.broadcast %c-1_i32_48 : i32 to vector<64x1xi32>
    %126 = arith.addi %35, %125 : vector<64x1xi32>
    %c8_i32_49 = arith.constant 8 : i32
    %127 = vector.broadcast %c8_i32_49 : i32 to vector<64x1xi32>
    %128 = arith.cmpi slt, %126, %127 : vector<64x1xi32>
    %129 = arith.andi %124, %128 : vector<64x1xi1>
    %cst_50 = arith.constant 0.000000e+00 : f32
    %130 = vector.shape_cast %129 : vector<64x1xi1> to vector<64x1xi1>
    %131 = vector.broadcast %130 : vector<64x1xi1> to vector<64x8xi1>
    %132 = vector.broadcast %cst_50 : f32 to vector<64x8xf32>
    %133 = arith.select %131, %120, %132 : vector<64x8xi1>, vector<64x8xf32>
    %134 = arith.addf %116, %133 : vector<64x8xf32>
    %c17 = arith.constant 17 : index
    %c0_51 = arith.constant 0 : index
    %135 = vector.load %arg38[%c17, %c0_51] : memref<82x8xf32, #tpu.memory_space<vmem>>, vector<64x8xf32>
    %136 = vector.extract_strided_slice %18 {offsets = [7, 0], sizes = [1, 8], strides = [1, 1]} : vector<9x8xf32> to vector<1x8xf32>
    %137 = vector.broadcast %136 : vector<1x8xf32> to vector<64x8xf32>
    %138 = arith.mulf %135, %137 : vector<64x8xf32>
    %139 = arith.addf %134, %138 : vector<64x8xf32>
    %c18 = arith.constant 18 : index
    %c0_52 = arith.constant 0 : index
    %140 = vector.load %arg38[%c18, %c0_52] : memref<82x8xf32, #tpu.memory_space<vmem>>, vector<64x8xf32>
    %141 = vector.extract_strided_slice %18 {offsets = [8, 0], sizes = [1, 8], strides = [1, 1]} : vector<9x8xf32> to vector<1x8xf32>
    %142 = vector.broadcast %141 : vector<1x8xf32> to vector<64x8xf32>
    %143 = arith.mulf %140, %142 : vector<64x8xf32>
    %c1_i32_53 = arith.constant 1 : i32
    %144 = vector.broadcast %c1_i32_53 : i32 to vector<64x1xi32>
    %145 = arith.addi %35, %144 : vector<64x1xi32>
    %c0_i32_54 = arith.constant 0 : i32
    %146 = vector.broadcast %c0_i32_54 : i32 to vector<64x1xi32>
    %147 = arith.cmpi sge, %145, %146 : vector<64x1xi32>
    %c1_i32_55 = arith.constant 1 : i32
    %148 = vector.broadcast %c1_i32_55 : i32 to vector<64x1xi32>
    %149 = arith.addi %35, %148 : vector<64x1xi32>
    %c8_i32_56 = arith.constant 8 : i32
    %150 = vector.broadcast %c8_i32_56 : i32 to vector<64x1xi32>
    %151 = arith.cmpi slt, %149, %150 : vector<64x1xi32>
    %152 = arith.andi %147, %151 : vector<64x1xi1>
    %cst_57 = arith.constant 0.000000e+00 : f32
    %153 = vector.shape_cast %152 : vector<64x1xi1> to vector<64x1xi1>
    %154 = vector.broadcast %153 : vector<64x1xi1> to vector<64x8xi1>
    %155 = vector.broadcast %cst_57 : f32 to vector<64x8xf32>
    %156 = arith.select %154, %143, %155 : vector<64x8xi1>, vector<64x8xf32>
    %157 = arith.addf %139, %156 : vector<64x8xf32>
    %c0_58 = arith.constant 0 : index
    %c0_59 = arith.constant 0 : index
    %158 = vector.load %arg5[%c0_58, %c0_59] : memref<1x8xf32, #tpu.memory_space<vmem>>, vector<1x8xf32>
    %159 = vector.broadcast %158 : vector<1x8xf32> to vector<64x8xf32>
    %160 = arith.addf %157, %159 : vector<64x8xf32>
    %161 = arith.negf %160 : vector<64x8xf32>
    %162 = math.exp %161 : vector<64x8xf32>
    %cst_60 = arith.constant 1.000000e+00 : f32
    %163 = vector.broadcast %cst_60 : f32 to vector<64x8xf32>
    %164 = arith.addf %163, %162 : vector<64x8xf32>
    %165 = arith.divf %163, %164 : vector<64x8xf32>
    %166 = arith.mulf %160, %165 : vector<64x8xf32>
    %cst_61 = arith.constant dense<0.000000e+00> : vector<8xf32>
    %167 = vector.multi_reduction <add>, %166, %cst_61 [0] : vector<64x8xf32> to vector<8xf32>
    %168 = vector.shape_cast %167 : vector<8xf32> to vector<1x8xf32>
    %cst_62 = arith.constant 1.562500e-02 : f32
    %169 = vector.broadcast %cst_62 : f32 to vector<1x8xf32>
    %170 = arith.mulf %168, %169 : vector<1x8xf32>
    %c0_63 = arith.constant 0 : index
    %c0_64 = arith.constant 0 : index
    %171 = vector.load %arg6[%c0_63, %c0_64] : memref<8x2xf32, #tpu.memory_space<vmem>>, vector<8x2xf32>
    %cst_65 = arith.constant dense<0.000000e+00> : vector<1x2xf32>
    %172 = tpu.matmul %170, %171, %cst_65 {dimension_numbers = #tpu.dot_dimension_numbers<[1], [0], [0], [1], [0, 0, 1, 1], [], []>} : vector<1x8xf32>, vector<8x2xf32>, vector<1x2xf32> -> vector<1x2xf32>
    %c0_66 = arith.constant 0 : index
    %c0_67 = arith.constant 0 : index
    %173 = vector.load %arg7[%c0_66, %c0_67] : memref<1x2xf32, #tpu.memory_space<vmem>>, vector<1x2xf32>
    %174 = arith.addf %172, %173 : vector<1x2xf32>
    %175 = arith.negf %174 : vector<1x2xf32>
    %176 = math.exp %175 : vector<1x2xf32>
    %cst_68 = arith.constant 1.000000e+00 : f32
    %177 = vector.broadcast %cst_68 : f32 to vector<1x2xf32>
    %178 = arith.addf %177, %176 : vector<1x2xf32>
    %179 = arith.divf %177, %178 : vector<1x2xf32>
    %180 = arith.mulf %174, %179 : vector<1x2xf32>
    %c0_69 = arith.constant 0 : index
    %c0_70 = arith.constant 0 : index
    %181 = vector.load %arg8[%c0_69, %c0_70] : memref<2x8xf32, #tpu.memory_space<vmem>>, vector<2x8xf32>
    %cst_71 = arith.constant dense<0.000000e+00> : vector<1x8xf32>
    %182 = tpu.matmul %180, %181, %cst_71 {dimension_numbers = #tpu.dot_dimension_numbers<[1], [0], [0], [1], [0, 0, 1, 1], [], []>} : vector<1x2xf32>, vector<2x8xf32>, vector<1x8xf32> -> vector<1x8xf32>
    %c0_72 = arith.constant 0 : index
    %c0_73 = arith.constant 0 : index
    %183 = vector.load %arg9[%c0_72, %c0_73] : memref<1x8xf32, #tpu.memory_space<vmem>>, vector<1x8xf32>
    %184 = arith.addf %182, %183 : vector<1x8xf32>
    %185 = arith.negf %184 : vector<1x8xf32>
    %186 = math.exp %185 : vector<1x8xf32>
    %cst_74 = arith.constant 1.000000e+00 : f32
    %187 = vector.broadcast %cst_74 : f32 to vector<1x8xf32>
    %188 = arith.addf %187, %186 : vector<1x8xf32>
    %189 = arith.divf %187, %188 : vector<1x8xf32>
    %190 = vector.broadcast %189 : vector<1x8xf32> to vector<64x8xf32>
    %191 = arith.mulf %166, %190 : vector<64x8xf32>
    %192 = arith.truncf %191 : vector<64x8xf32> to vector<64x8xbf16>
    %c0_75 = arith.constant 0 : index
    %c0_76 = arith.constant 0 : index
    %193 = vector.load %arg10[%c0_75, %c0_76] : memref<8x8xbf16, #tpu.memory_space<vmem>>, vector<8x8xbf16>
    %cst_77 = arith.constant dense<0.000000e+00> : vector<64x8xf32>
    %194 = tpu.matmul %192, %193, %cst_77 {dimension_numbers = #tpu.dot_dimension_numbers<[1], [0], [0], [1], [0, 0, 1, 1], [], []>} : vector<64x8xbf16>, vector<8x8xbf16>, vector<64x8xf32> -> vector<64x8xf32>
    %c0_78 = arith.constant 0 : index
    %c0_79 = arith.constant 0 : index
    %195 = vector.load %arg11[%c0_78, %c0_79] : memref<1x8xf32, #tpu.memory_space<vmem>>, vector<1x8xf32>
    %196 = vector.broadcast %195 : vector<1x8xf32> to vector<64x8xf32>
    %197 = arith.addf %194, %196 : vector<64x8xf32>
    %198 = arith.addf %197, %12 : vector<64x8xf32>
    %199 = arith.truncf %198 : vector<64x8xf32> to vector<64x8xbf16>
    %c0_80 = arith.constant 0 : index
    %c0_81 = arith.constant 0 : index
    %200 = vector.load %arg12[%c0_80, %c0_81] : memref<8x16xbf16, #tpu.memory_space<vmem>>, vector<8x16xbf16>
    %cst_82 = arith.constant dense<0.000000e+00> : vector<64x16xf32>
    %201 = tpu.matmul %199, %200, %cst_82 {dimension_numbers = #tpu.dot_dimension_numbers<[1], [0], [0], [1], [0, 0, 1, 1], [], []>} : vector<64x8xbf16>, vector<8x16xbf16>, vector<64x16xf32> -> vector<64x16xf32>
    %c0_83 = arith.constant 0 : index
    %c0_84 = arith.constant 0 : index
    %202 = vector.load %arg13[%c0_83, %c0_84] : memref<1x16xf32, #tpu.memory_space<vmem>>, vector<1x16xf32>
    %203 = vector.broadcast %202 : vector<1x16xf32> to vector<64x16xf32>
    %204 = arith.addf %201, %203 : vector<64x16xf32>
    %205 = arith.negf %204 : vector<64x16xf32>
    %206 = math.exp %205 : vector<64x16xf32>
    %cst_85 = arith.constant 1.000000e+00 : f32
    %207 = vector.broadcast %cst_85 : f32 to vector<64x16xf32>
    %208 = arith.addf %207, %206 : vector<64x16xf32>
    %209 = arith.divf %207, %208 : vector<64x16xf32>
    %210 = arith.mulf %204, %209 : vector<64x16xf32>
    %c0_86 = arith.constant 0 : index
    %c0_87 = arith.constant 0 : index
    %211 = vector.load %arg39[%c0_86, %c0_87] : memref<82x16xf32, #tpu.memory_space<vmem>>, vector<64x16xf32>
    tpu.vector_store %arg39[%c0_86, %c0_87], %210 {strides = array<i32>} : memref<82x16xf32, #tpu.memory_space<vmem>>, vector<64x16xf32>,
    %cst_88 = arith.constant 0.000000e+00 : f32
    %212 = vector.broadcast %cst_88 : f32 to vector<18x16xf32>
    %c64 = arith.constant 64 : index
    %c0_89 = arith.constant 0 : index
    %213 = vector.load %arg39[%c64, %c0_89] : memref<82x16xf32, #tpu.memory_space<vmem>>, vector<18x16xf32>
    tpu.vector_store %arg39[%c64, %c0_89], %212 {strides = array<i32>} : memref<82x16xf32, #tpu.memory_space<vmem>>, vector<18x16xf32>,
    %c0_90 = arith.constant 0 : index
    %c0_91 = arith.constant 0 : index
    %214 = vector.load %arg14[%c0_90, %c0_91] : memref<9x16xf32, #tpu.memory_space<vmem>>, vector<9x16xf32>
    %215 = tpu.iota {dimensions = array<i32: 0>} : vector<64x1xi32>
    %c8_i32_92 = arith.constant 8 : i32
    %c0_i32_93 = arith.constant 0 : i32
    %216 = arith.cmpi eq, %c8_i32_92, %c0_i32_93 : i32
    %c1_i32_94 = arith.constant 1 : i32
    %217 = arith.select %216, %c1_i32_94, %c8_i32_92 : i32
    %218 = vector.broadcast %217 : i32 to vector<64x1xi32>
    %219 = arith.remsi %215, %218 : vector<64x1xi32>
    %c0_i32_95 = arith.constant 0 : i32
    %220 = vector.broadcast %c0_i32_95 : i32 to vector<64x1xi32>
    %221 = arith.cmpi ne, %219, %220 : vector<64x1xi32>
    %c0_i32_96 = arith.constant 0 : i32
    %222 = vector.broadcast %c0_i32_96 : i32 to vector<64x1xi32>
    %223 = arith.cmpi slt, %219, %222 : vector<64x1xi32>
    %c0_i32_97 = arith.constant 0 : i32
    %224 = arith.cmpi slt, %217, %c0_i32_97 : i32
    %225 = vector.broadcast %224 : i1 to vector<64x1xi1>
    %226 = vector.broadcast %225 : vector<64x1xi1> to vector<64x1xi1>
    %227 = arith.xori %223, %226 : vector<64x1xi1>
    %228 = arith.andi %227, %221 : vector<64x1xi1>
    %229 = vector.broadcast %217 : i32 to vector<64x1xi32>
    %230 = arith.addi %219, %229 : vector<64x1xi32>
    %231 = arith.select %228, %230, %219 : vector<64x1xi1>, vector<64x1xi32>
    %c0_98 = arith.constant 0 : index
    %c0_99 = arith.constant 0 : index
    %232 = vector.load %arg39[%c0_98, %c0_99] : memref<82x16xf32, #tpu.memory_space<vmem>>, vector<64x16xf32>
    %233 = vector.extract_strided_slice %214 {offsets = [0, 0], sizes = [1, 16], strides = [1, 1]} : vector<9x16xf32> to vector<1x16xf32>
    %234 = vector.broadcast %233 : vector<1x16xf32> to vector<64x16xf32>
    %235 = arith.mulf %232, %234 : vector<64x16xf32>
    %c1_100 = arith.constant 1 : index
    %c0_101 = arith.constant 0 : index
    %236 = vector.load %arg39[%c1_100, %c0_101] : memref<82x16xf32, #tpu.memory_space<vmem>>, vector<64x16xf32>
    %237 = vector.extract_strided_slice %214 {offsets = [1, 0], sizes = [1, 16], strides = [1, 1]} : vector<9x16xf32> to vector<1x16xf32>
    %238 = vector.broadcast %237 : vector<1x16xf32> to vector<64x16xf32>
    %239 = arith.mulf %236, %238 : vector<64x16xf32>
    %c1_i32_102 = arith.constant 1 : i32
    %240 = vector.broadcast %c1_i32_102 : i32 to vector<64x1xi32>
    %241 = arith.addi %231, %240 : vector<64x1xi32>
    %c0_i32_103 = arith.constant 0 : i32
    %242 = vector.broadcast %c0_i32_103 : i32 to vector<64x1xi32>
    %243 = arith.cmpi sge, %241, %242 : vector<64x1xi32>
    %c1_i32_104 = arith.constant 1 : i32
    %244 = vector.broadcast %c1_i32_104 : i32 to vector<64x1xi32>
    %245 = arith.addi %231, %244 : vector<64x1xi32>
    %c8_i32_105 = arith.constant 8 : i32
    %246 = vector.broadcast %c8_i32_105 : i32 to vector<64x1xi32>
    %247 = arith.cmpi slt, %245, %246 : vector<64x1xi32>
    %248 = arith.andi %243, %247 : vector<64x1xi1>
    %cst_106 = arith.constant 0.000000e+00 : f32
    %249 = vector.shape_cast %248 : vector<64x1xi1> to vector<64x1xi1>
    %250 = vector.broadcast %249 : vector<64x1xi1> to vector<64x16xi1>
    %251 = vector.broadcast %cst_106 : f32 to vector<64x16xf32>
    %252 = arith.select %250, %239, %251 : vector<64x16xi1>, vector<64x16xf32>
    %253 = arith.addf %235, %252 : vector<64x16xf32>
    %c2_107 = arith.constant 2 : index
    %c0_108 = arith.constant 0 : index
    %254 = vector.load %arg39[%c2_107, %c0_108] : memref<82x16xf32, #tpu.memory_space<vmem>>, vector<64x16xf32>
    %255 = vector.extract_strided_slice %214 {offsets = [2, 0], sizes = [1, 16], strides = [1, 1]} : vector<9x16xf32> to vector<1x16xf32>
    %256 = vector.broadcast %255 : vector<1x16xf32> to vector<64x16xf32>
    %257 = arith.mulf %254, %256 : vector<64x16xf32>
    %c2_i32 = arith.constant 2 : i32
    %258 = vector.broadcast %c2_i32 : i32 to vector<64x1xi32>
    %259 = arith.addi %231, %258 : vector<64x1xi32>
    %c0_i32_109 = arith.constant 0 : i32
    %260 = vector.broadcast %c0_i32_109 : i32 to vector<64x1xi32>
    %261 = arith.cmpi sge, %259, %260 : vector<64x1xi32>
    %c2_i32_110 = arith.constant 2 : i32
    %262 = vector.broadcast %c2_i32_110 : i32 to vector<64x1xi32>
    %263 = arith.addi %231, %262 : vector<64x1xi32>
    %c8_i32_111 = arith.constant 8 : i32
    %264 = vector.broadcast %c8_i32_111 : i32 to vector<64x1xi32>
    %265 = arith.cmpi slt, %263, %264 : vector<64x1xi32>
    %266 = arith.andi %261, %265 : vector<64x1xi1>
    %cst_112 = arith.constant 0.000000e+00 : f32
    %267 = vector.shape_cast %266 : vector<64x1xi1> to vector<64x1xi1>
    %268 = vector.broadcast %267 : vector<64x1xi1> to vector<64x16xi1>
    %269 = vector.broadcast %cst_112 : f32 to vector<64x16xf32>
    %270 = arith.select %268, %257, %269 : vector<64x16xi1>, vector<64x16xf32>
    %271 = arith.addf %253, %270 : vector<64x16xf32>
    %c8_113 = arith.constant 8 : index
    %c0_114 = arith.constant 0 : index
    %272 = vector.load %arg39[%c8_113, %c0_114] : memref<82x16xf32, #tpu.memory_space<vmem>>, vector<64x16xf32>
    %273 = vector.extract_strided_slice %214 {offsets = [3, 0], sizes = [1, 16], strides = [1, 1]} : vector<9x16xf32> to vector<1x16xf32>
    %274 = vector.broadcast %273 : vector<1x16xf32> to vector<64x16xf32>
    %275 = arith.mulf %272, %274 : vector<64x16xf32>
    %276 = arith.addf %271, %275 : vector<64x16xf32>
    %c9_115 = arith.constant 9 : index
    %c0_116 = arith.constant 0 : index
    %277 = vector.load %arg39[%c9_115, %c0_116] : memref<82x16xf32, #tpu.memory_space<vmem>>, vector<64x16xf32>
    %278 = vector.extract_strided_slice %214 {offsets = [4, 0], sizes = [1, 16], strides = [1, 1]} : vector<9x16xf32> to vector<1x16xf32>
    %279 = vector.broadcast %278 : vector<1x16xf32> to vector<64x16xf32>
    %280 = arith.mulf %277, %279 : vector<64x16xf32>
    %c1_i32_117 = arith.constant 1 : i32
    %281 = vector.broadcast %c1_i32_117 : i32 to vector<64x1xi32>
    %282 = arith.addi %231, %281 : vector<64x1xi32>
    %c0_i32_118 = arith.constant 0 : i32
    %283 = vector.broadcast %c0_i32_118 : i32 to vector<64x1xi32>
    %284 = arith.cmpi sge, %282, %283 : vector<64x1xi32>
    %c1_i32_119 = arith.constant 1 : i32
    %285 = vector.broadcast %c1_i32_119 : i32 to vector<64x1xi32>
    %286 = arith.addi %231, %285 : vector<64x1xi32>
    %c8_i32_120 = arith.constant 8 : i32
    %287 = vector.broadcast %c8_i32_120 : i32 to vector<64x1xi32>
    %288 = arith.cmpi slt, %286, %287 : vector<64x1xi32>
    %289 = arith.andi %284, %288 : vector<64x1xi1>
    %cst_121 = arith.constant 0.000000e+00 : f32
    %290 = vector.shape_cast %289 : vector<64x1xi1> to vector<64x1xi1>
    %291 = vector.broadcast %290 : vector<64x1xi1> to vector<64x16xi1>
    %292 = vector.broadcast %cst_121 : f32 to vector<64x16xf32>
    %293 = arith.select %291, %280, %292 : vector<64x16xi1>, vector<64x16xf32>
    %294 = arith.addf %276, %293 : vector<64x16xf32>
    %c10_122 = arith.constant 10 : index
    %c0_123 = arith.constant 0 : index
    %295 = vector.load %arg39[%c10_122, %c0_123] : memref<82x16xf32, #tpu.memory_space<vmem>>, vector<64x16xf32>
    %296 = vector.extract_strided_slice %214 {offsets = [5, 0], sizes = [1, 16], strides = [1, 1]} : vector<9x16xf32> to vector<1x16xf32>
    %297 = vector.broadcast %296 : vector<1x16xf32> to vector<64x16xf32>
    %298 = arith.mulf %295, %297 : vector<64x16xf32>
    %c2_i32_124 = arith.constant 2 : i32
    %299 = vector.broadcast %c2_i32_124 : i32 to vector<64x1xi32>
    %300 = arith.addi %231, %299 : vector<64x1xi32>
    %c0_i32_125 = arith.constant 0 : i32
    %301 = vector.broadcast %c0_i32_125 : i32 to vector<64x1xi32>
    %302 = arith.cmpi sge, %300, %301 : vector<64x1xi32>
    %c2_i32_126 = arith.constant 2 : i32
    %303 = vector.broadcast %c2_i32_126 : i32 to vector<64x1xi32>
    %304 = arith.addi %231, %303 : vector<64x1xi32>
    %c8_i32_127 = arith.constant 8 : i32
    %305 = vector.broadcast %c8_i32_127 : i32 to vector<64x1xi32>
    %306 = arith.cmpi slt, %304, %305 : vector<64x1xi32>
    %307 = arith.andi %302, %306 : vector<64x1xi1>
    %cst_128 = arith.constant 0.000000e+00 : f32
    %308 = vector.shape_cast %307 : vector<64x1xi1> to vector<64x1xi1>
    %309 = vector.broadcast %308 : vector<64x1xi1> to vector<64x16xi1>
    %310 = vector.broadcast %cst_128 : f32 to vector<64x16xf32>
    %311 = arith.select %309, %298, %310 : vector<64x16xi1>, vector<64x16xf32>
    %312 = arith.addf %294, %311 : vector<64x16xf32>
    %c16_129 = arith.constant 16 : index
    %c0_130 = arith.constant 0 : index
    %313 = vector.load %arg39[%c16_129, %c0_130] : memref<82x16xf32, #tpu.memory_space<vmem>>, vector<64x16xf32>
    %314 = vector.extract_strided_slice %214 {offsets = [6, 0], sizes = [1, 16], strides = [1, 1]} : vector<9x16xf32> to vector<1x16xf32>
    %315 = vector.broadcast %314 : vector<1x16xf32> to vector<64x16xf32>
    %316 = arith.mulf %313, %315 : vector<64x16xf32>
    %317 = arith.addf %312, %316 : vector<64x16xf32>
    %c17_131 = arith.constant 17 : index
    %c0_132 = arith.constant 0 : index
    %318 = vector.load %arg39[%c17_131, %c0_132] : memref<82x16xf32, #tpu.memory_space<vmem>>, vector<64x16xf32>
    %319 = vector.extract_strided_slice %214 {offsets = [7, 0], sizes = [1, 16], strides = [1, 1]} : vector<9x16xf32> to vector<1x16xf32>
    %320 = vector.broadcast %319 : vector<1x16xf32> to vector<64x16xf32>
    %321 = arith.mulf %318, %320 : vector<64x16xf32>
    %c1_i32_133 = arith.constant 1 : i32
    %322 = vector.broadcast %c1_i32_133 : i32 to vector<64x1xi32>
    %323 = arith.addi %231, %322 : vector<64x1xi32>
    %c0_i32_134 = arith.constant 0 : i32
    %324 = vector.broadcast %c0_i32_134 : i32 to vector<64x1xi32>
    %325 = arith.cmpi sge, %323, %324 : vector<64x1xi32>
    %c1_i32_135 = arith.constant 1 : i32
    %326 = vector.broadcast %c1_i32_135 : i32 to vector<64x1xi32>
    %327 = arith.addi %231, %326 : vector<64x1xi32>
    %c8_i32_136 = arith.constant 8 : i32
    %328 = vector.broadcast %c8_i32_136 : i32 to vector<64x1xi32>
    %329 = arith.cmpi slt, %327, %328 : vector<64x1xi32>
    %330 = arith.andi %325, %329 : vector<64x1xi1>
    %cst_137 = arith.constant 0.000000e+00 : f32
    %331 = vector.shape_cast %330 : vector<64x1xi1> to vector<64x1xi1>
    %332 = vector.broadcast %331 : vector<64x1xi1> to vector<64x16xi1>
    %333 = vector.broadcast %cst_137 : f32 to vector<64x16xf32>
    %334 = arith.select %332, %321, %333 : vector<64x16xi1>, vector<64x16xf32>
    %335 = arith.addf %317, %334 : vector<64x16xf32>
    %c18_138 = arith.constant 18 : index
    %c0_139 = arith.constant 0 : index
    %336 = vector.load %arg39[%c18_138, %c0_139] : memref<82x16xf32, #tpu.memory_space<vmem>>, vector<64x16xf32>
    %337 = vector.extract_strided_slice %214 {offsets = [8, 0], sizes = [1, 16], strides = [1, 1]} : vector<9x16xf32> to vector<1x16xf32>
    %338 = vector.broadcast %337 : vector<1x16xf32> to vector<64x16xf32>
    %339 = arith.mulf %336, %338 : vector<64x16xf32>
    %c2_i32_140 = arith.constant 2 : i32
    %340 = vector.broadcast %c2_i32_140 : i32 to vector<64x1xi32>
    %341 = arith.addi %231, %340 : vector<64x1xi32>
    %c0_i32_141 = arith.constant 0 : i32
    %342 = vector.broadcast %c0_i32_141 : i32 to vector<64x1xi32>
    %343 = arith.cmpi sge, %341, %342 : vector<64x1xi32>
    %c2_i32_142 = arith.constant 2 : i32
    %344 = vector.broadcast %c2_i32_142 : i32 to vector<64x1xi32>
    %345 = arith.addi %231, %344 : vector<64x1xi32>
    %c8_i32_143 = arith.constant 8 : i32
    %346 = vector.broadcast %c8_i32_143 : i32 to vector<64x1xi32>
    %347 = arith.cmpi slt, %345, %346 : vector<64x1xi32>
    %348 = arith.andi %343, %347 : vector<64x1xi1>
    %cst_144 = arith.constant 0.000000e+00 : f32
    %349 = vector.shape_cast %348 : vector<64x1xi1> to vector<64x1xi1>
    %350 = vector.broadcast %349 : vector<64x1xi1> to vector<64x16xi1>
    %351 = vector.broadcast %cst_144 : f32 to vector<64x16xf32>
    %352 = arith.select %350, %339, %351 : vector<64x16xi1>, vector<64x16xf32>
    %353 = arith.addf %335, %352 : vector<64x16xf32>
    %c0_145 = arith.constant 0 : index
    %c0_146 = arith.constant 0 : index
    %354 = vector.load %arg16[%c0_145, %c0_146] : memref<16x64xf32, #tpu.memory_space<vmem>>, vector<16x64xf32>
    %cst_147 = arith.constant dense<0.000000e+00> : vector<16x16xf32>
    %355 = tpu.matmul %354, %353, %cst_147 {dimension_numbers = #tpu.dot_dimension_numbers<[1], [0], [0], [1], [0, 0, 1, 1], [], []>} : vector<16x64xf32>, vector<64x16xf32>, vector<16x16xf32> -> vector<16x16xf32>
    %c0_148 = arith.constant 0 : index
    %c0_149 = arith.constant 0 : index
    %356 = vector.load %arg15[%c0_148, %c0_149] : memref<1x16xf32, #tpu.memory_space<vmem>>, vector<1x16xf32>
    %357 = vector.broadcast %356 : vector<1x16xf32> to vector<16x16xf32>
    %358 = arith.addf %355, %357 : vector<16x16xf32>
    %359 = arith.negf %358 : vector<16x16xf32>
    %360 = math.exp %359 : vector<16x16xf32>
    %cst_150 = arith.constant 1.000000e+00 : f32
    %361 = vector.broadcast %cst_150 : f32 to vector<16x16xf32>
    %362 = arith.addf %361, %360 : vector<16x16xf32>
    %363 = arith.divf %361, %362 : vector<16x16xf32>
    %364 = arith.mulf %358, %363 : vector<16x16xf32>
    %cst_151 = arith.constant dense<0.000000e+00> : vector<16xf32>
    %365 = vector.multi_reduction <add>, %364, %cst_151 [0] : vector<16x16xf32> to vector<16xf32>
    %366 = vector.shape_cast %365 : vector<16xf32> to vector<1x16xf32>
    %cst_152 = arith.constant 6.250000e-02 : f32
    %367 = vector.broadcast %cst_152 : f32 to vector<1x16xf32>
    %368 = arith.mulf %366, %367 : vector<1x16xf32>
    %c0_153 = arith.constant 0 : index
    %c0_154 = arith.constant 0 : index
    %369 = vector.load %arg17[%c0_153, %c0_154] : memref<16x2xf32, #tpu.memory_space<vmem>>, vector<16x2xf32>
    %cst_155 = arith.constant dense<0.000000e+00> : vector<1x2xf32>
    %370 = tpu.matmul %368, %369, %cst_155 {dimension_numbers = #tpu.dot_dimension_numbers<[1], [0], [0], [1], [0, 0, 1, 1], [], []>} : vector<1x16xf32>, vector<16x2xf32>, vector<1x2xf32> -> vector<1x2xf32>
    %c0_156 = arith.constant 0 : index
    %c0_157 = arith.constant 0 : index
    %371 = vector.load %arg18[%c0_156, %c0_157] : memref<1x2xf32, #tpu.memory_space<vmem>>, vector<1x2xf32>
    %372 = arith.addf %370, %371 : vector<1x2xf32>
    %373 = arith.negf %372 : vector<1x2xf32>
    %374 = math.exp %373 : vector<1x2xf32>
    %cst_158 = arith.constant 1.000000e+00 : f32
    %375 = vector.broadcast %cst_158 : f32 to vector<1x2xf32>
    %376 = arith.addf %375, %374 : vector<1x2xf32>
    %377 = arith.divf %375, %376 : vector<1x2xf32>
    %378 = arith.mulf %372, %377 : vector<1x2xf32>
    %c0_159 = arith.constant 0 : index
    %c0_160 = arith.constant 0 : index
    %379 = vector.load %arg19[%c0_159, %c0_160] : memref<2x16xf32, #tpu.memory_space<vmem>>, vector<2x16xf32>
    %cst_161 = arith.constant dense<0.000000e+00> : vector<1x16xf32>
    %380 = tpu.matmul %378, %379, %cst_161 {dimension_numbers = #tpu.dot_dimension_numbers<[1], [0], [0], [1], [0, 0, 1, 1], [], []>} : vector<1x2xf32>, vector<2x16xf32>, vector<1x16xf32> -> vector<1x16xf32>
    %c0_162 = arith.constant 0 : index
    %c0_163 = arith.constant 0 : index
    %381 = vector.load %arg20[%c0_162, %c0_163] : memref<1x16xf32, #tpu.memory_space<vmem>>, vector<1x16xf32>
    %382 = arith.addf %380, %381 : vector<1x16xf32>
    %383 = arith.negf %382 : vector<1x16xf32>
    %384 = math.exp %383 : vector<1x16xf32>
    %cst_164 = arith.constant 1.000000e+00 : f32
    %385 = vector.broadcast %cst_164 : f32 to vector<1x16xf32>
    %386 = arith.addf %385, %384 : vector<1x16xf32>
    %387 = arith.divf %385, %386 : vector<1x16xf32>
    %388 = vector.broadcast %387 : vector<1x16xf32> to vector<16x16xf32>
    %389 = arith.mulf %364, %388 : vector<16x16xf32>
    %390 = arith.truncf %389 : vector<16x16xf32> to vector<16x16xbf16>
    %c0_165 = arith.constant 0 : index
    %c0_166 = arith.constant 0 : index
    %391 = vector.load %arg21[%c0_165, %c0_166] : memref<16x16xbf16, #tpu.memory_space<vmem>>, vector<16x16xbf16>
    %cst_167 = arith.constant dense<0.000000e+00> : vector<16x16xf32>
    %392 = tpu.matmul %390, %391, %cst_167 {dimension_numbers = #tpu.dot_dimension_numbers<[1], [0], [0], [1], [0, 0, 1, 1], [], []>} : vector<16x16xbf16>, vector<16x16xbf16>, vector<16x16xf32> -> vector<16x16xf32>
    %c0_168 = arith.constant 0 : index
    %c0_169 = arith.constant 0 : index
    %393 = vector.load %arg22[%c0_168, %c0_169] : memref<1x16xf32, #tpu.memory_space<vmem>>, vector<1x16xf32>
    %394 = vector.broadcast %393 : vector<1x16xf32> to vector<16x16xf32>
    %395 = arith.addf %392, %394 : vector<16x16xf32>
    %396 = arith.truncf %395 : vector<16x16xf32> to vector<16x16xbf16>
    %c0_170 = arith.constant 0 : index
    %c0_171 = arith.constant 0 : index
    %397 = vector.load %arg23[%c0_170, %c0_171] : memref<16x32xbf16, #tpu.memory_space<vmem>>, vector<16x32xbf16>
    %cst_172 = arith.constant dense<0.000000e+00> : vector<16x32xf32>
    %398 = tpu.matmul %396, %397, %cst_172 {dimension_numbers = #tpu.dot_dimension_numbers<[1], [0], [0], [1], [0, 0, 1, 1], [], []>} : vector<16x16xbf16>, vector<16x32xbf16>, vector<16x32xf32> -> vector<16x32xf32>
    %c0_173 = arith.constant 0 : index
    %c0_174 = arith.constant 0 : index
    %399 = vector.load %arg24[%c0_173, %c0_174] : memref<1x32xf32, #tpu.memory_space<vmem>>, vector<1x32xf32>
    %400 = vector.broadcast %399 : vector<1x32xf32> to vector<16x32xf32>
    %401 = arith.addf %398, %400 : vector<16x32xf32>
    %402 = arith.negf %401 : vector<16x32xf32>
    %403 = math.exp %402 : vector<16x32xf32>
    %cst_175 = arith.constant 1.000000e+00 : f32
    %404 = vector.broadcast %cst_175 : f32 to vector<16x32xf32>
    %405 = arith.addf %404, %403 : vector<16x32xf32>
    %406 = arith.divf %404, %405 : vector<16x32xf32>
    %407 = arith.mulf %401, %406 : vector<16x32xf32>
    %cst_176 = arith.constant 0.000000e+00 : f32
    %408 = vector.broadcast %cst_176 : f32 to vector<5x32xf32>
    %c0_177 = arith.constant 0 : index
    %c0_178 = arith.constant 0 : index
    %409 = vector.load %arg40[%c0_177, %c0_178] : memref<26x32xf32, #tpu.memory_space<vmem>>, vector<5x32xf32>
    tpu.vector_store %arg40[%c0_177, %c0_178], %408 {strides = array<i32>} : memref<26x32xf32, #tpu.memory_space<vmem>>, vector<5x32xf32>,
    %c5 = arith.constant 5 : index
    %c0_179 = arith.constant 0 : index
    %410 = vector.load %arg40[%c5, %c0_179] : memref<26x32xf32, #tpu.memory_space<vmem>>, vector<16x32xf32>
    tpu.vector_store %arg40[%c5, %c0_179], %407 {strides = array<i32>} : memref<26x32xf32, #tpu.memory_space<vmem>>, vector<16x32xf32>,
    %cst_180 = arith.constant 0.000000e+00 : f32
    %411 = vector.broadcast %cst_180 : f32 to vector<5x32xf32>
    %c21 = arith.constant 21 : index
    %c0_181 = arith.constant 0 : index
    %412 = vector.load %arg40[%c21, %c0_181] : memref<26x32xf32, #tpu.memory_space<vmem>>, vector<5x32xf32>
    tpu.vector_store %arg40[%c21, %c0_181], %411 {strides = array<i32>} : memref<26x32xf32, #tpu.memory_space<vmem>>, vector<5x32xf32>,
    %c0_182 = arith.constant 0 : index
    %c0_183 = arith.constant 0 : index
    %413 = vector.load %arg25[%c0_182, %c0_183] : memref<9x32xf32, #tpu.memory_space<vmem>>, vector<9x32xf32>
    %414 = tpu.iota {dimensions = array<i32: 0>} : vector<16x1xi32>
    %c4_i32 = arith.constant 4 : i32
    %c0_i32_184 = arith.constant 0 : i32
    %415 = arith.cmpi eq, %c4_i32, %c0_i32_184 : i32
    %c1_i32_185 = arith.constant 1 : i32
    %416 = arith.select %415, %c1_i32_185, %c4_i32 : i32
    %417 = vector.broadcast %416 : i32 to vector<16x1xi32>
    %418 = arith.remsi %414, %417 : vector<16x1xi32>
    %c0_i32_186 = arith.constant 0 : i32
    %419 = vector.broadcast %c0_i32_186 : i32 to vector<16x1xi32>
    %420 = arith.cmpi ne, %418, %419 : vector<16x1xi32>
    %c0_i32_187 = arith.constant 0 : i32
    %421 = vector.broadcast %c0_i32_187 : i32 to vector<16x1xi32>
    %422 = arith.cmpi slt, %418, %421 : vector<16x1xi32>
    %c0_i32_188 = arith.constant 0 : i32
    %423 = arith.cmpi slt, %416, %c0_i32_188 : i32
    %424 = vector.broadcast %423 : i1 to vector<16x1xi1>
    %425 = vector.broadcast %424 : vector<16x1xi1> to vector<16x1xi1>
    %426 = arith.xori %422, %425 : vector<16x1xi1>
    %427 = arith.andi %426, %420 : vector<16x1xi1>
    %428 = vector.broadcast %416 : i32 to vector<16x1xi32>
    %429 = arith.addi %418, %428 : vector<16x1xi32>
    %430 = arith.select %427, %429, %418 : vector<16x1xi1>, vector<16x1xi32>
    %c0_189 = arith.constant 0 : index
    %c0_190 = arith.constant 0 : index
    %431 = vector.load %arg40[%c0_189, %c0_190] : memref<26x32xf32, #tpu.memory_space<vmem>>, vector<16x32xf32>
    %432 = vector.extract_strided_slice %413 {offsets = [0, 0], sizes = [1, 32], strides = [1, 1]} : vector<9x32xf32> to vector<1x32xf32>
    %433 = vector.broadcast %432 : vector<1x32xf32> to vector<16x32xf32>
    %434 = arith.mulf %431, %433 : vector<16x32xf32>
    %c-1_i32_191 = arith.constant -1 : i32
    %435 = vector.broadcast %c-1_i32_191 : i32 to vector<16x1xi32>
    %436 = arith.addi %430, %435 : vector<16x1xi32>
    %c0_i32_192 = arith.constant 0 : i32
    %437 = vector.broadcast %c0_i32_192 : i32 to vector<16x1xi32>
    %438 = arith.cmpi sge, %436, %437 : vector<16x1xi32>
    %c-1_i32_193 = arith.constant -1 : i32
    %439 = vector.broadcast %c-1_i32_193 : i32 to vector<16x1xi32>
    %440 = arith.addi %430, %439 : vector<16x1xi32>
    %c4_i32_194 = arith.constant 4 : i32
    %441 = vector.broadcast %c4_i32_194 : i32 to vector<16x1xi32>
    %442 = arith.cmpi slt, %440, %441 : vector<16x1xi32>
    %443 = arith.andi %438, %442 : vector<16x1xi1>
    %cst_195 = arith.constant 0.000000e+00 : f32
    %444 = vector.shape_cast %443 : vector<16x1xi1> to vector<16x1xi1>
    %445 = vector.broadcast %444 : vector<16x1xi1> to vector<16x32xi1>
    %446 = vector.broadcast %cst_195 : f32 to vector<16x32xf32>
    %447 = arith.select %445, %434, %446 : vector<16x32xi1>, vector<16x32xf32>
    %c1_196 = arith.constant 1 : index
    %c0_197 = arith.constant 0 : index
    %448 = vector.load %arg40[%c1_196, %c0_197] : memref<26x32xf32, #tpu.memory_space<vmem>>, vector<16x32xf32>
    %449 = vector.extract_strided_slice %413 {offsets = [1, 0], sizes = [1, 32], strides = [1, 1]} : vector<9x32xf32> to vector<1x32xf32>
    %450 = vector.broadcast %449 : vector<1x32xf32> to vector<16x32xf32>
    %451 = arith.mulf %448, %450 : vector<16x32xf32>
    %452 = arith.addf %447, %451 : vector<16x32xf32>
    %c2_198 = arith.constant 2 : index
    %c0_199 = arith.constant 0 : index
    %453 = vector.load %arg40[%c2_198, %c0_199] : memref<26x32xf32, #tpu.memory_space<vmem>>, vector<16x32xf32>
    %454 = vector.extract_strided_slice %413 {offsets = [2, 0], sizes = [1, 32], strides = [1, 1]} : vector<9x32xf32> to vector<1x32xf32>
    %455 = vector.broadcast %454 : vector<1x32xf32> to vector<16x32xf32>
    %456 = arith.mulf %453, %455 : vector<16x32xf32>
    %c1_i32_200 = arith.constant 1 : i32
    %457 = vector.broadcast %c1_i32_200 : i32 to vector<16x1xi32>
    %458 = arith.addi %430, %457 : vector<16x1xi32>
    %c0_i32_201 = arith.constant 0 : i32
    %459 = vector.broadcast %c0_i32_201 : i32 to vector<16x1xi32>
    %460 = arith.cmpi sge, %458, %459 : vector<16x1xi32>
    %c1_i32_202 = arith.constant 1 : i32
    %461 = vector.broadcast %c1_i32_202 : i32 to vector<16x1xi32>
    %462 = arith.addi %430, %461 : vector<16x1xi32>
    %c4_i32_203 = arith.constant 4 : i32
    %463 = vector.broadcast %c4_i32_203 : i32 to vector<16x1xi32>
    %464 = arith.cmpi slt, %462, %463 : vector<16x1xi32>
    %465 = arith.andi %460, %464 : vector<16x1xi1>
    %cst_204 = arith.constant 0.000000e+00 : f32
    %466 = vector.shape_cast %465 : vector<16x1xi1> to vector<16x1xi1>
    %467 = vector.broadcast %466 : vector<16x1xi1> to vector<16x32xi1>
    %468 = vector.broadcast %cst_204 : f32 to vector<16x32xf32>
    %469 = arith.select %467, %456, %468 : vector<16x32xi1>, vector<16x32xf32>
    %470 = arith.addf %452, %469 : vector<16x32xf32>
    %c4 = arith.constant 4 : index
    %c0_205 = arith.constant 0 : index
    %471 = vector.load %arg40[%c4, %c0_205] : memref<26x32xf32, #tpu.memory_space<vmem>>, vector<16x32xf32>
    %472 = vector.extract_strided_slice %413 {offsets = [3, 0], sizes = [1, 32], strides = [1, 1]} : vector<9x32xf32> to vector<1x32xf32>
    %473 = vector.broadcast %472 : vector<1x32xf32> to vector<16x32xf32>
    %474 = arith.mulf %471, %473 : vector<16x32xf32>
    %c-1_i32_206 = arith.constant -1 : i32
    %475 = vector.broadcast %c-1_i32_206 : i32 to vector<16x1xi32>
    %476 = arith.addi %430, %475 : vector<16x1xi32>
    %c0_i32_207 = arith.constant 0 : i32
    %477 = vector.broadcast %c0_i32_207 : i32 to vector<16x1xi32>
    %478 = arith.cmpi sge, %476, %477 : vector<16x1xi32>
    %c-1_i32_208 = arith.constant -1 : i32
    %479 = vector.broadcast %c-1_i32_208 : i32 to vector<16x1xi32>
    %480 = arith.addi %430, %479 : vector<16x1xi32>
    %c4_i32_209 = arith.constant 4 : i32
    %481 = vector.broadcast %c4_i32_209 : i32 to vector<16x1xi32>
    %482 = arith.cmpi slt, %480, %481 : vector<16x1xi32>
    %483 = arith.andi %478, %482 : vector<16x1xi1>
    %cst_210 = arith.constant 0.000000e+00 : f32
    %484 = vector.shape_cast %483 : vector<16x1xi1> to vector<16x1xi1>
    %485 = vector.broadcast %484 : vector<16x1xi1> to vector<16x32xi1>
    %486 = vector.broadcast %cst_210 : f32 to vector<16x32xf32>
    %487 = arith.select %485, %474, %486 : vector<16x32xi1>, vector<16x32xf32>
    %488 = arith.addf %470, %487 : vector<16x32xf32>
    %c5_211 = arith.constant 5 : index
    %c0_212 = arith.constant 0 : index
    %489 = vector.load %arg40[%c5_211, %c0_212] : memref<26x32xf32, #tpu.memory_space<vmem>>, vector<16x32xf32>
    %490 = vector.extract_strided_slice %413 {offsets = [4, 0], sizes = [1, 32], strides = [1, 1]} : vector<9x32xf32> to vector<1x32xf32>
    %491 = vector.broadcast %490 : vector<1x32xf32> to vector<16x32xf32>
    %492 = arith.mulf %489, %491 : vector<16x32xf32>
    %493 = arith.addf %488, %492 : vector<16x32xf32>
    %c6 = arith.constant 6 : index
    %c0_213 = arith.constant 0 : index
    %494 = vector.load %arg40[%c6, %c0_213] : memref<26x32xf32, #tpu.memory_space<vmem>>, vector<16x32xf32>
    %495 = vector.extract_strided_slice %413 {offsets = [5, 0], sizes = [1, 32], strides = [1, 1]} : vector<9x32xf32> to vector<1x32xf32>
    %496 = vector.broadcast %495 : vector<1x32xf32> to vector<16x32xf32>
    %497 = arith.mulf %494, %496 : vector<16x32xf32>
    %c1_i32_214 = arith.constant 1 : i32
    %498 = vector.broadcast %c1_i32_214 : i32 to vector<16x1xi32>
    %499 = arith.addi %430, %498 : vector<16x1xi32>
    %c0_i32_215 = arith.constant 0 : i32
    %500 = vector.broadcast %c0_i32_215 : i32 to vector<16x1xi32>
    %501 = arith.cmpi sge, %499, %500 : vector<16x1xi32>
    %c1_i32_216 = arith.constant 1 : i32
    %502 = vector.broadcast %c1_i32_216 : i32 to vector<16x1xi32>
    %503 = arith.addi %430, %502 : vector<16x1xi32>
    %c4_i32_217 = arith.constant 4 : i32
    %504 = vector.broadcast %c4_i32_217 : i32 to vector<16x1xi32>
    %505 = arith.cmpi slt, %503, %504 : vector<16x1xi32>
    %506 = arith.andi %501, %505 : vector<16x1xi1>
    %cst_218 = arith.constant 0.000000e+00 : f32
    %507 = vector.shape_cast %506 : vector<16x1xi1> to vector<16x1xi1>
    %508 = vector.broadcast %507 : vector<16x1xi1> to vector<16x32xi1>
    %509 = vector.broadcast %cst_218 : f32 to vector<16x32xf32>
    %510 = arith.select %508, %497, %509 : vector<16x32xi1>, vector<16x32xf32>
    %511 = arith.addf %493, %510 : vector<16x32xf32>
    %c8_219 = arith.constant 8 : index
    %c0_220 = arith.constant 0 : index
    %512 = vector.load %arg40[%c8_219, %c0_220] : memref<26x32xf32, #tpu.memory_space<vmem>>, vector<16x32xf32>
    %513 = vector.extract_strided_slice %413 {offsets = [6, 0], sizes = [1, 32], strides = [1, 1]} : vector<9x32xf32> to vector<1x32xf32>
    %514 = vector.broadcast %513 : vector<1x32xf32> to vector<16x32xf32>
    %515 = arith.mulf %512, %514 : vector<16x32xf32>
    %c-1_i32_221 = arith.constant -1 : i32
    %516 = vector.broadcast %c-1_i32_221 : i32 to vector<16x1xi32>
    %517 = arith.addi %430, %516 : vector<16x1xi32>
    %c0_i32_222 = arith.constant 0 : i32
    %518 = vector.broadcast %c0_i32_222 : i32 to vector<16x1xi32>
    %519 = arith.cmpi sge, %517, %518 : vector<16x1xi32>
    %c-1_i32_223 = arith.constant -1 : i32
    %520 = vector.broadcast %c-1_i32_223 : i32 to vector<16x1xi32>
    %521 = arith.addi %430, %520 : vector<16x1xi32>
    %c4_i32_224 = arith.constant 4 : i32
    %522 = vector.broadcast %c4_i32_224 : i32 to vector<16x1xi32>
    %523 = arith.cmpi slt, %521, %522 : vector<16x1xi32>
    %524 = arith.andi %519, %523 : vector<16x1xi1>
    %cst_225 = arith.constant 0.000000e+00 : f32
    %525 = vector.shape_cast %524 : vector<16x1xi1> to vector<16x1xi1>
    %526 = vector.broadcast %525 : vector<16x1xi1> to vector<16x32xi1>
    %527 = vector.broadcast %cst_225 : f32 to vector<16x32xf32>
    %528 = arith.select %526, %515, %527 : vector<16x32xi1>, vector<16x32xf32>
    %529 = arith.addf %511, %528 : vector<16x32xf32>
    %c9_226 = arith.constant 9 : index
    %c0_227 = arith.constant 0 : index
    %530 = vector.load %arg40[%c9_226, %c0_227] : memref<26x32xf32, #tpu.memory_space<vmem>>, vector<16x32xf32>
    %531 = vector.extract_strided_slice %413 {offsets = [7, 0], sizes = [1, 32], strides = [1, 1]} : vector<9x32xf32> to vector<1x32xf32>
    %532 = vector.broadcast %531 : vector<1x32xf32> to vector<16x32xf32>
    %533 = arith.mulf %530, %532 : vector<16x32xf32>
    %534 = arith.addf %529, %533 : vector<16x32xf32>
    %c10_228 = arith.constant 10 : index
    %c0_229 = arith.constant 0 : index
    %535 = vector.load %arg40[%c10_228, %c0_229] : memref<26x32xf32, #tpu.memory_space<vmem>>, vector<16x32xf32>
    %536 = vector.extract_strided_slice %413 {offsets = [8, 0], sizes = [1, 32], strides = [1, 1]} : vector<9x32xf32> to vector<1x32xf32>
    %537 = vector.broadcast %536 : vector<1x32xf32> to vector<16x32xf32>
    %538 = arith.mulf %535, %537 : vector<16x32xf32>
    %c1_i32_230 = arith.constant 1 : i32
    %539 = vector.broadcast %c1_i32_230 : i32 to vector<16x1xi32>
    %540 = arith.addi %430, %539 : vector<16x1xi32>
    %c0_i32_231 = arith.constant 0 : i32
    %541 = vector.broadcast %c0_i32_231 : i32 to vector<16x1xi32>
    %542 = arith.cmpi sge, %540, %541 : vector<16x1xi32>
    %c1_i32_232 = arith.constant 1 : i32
    %543 = vector.broadcast %c1_i32_232 : i32 to vector<16x1xi32>
    %544 = arith.addi %430, %543 : vector<16x1xi32>
    %c4_i32_233 = arith.constant 4 : i32
    %545 = vector.broadcast %c4_i32_233 : i32 to vector<16x1xi32>
    %546 = arith.cmpi slt, %544, %545 : vector<16x1xi32>
    %547 = arith.andi %542, %546 : vector<16x1xi1>
    %cst_234 = arith.constant 0.000000e+00 : f32
    %548 = vector.shape_cast %547 : vector<16x1xi1> to vector<16x1xi1>
    %549 = vector.broadcast %548 : vector<16x1xi1> to vector<16x32xi1>
    %550 = vector.broadcast %cst_234 : f32 to vector<16x32xf32>
    %551 = arith.select %549, %538, %550 : vector<16x32xi1>, vector<16x32xf32>
    %552 = arith.addf %534, %551 : vector<16x32xf32>
    %c0_235 = arith.constant 0 : index
    %c0_236 = arith.constant 0 : index
    %553 = vector.load %arg26[%c0_235, %c0_236] : memref<1x32xf32, #tpu.memory_space<vmem>>, vector<1x32xf32>
    %554 = vector.broadcast %553 : vector<1x32xf32> to vector<16x32xf32>
    %555 = arith.addf %552, %554 : vector<16x32xf32>
    %556 = arith.negf %555 : vector<16x32xf32>
    %557 = math.exp %556 : vector<16x32xf32>
    %cst_237 = arith.constant 1.000000e+00 : f32
    %558 = vector.broadcast %cst_237 : f32 to vector<16x32xf32>
    %559 = arith.addf %558, %557 : vector<16x32xf32>
    %560 = arith.divf %558, %559 : vector<16x32xf32>
    %561 = arith.mulf %555, %560 : vector<16x32xf32>
    %cst_238 = arith.constant dense<0.000000e+00> : vector<32xf32>
    %562 = vector.multi_reduction <add>, %561, %cst_238 [0] : vector<16x32xf32> to vector<32xf32>
    %563 = vector.shape_cast %562 : vector<32xf32> to vector<1x32xf32>
    %cst_239 = arith.constant 6.250000e-02 : f32
    %564 = vector.broadcast %cst_239 : f32 to vector<1x32xf32>
    %565 = arith.mulf %563, %564 : vector<1x32xf32>
    %c0_240 = arith.constant 0 : index
    %c0_241 = arith.constant 0 : index
    %566 = vector.load %arg27[%c0_240, %c0_241] : memref<32x4xf32, #tpu.memory_space<vmem>>, vector<32x4xf32>
    %cst_242 = arith.constant dense<0.000000e+00> : vector<1x4xf32>
    %567 = tpu.matmul %565, %566, %cst_242 {dimension_numbers = #tpu.dot_dimension_numbers<[1], [0], [0], [1], [0, 0, 1, 1], [], []>} : vector<1x32xf32>, vector<32x4xf32>, vector<1x4xf32> -> vector<1x4xf32>
    %c0_243 = arith.constant 0 : index
    %c0_244 = arith.constant 0 : index
    %568 = vector.load %arg28[%c0_243, %c0_244] : memref<1x4xf32, #tpu.memory_space<vmem>>, vector<1x4xf32>
    %569 = arith.addf %567, %568 : vector<1x4xf32>
    %570 = arith.negf %569 : vector<1x4xf32>
    %571 = math.exp %570 : vector<1x4xf32>
    %cst_245 = arith.constant 1.000000e+00 : f32
    %572 = vector.broadcast %cst_245 : f32 to vector<1x4xf32>
    %573 = arith.addf %572, %571 : vector<1x4xf32>
    %574 = arith.divf %572, %573 : vector<1x4xf32>
    %575 = arith.mulf %569, %574 : vector<1x4xf32>
    %c0_246 = arith.constant 0 : index
    %c0_247 = arith.constant 0 : index
    %576 = vector.load %arg29[%c0_246, %c0_247] : memref<4x32xf32, #tpu.memory_space<vmem>>, vector<4x32xf32>
    %cst_248 = arith.constant dense<0.000000e+00> : vector<1x32xf32>
    %577 = tpu.matmul %575, %576, %cst_248 {dimension_numbers = #tpu.dot_dimension_numbers<[1], [0], [0], [1], [0, 0, 1, 1], [], []>} : vector<1x4xf32>, vector<4x32xf32>, vector<1x32xf32> -> vector<1x32xf32>
    %c0_249 = arith.constant 0 : index
    %c0_250 = arith.constant 0 : index
    %578 = vector.load %arg30[%c0_249, %c0_250] : memref<1x32xf32, #tpu.memory_space<vmem>>, vector<1x32xf32>
    %579 = arith.addf %577, %578 : vector<1x32xf32>
    %580 = arith.negf %579 : vector<1x32xf32>
    %581 = math.exp %580 : vector<1x32xf32>
    %cst_251 = arith.constant 1.000000e+00 : f32
    %582 = vector.broadcast %cst_251 : f32 to vector<1x32xf32>
    %583 = arith.addf %582, %581 : vector<1x32xf32>
    %584 = arith.divf %582, %583 : vector<1x32xf32>
    %585 = vector.broadcast %584 : vector<1x32xf32> to vector<16x32xf32>
    %586 = arith.mulf %561, %585 : vector<16x32xf32>
    %587 = arith.truncf %586 : vector<16x32xf32> to vector<16x32xbf16>
    %c0_252 = arith.constant 0 : index
    %c0_253 = arith.constant 0 : index
    %588 = vector.load %arg31[%c0_252, %c0_253] : memref<32x16xbf16, #tpu.memory_space<vmem>>, vector<32x16xbf16>
    %cst_254 = arith.constant dense<0.000000e+00> : vector<16x16xf32>
    %589 = tpu.matmul %587, %588, %cst_254 {dimension_numbers = #tpu.dot_dimension_numbers<[1], [0], [0], [1], [0, 0, 1, 1], [], []>} : vector<16x32xbf16>, vector<32x16xbf16>, vector<16x16xf32> -> vector<16x16xf32>
    %c0_255 = arith.constant 0 : index
    %c0_256 = arith.constant 0 : index
    %590 = vector.load %arg32[%c0_255, %c0_256] : memref<1x16xf32, #tpu.memory_space<vmem>>, vector<1x16xf32>
    %591 = vector.broadcast %590 : vector<1x16xf32> to vector<16x16xf32>
    %592 = arith.addf %589, %591 : vector<16x16xf32>
    %593 = arith.addf %592, %395 : vector<16x16xf32>
    %594 = arith.truncf %593 : vector<16x16xf32> to vector<16x16xbf16>
    %c0_257 = arith.constant 0 : index
    %c0_258 = arith.constant 0 : index
    %595 = vector.load %arg33[%c0_257, %c0_258] : memref<16x32xbf16, #tpu.memory_space<vmem>>, vector<16x32xbf16>
    %cst_259 = arith.constant dense<0.000000e+00> : vector<16x32xf32>
    %596 = tpu.matmul %594, %595, %cst_259 {dimension_numbers = #tpu.dot_dimension_numbers<[1], [0], [0], [1], [0, 0, 1, 1], [], []>} : vector<16x16xbf16>, vector<16x32xbf16>, vector<16x32xf32> -> vector<16x32xf32>
    %c0_260 = arith.constant 0 : index
    %c0_261 = arith.constant 0 : index
    %597 = vector.load %arg34[%c0_260, %c0_261] : memref<1x32xf32, #tpu.memory_space<vmem>>, vector<1x32xf32>
    %598 = vector.broadcast %597 : vector<1x32xf32> to vector<16x32xf32>
    %599 = arith.addf %596, %598 : vector<16x32xf32>
    %600 = arith.negf %599 : vector<16x32xf32>
    %601 = math.exp %600 : vector<16x32xf32>
    %cst_262 = arith.constant 1.000000e+00 : f32
    %602 = vector.broadcast %cst_262 : f32 to vector<16x32xf32>
    %603 = arith.addf %602, %601 : vector<16x32xf32>
    %604 = arith.divf %602, %603 : vector<16x32xf32>
    %605 = arith.mulf %599, %604 : vector<16x32xf32>
    %cst_263 = arith.constant dense<0.000000e+00> : vector<32xf32>
    %606 = vector.multi_reduction <add>, %605, %cst_263 [0] : vector<16x32xf32> to vector<32xf32>
    %607 = vector.shape_cast %606 : vector<32xf32> to vector<1x32xf32>
    %cst_264 = arith.constant 6.250000e-02 : f32
    %608 = vector.broadcast %cst_264 : f32 to vector<1x32xf32>
    %609 = arith.mulf %607, %608 : vector<1x32xf32>
    %c0_265 = arith.constant 0 : index
    %c0_266 = arith.constant 0 : index
    %610 = vector.load %arg35[%c0_265, %c0_266] : memref<32x10xf32, #tpu.memory_space<vmem>>, vector<32x10xf32>
    %cst_267 = arith.constant dense<0.000000e+00> : vector<1x10xf32>
    %611 = tpu.matmul %609, %610, %cst_267 {dimension_numbers = #tpu.dot_dimension_numbers<[1], [0], [0], [1], [0, 0, 1, 1], [], []>} : vector<1x32xf32>, vector<32x10xf32>, vector<1x10xf32> -> vector<1x10xf32>
    %c0_268 = arith.constant 0 : index
    %c0_269 = arith.constant 0 : index
    %612 = vector.load %arg36[%c0_268, %c0_269] : memref<1x10xf32, #tpu.memory_space<vmem>>, vector<1x10xf32>
    %613 = arith.addf %611, %612 : vector<1x10xf32>
    %c0_270 = arith.constant 0 : index
    %c0_271 = arith.constant 0 : index
    %c0_272 = arith.constant 0 : index
    %614 = vector.load %arg37[%c0_270, %c0_271, %c0_272] : memref<1x1x10xf32, #tpu.memory_space<vmem>>, vector<1x1x10xf32>
    %615 = vector.shape_cast %614 : vector<1x1x10xf32> to vector<1x10xf32>
    %616 = vector.shape_cast %613 : vector<1x10xf32> to vector<1x1x10xf32>
    tpu.vector_store %arg37[%c0_270, %c0_271, %c0_272], %616 {strides = array<i32>} : memref<1x1x10xf32, #tpu.memory_space<vmem>>, vector<1x1x10xf32>,
    return
  }
  func.func @transform_0(%arg0: i32) -> (i32, i32, i32) {
    %c0_i32 = arith.constant 0 : i32
    %c0_i32_0 = arith.constant 0 : i32
    %c0_i32_1 = arith.constant 0 : i32
    return %arg0, %c0_i32, %c0_i32_0 : i32, i32, i32
  }
  func.func @transform_1(%arg0: i32) -> (i32, i32) {
    %c0_i32 = arith.constant 0 : i32
    %c0_i32_0 = arith.constant 0 : i32
    %c0_i32_1 = arith.constant 0 : i32
    return %c0_i32, %c0_i32_0 : i32, i32
  }
  func.func @transform_2(%arg0: i32) -> (i32, i32) {
    %c0_i32 = arith.constant 0 : i32
    %c0_i32_0 = arith.constant 0 : i32
    %c0_i32_1 = arith.constant 0 : i32
    return %c0_i32, %c0_i32_0 : i32, i32
  }
  func.func @transform_3(%arg0: i32) -> (i32, i32) {
    %c0_i32 = arith.constant 0 : i32
    %c0_i32_0 = arith.constant 0 : i32
    %c0_i32_1 = arith.constant 0 : i32
    return %c0_i32, %c0_i32_0 : i32, i32
  }
  func.func @transform_4(%arg0: i32) -> (i32, i32) {
    %c0_i32 = arith.constant 0 : i32
    %c0_i32_0 = arith.constant 0 : i32
    %c0_i32_1 = arith.constant 0 : i32
    return %c0_i32, %c0_i32_0 : i32, i32
  }
  func.func @transform_5(%arg0: i32) -> (i32, i32) {
    %c0_i32 = arith.constant 0 : i32
    %c0_i32_0 = arith.constant 0 : i32
    %c0_i32_1 = arith.constant 0 : i32
    return %c0_i32, %c0_i32_0 : i32, i32
  }
  func.func @transform_6(%arg0: i32) -> (i32, i32) {
    %c0_i32 = arith.constant 0 : i32
    %c0_i32_0 = arith.constant 0 : i32
    %c0_i32_1 = arith.constant 0 : i32
    return %c0_i32, %c0_i32_0 : i32, i32
  }
  func.func @transform_7(%arg0: i32) -> (i32, i32) {
    %c0_i32 = arith.constant 0 : i32
    %c0_i32_0 = arith.constant 0 : i32
    %c0_i32_1 = arith.constant 0 : i32
    return %c0_i32, %c0_i32_0 : i32, i32
  }
  func.func @transform_8(%arg0: i32) -> (i32, i32) {
    %c0_i32 = arith.constant 0 : i32
    %c0_i32_0 = arith.constant 0 : i32
    %c0_i32_1 = arith.constant 0 : i32
    return %c0_i32, %c0_i32_0 : i32, i32
  }
  func.func @transform_9(%arg0: i32) -> (i32, i32) {
    %c0_i32 = arith.constant 0 : i32
    %c0_i32_0 = arith.constant 0 : i32
    %c0_i32_1 = arith.constant 0 : i32
    return %c0_i32, %c0_i32_0 : i32, i32
  }
  func.func @transform_10(%arg0: i32) -> (i32, i32) {
    %c0_i32 = arith.constant 0 : i32
    %c0_i32_0 = arith.constant 0 : i32
    %c0_i32_1 = arith.constant 0 : i32
    return %c0_i32, %c0_i32_0 : i32, i32
  }
  func.func @transform_11(%arg0: i32) -> (i32, i32) {
    %c0_i32 = arith.constant 0 : i32
    %c0_i32_0 = arith.constant 0 : i32
    %c0_i32_1 = arith.constant 0 : i32
    return %c0_i32, %c0_i32_0 : i32, i32
  }
  func.func @transform_12(%arg0: i32) -> (i32, i32) {
    %c0_i32 = arith.constant 0 : i32
    %c0_i32_0 = arith.constant 0 : i32
    %c0_i32_1 = arith.constant 0 : i32
    return %c0_i32, %c0_i32_0 : i32, i32
  }
  func.func @transform_13(%arg0: i32) -> (i32, i32) {
    %c0_i32 = arith.constant 0 : i32
    %c0_i32_0 = arith.constant 0 : i32
    %c0_i32_1 = arith.constant 0 : i32
    return %c0_i32, %c0_i32_0 : i32, i32
  }
  func.func @transform_14(%arg0: i32) -> (i32, i32) {
    %c0_i32 = arith.constant 0 : i32
    %c0_i32_0 = arith.constant 0 : i32
    %c0_i32_1 = arith.constant 0 : i32
    return %c0_i32, %c0_i32_0 : i32, i32
  }
  func.func @transform_15(%arg0: i32) -> (i32, i32) {
    %c0_i32 = arith.constant 0 : i32
    %c0_i32_0 = arith.constant 0 : i32
    %c0_i32_1 = arith.constant 0 : i32
    return %c0_i32, %c0_i32_0 : i32, i32
  }
  func.func @transform_16(%arg0: i32) -> (i32, i32) {
    %c0_i32 = arith.constant 0 : i32
    %c0_i32_0 = arith.constant 0 : i32
    %c0_i32_1 = arith.constant 0 : i32
    return %c0_i32, %c0_i32_0 : i32, i32
  }
  func.func @transform_17(%arg0: i32) -> (i32, i32) {
    %c0_i32 = arith.constant 0 : i32
    %c0_i32_0 = arith.constant 0 : i32
    %c0_i32_1 = arith.constant 0 : i32
    return %c0_i32, %c0_i32_0 : i32, i32
  }
  func.func @transform_18(%arg0: i32) -> (i32, i32) {
    %c0_i32 = arith.constant 0 : i32
    %c0_i32_0 = arith.constant 0 : i32
    %c0_i32_1 = arith.constant 0 : i32
    return %c0_i32, %c0_i32_0 : i32, i32
  }
  func.func @transform_19(%arg0: i32) -> (i32, i32) {
    %c0_i32 = arith.constant 0 : i32
    %c0_i32_0 = arith.constant 0 : i32
    %c0_i32_1 = arith.constant 0 : i32
    return %c0_i32, %c0_i32_0 : i32, i32
  }
  func.func @transform_20(%arg0: i32) -> (i32, i32) {
    %c0_i32 = arith.constant 0 : i32
    %c0_i32_0 = arith.constant 0 : i32
    %c0_i32_1 = arith.constant 0 : i32
    return %c0_i32, %c0_i32_0 : i32, i32
  }
  func.func @transform_21(%arg0: i32) -> (i32, i32) {
    %c0_i32 = arith.constant 0 : i32
    %c0_i32_0 = arith.constant 0 : i32
    %c0_i32_1 = arith.constant 0 : i32
    return %c0_i32, %c0_i32_0 : i32, i32
  }
  func.func @transform_22(%arg0: i32) -> (i32, i32) {
    %c0_i32 = arith.constant 0 : i32
    %c0_i32_0 = arith.constant 0 : i32
    %c0_i32_1 = arith.constant 0 : i32
    return %c0_i32, %c0_i32_0 : i32, i32
  }
  func.func @transform_23(%arg0: i32) -> (i32, i32) {
    %c0_i32 = arith.constant 0 : i32
    %c0_i32_0 = arith.constant 0 : i32
    %c0_i32_1 = arith.constant 0 : i32
    return %c0_i32, %c0_i32_0 : i32, i32
  }
  func.func @transform_24(%arg0: i32) -> (i32, i32) {
    %c0_i32 = arith.constant 0 : i32
    %c0_i32_0 = arith.constant 0 : i32
    %c0_i32_1 = arith.constant 0 : i32
    return %c0_i32, %c0_i32_0 : i32, i32
  }
  func.func @transform_25(%arg0: i32) -> (i32, i32) {
    %c0_i32 = arith.constant 0 : i32
    %c0_i32_0 = arith.constant 0 : i32
    %c0_i32_1 = arith.constant 0 : i32
    return %c0_i32, %c0_i32_0 : i32, i32
  }
  func.func @transform_26(%arg0: i32) -> (i32, i32) {
    %c0_i32 = arith.constant 0 : i32
    %c0_i32_0 = arith.constant 0 : i32
    %c0_i32_1 = arith.constant 0 : i32
    return %c0_i32, %c0_i32_0 : i32, i32
  }
  func.func @transform_27(%arg0: i32) -> (i32, i32) {
    %c0_i32 = arith.constant 0 : i32
    %c0_i32_0 = arith.constant 0 : i32
    %c0_i32_1 = arith.constant 0 : i32
    return %c0_i32, %c0_i32_0 : i32, i32
  }
  func.func @transform_28(%arg0: i32) -> (i32, i32) {
    %c0_i32 = arith.constant 0 : i32
    %c0_i32_0 = arith.constant 0 : i32
    %c0_i32_1 = arith.constant 0 : i32
    return %c0_i32, %c0_i32_0 : i32, i32
  }
  func.func @transform_29(%arg0: i32) -> (i32, i32) {
    %c0_i32 = arith.constant 0 : i32
    %c0_i32_0 = arith.constant 0 : i32
    %c0_i32_1 = arith.constant 0 : i32
    return %c0_i32, %c0_i32_0 : i32, i32
  }
  func.func @transform_30(%arg0: i32) -> (i32, i32) {
    %c0_i32 = arith.constant 0 : i32
    %c0_i32_0 = arith.constant 0 : i32
    %c0_i32_1 = arith.constant 0 : i32
    return %c0_i32, %c0_i32_0 : i32, i32
  }
  func.func @transform_31(%arg0: i32) -> (i32, i32) {
    %c0_i32 = arith.constant 0 : i32
    %c0_i32_0 = arith.constant 0 : i32
    %c0_i32_1 = arith.constant 0 : i32
    return %c0_i32, %c0_i32_0 : i32, i32
  }
  func.func @transform_32(%arg0: i32) -> (i32, i32) {
    %c0_i32 = arith.constant 0 : i32
    %c0_i32_0 = arith.constant 0 : i32
    %c0_i32_1 = arith.constant 0 : i32
    return %c0_i32, %c0_i32_0 : i32, i32
  }
  func.func @transform_33(%arg0: i32) -> (i32, i32) {
    %c0_i32 = arith.constant 0 : i32
    %c0_i32_0 = arith.constant 0 : i32
    %c0_i32_1 = arith.constant 0 : i32
    return %c0_i32, %c0_i32_0 : i32, i32
  }
  func.func @transform_34(%arg0: i32) -> (i32, i32) {
    %c0_i32 = arith.constant 0 : i32
    %c0_i32_0 = arith.constant 0 : i32
    %c0_i32_1 = arith.constant 0 : i32
    return %c0_i32, %c0_i32_0 : i32, i32
  }
  func.func @transform_35(%arg0: i32) -> (i32, i32) {
    %c0_i32 = arith.constant 0 : i32
    %c0_i32_0 = arith.constant 0 : i32
    %c0_i32_1 = arith.constant 0 : i32
    return %c0_i32, %c0_i32_0 : i32, i32
  }
  func.func @transform_36(%arg0: i32) -> (i32, i32, i32) {
    %c0_i32 = arith.constant 0 : i32
    %c0_i32_0 = arith.constant 0 : i32
    %c0_i32_1 = arith.constant 0 : i32
    return %arg0, %c0_i32, %c0_i32_0 : i32, i32, i32
  }
}

</mosaic_0001>

<llo_original>
// kernel: _lambda_.1
$region0: #{_lambda_.1}
  #allocation0 [shape = 'u32[]', space=smem, size = 0x4, offset = 0x4, fixed_abs, tag = 'smem constant byte address 0x4 - core index']
  #allocation1 [shape = 'u32[144,128]{1,0:T(1,128)}', space=vmem, size = 0x12000, scoped, tag = 'internal scratch']
  #allocation2 [shape = 'f32[82,8]{1,0:T(8,128)}', space=vmem, size = 0xb000, scoped, tag = 'scratch operand']
  #allocation3 [shape = 'f32[82,16]{1,0:T(8,128)}', space=vmem, size = 0xb000, scoped, tag = 'scratch operand']
  #allocation4 [shape = 'f32[26,32]{1,0:T(8,128)}', space=vmem, size = 0x4000, scoped, tag = 'scratch operand']
  %s0 = inlined_call_operand.smem [shape: u32[37], index: -1, kind: input, shape index: {}]
  %s1 = sld [smem:[%s0]]
  %s2 = scalar_lea.smem %s0, 1
  %s3 = sld [smem:[%s2]]
  %s4 = scalar_lea.smem %s0, 2
  %s5 = sld [smem:[%s4]]
  %s6 = scalar_lea.smem %s0, 3
  %s7 = sld [smem:[%s6]]
  %s8 = scalar_lea.smem %s0, 4
  %s9 = sld [smem:[%s8]]
  %s10 = scalar_lea.smem %s0, 5
  %s11 = sld [smem:[%s10]]
  %s12 = scalar_lea.smem %s0, 6
  %s13 = sld [smem:[%s12]]
  %s14 = scalar_lea.smem %s0, 7
  %s15 = sld [smem:[%s14]]
  %s16 = scalar_lea.smem %s0, 8
  %s17 = sld [smem:[%s16]]
  %s18 = scalar_lea.smem %s0, 9
  %s19 = sld [smem:[%s18]]
  %s20 = scalar_lea.smem %s0, 10
  %s21 = sld [smem:[%s20]]
  %s22 = scalar_lea.smem %s0, 11
  %s23 = sld [smem:[%s22]]
  %s24 = scalar_lea.smem %s0, 12
  %s25 = sld [smem:[%s24]]
  %s26 = scalar_lea.smem %s0, 13
  %s27 = sld [smem:[%s26]]
  %s28 = scalar_lea.smem %s0, 14
  %s29 = sld [smem:[%s28]]
  %s30 = scalar_lea.smem %s0, 15
  %s31 = sld [smem:[%s30]]
  %s32 = scalar_lea.smem %s0, 16
  %s33 = sld [smem:[%s32]]
  %s34 = scalar_lea.smem %s0, 17
  %s35 = sld [smem:[%s34]]
  %s36 = scalar_lea.smem %s0, 18
  %s37 = sld [smem:[%s36]]
  %s38 = scalar_lea.smem %s0, 19
  %s39 = sld [smem:[%s38]]
  %s40 = scalar_lea.smem %s0, 20
  %s41 = sld [smem:[%s40]]
  %s42 = scalar_lea.smem %s0, 21
  %s43 = sld [smem:[%s42]]
  %s44 = scalar_lea.smem %s0, 22
  %s45 = sld [smem:[%s44]]
  %s46 = scalar_lea.smem %s0, 23
  %s47 = sld [smem:[%s46]]
  %s48 = scalar_lea.smem %s0, 24
  %s49 = sld [smem:[%s48]]
  %s50 = scalar_lea.smem %s0, 25
  %s51 = sld [smem:[%s50]]
  %s52 = scalar_lea.smem %s0, 26
  %s53 = sld [smem:[%s52]]
  %s54 = scalar_lea.smem %s0, 27
  %s55 = sld [smem:[%s54]]
  %s56 = scalar_lea.smem %s0, 28
  %s57 = sld [smem:[%s56]]
  %s58 = scalar_lea.smem %s0, 29
  %s59 = sld [smem:[%s58]]
  %s60 = scalar_lea.smem %s0, 30
  %s61 = sld [smem:[%s60]]
  %s62 = scalar_lea.smem %s0, 31
  %s63 = sld [smem:[%s62]]
  %s64 = scalar_lea.smem %s0, 32
  %s65 = sld [smem:[%s64]]
  %s66 = scalar_lea.smem %s0, 33
  %s67 = sld [smem:[%s66]]
  %s68 = scalar_lea.smem %s0, 34
  %s69 = sld [smem:[%s68]]
  %s70 = scalar_lea.smem %s0, 35
  %s71 = sld [smem:[%s70]]
  %s72 = scalar_lea.smem %s0, 36
  %s73 = sld [smem:[%s72]]
  %s74 = sld [smem:[#allocation0]]
  $region177: #{_lambda_.1} parent=0
    _
  %s76 = ssub.s32 1, %s74
  %s77 = scalar_select 0, %s76, %s74
  $region1: #{_lambda_.1} parent=0
    #allocation5 [shape = 'u8[1024]{0}', space=vmem, size = 0x400, scoped, tag = 'output window, operand 0']
    #allocation6 [shape = 's32[2]{0}', space=sflag, size = 0x8, scoped, tag = 'scoped memory for _lambda_.1']
    %78 = vsyncpa [#allocation6], 0
    %s79 = scalar_lea.sflag [#allocation6], 1
    %80 = vsyncpa %s79, 0
    loop: start=0, step=1, limit=4
    $region2: #{_lambda_.1} parent=1 // loop_pre_header
      _
    $region3: #{_lambda_.1} parent=1 // loop_header
      %s82 = sphi 0, %s86
      %p83 = scmp.ge.s32.totalorder %s82, 4
      %s92 = sphi 0, %s94
      %s95 = sphi 0, %s92
      %s96 = sphi 0, %s95
      %s112 = sphi 0, %s96
      %s116 = sphi 0, %s116
      %s118 = sphi 0, %s116
      %s119 = sphi 0, %s118
      %s133 = sphi 0, %s119
      %s137 = sphi 0, %s137
      %s139 = sphi 0, %s137
      %s140 = sphi 0, %s139
      %s154 = sphi 0, %s140
      %s158 = sphi 0, %s158
      %s160 = sphi 0, %s158
      %s161 = sphi 0, %s160
      %s175 = sphi 0, %s161
      %s179 = sphi 0, %s179
      %s181 = sphi 0, %s179
      %s182 = sphi 0, %s181
      %s196 = sphi 0, %s182
      %s200 = sphi 0, %s200
      %s202 = sphi 0, %s200
      %s203 = sphi 0, %s202
      %s217 = sphi 0, %s203
      %s221 = sphi 0, %s221
      %s223 = sphi 0, %s221
      %s224 = sphi 0, %s223
      %s238 = sphi 0, %s224
      %s242 = sphi 0, %s242
      %s244 = sphi 0, %s242
      %s245 = sphi 0, %s244
      %s259 = sphi 0, %s245
      %s263 = sphi 0, %s263
      %s265 = sphi 0, %s263
      %s266 = sphi 0, %s265
      %s280 = sphi 0, %s266
      %s284 = sphi 0, %s284
      %s286 = sphi 0, %s284
      %s287 = sphi 0, %s286
      %s301 = sphi 0, %s287
      %s305 = sphi 0, %s305
      %s307 = sphi 0, %s305
      %s308 = sphi 0, %s307
      %s322 = sphi 0, %s308
      %s326 = sphi 0, %s326
      %s328 = sphi 0, %s326
      %s329 = sphi 0, %s328
      %s343 = sphi 0, %s329
      %s347 = sphi 0, %s347
      %s349 = sphi 0, %s347
      %s350 = sphi 0, %s349
      %s364 = sphi 0, %s350
      %s368 = sphi 0, %s368
      %s370 = sphi 0, %s368
      %s371 = sphi 0, %s370
      %s385 = sphi 0, %s371
      %s389 = sphi 0, %s389
      %s391 = sphi 0, %s389
      %s392 = sphi 0, %s391
      %s406 = sphi 0, %s392
      %s410 = sphi 0, %s410
      %s412 = sphi 0, %s410
      %s413 = sphi 0, %s412
      %s427 = sphi 0, %s413
      %s431 = sphi 0, %s431
      %s433 = sphi 0, %s431
      %s434 = sphi 0, %s433
      %s448 = sphi 0, %s434
      %s452 = sphi 0, %s452
      %s454 = sphi 0, %s452
      %s455 = sphi 0, %s454
      %s469 = sphi 0, %s455
      %s473 = sphi 0, %s473
      %s475 = sphi 0, %s473
      %s476 = sphi 0, %s475
      %s490 = sphi 0, %s476
      %s494 = sphi 0, %s494
      %s496 = sphi 0, %s494
      %s497 = sphi 0, %s496
      %s511 = sphi 0, %s497
      %s515 = sphi 0, %s515
      %s517 = sphi 0, %s515
      %s518 = sphi 0, %s517
      %s532 = sphi 0, %s518
      %s536 = sphi 0, %s536
      %s538 = sphi 0, %s536
      %s539 = sphi 0, %s538
      %s553 = sphi 0, %s539
      %s557 = sphi 0, %s557
      %s559 = sphi 0, %s557
      %s560 = sphi 0, %s559
      %s574 = sphi 0, %s560
      %s578 = sphi 0, %s578
      %s580 = sphi 0, %s578
      %s581 = sphi 0, %s580
      %s595 = sphi 0, %s581
      %s599 = sphi 0, %s599
      %s601 = sphi 0, %s599
      %s602 = sphi 0, %s601
      %s616 = sphi 0, %s602
      %s620 = sphi 0, %s620
      %s622 = sphi 0, %s620
      %s623 = sphi 0, %s622
      %s637 = sphi 0, %s623
      %s641 = sphi 0, %s641
      %s643 = sphi 0, %s641
      %s644 = sphi 0, %s643
      %s658 = sphi 0, %s644
      %s662 = sphi 0, %s662
      %s664 = sphi 0, %s662
      %s665 = sphi 0, %s664
      %s679 = sphi 0, %s665
      %s683 = sphi 0, %s683
      %s685 = sphi 0, %s683
      %s686 = sphi 0, %s685
      %s700 = sphi 0, %s686
      %s704 = sphi 0, %s704
      %s706 = sphi 0, %s704
      %s707 = sphi 0, %s706
      %s721 = sphi 0, %s707
      %s725 = sphi 0, %s725
      %s727 = sphi 0, %s725
      %s728 = sphi 0, %s727
      %s742 = sphi 0, %s728
      %s746 = sphi 0, %s746
      %s748 = sphi 0, %s746
      %s749 = sphi 0, %s748
      %s763 = sphi 0, %s749
      %s767 = sphi 0, %s767
      %s769 = sphi 0, %s767
      %s770 = sphi 0, %s769
      %s784 = sphi 0, %s770
      %s788 = sphi 0, %s788
      %s790 = sphi 0, %s788
      %s791 = sphi 0, %s790
      %s805 = sphi 0, %s791
      %s809 = sphi 0, %s809
      %s811 = sphi 0, %s809
      %s812 = sphi 0, %s811
      %s826 = sphi 0, %s812
      %s830 = sphi 0, %s830
      %s832 = sphi 0, %s830
      %s833 = sphi 0, %s832
      %s847 = sphi 0, %s833
      %s853 = sphi 0, %s855
      %s856 = sphi 0, %s853
      %s857 = sphi 0, %s856
      %s873 = sphi 0, %s857
    $region4: #{_lambda_.1} parent=1 // loop_header_branch
      %85 = sbr.rel (%p83) target = $region8
    $region5: #{_lambda_.1} parent=1 // loop_body
      %s87 = ssub.s32 %s82, 1
      %s88 = ssub.s32 %s82, 2
      %s89 = sadd.s32 %s82, 1
      %s90 = ssub.s32 %s82, %s89
      %p91 = scmp.eq.s32.totalorder %s90, 0
      %s93 = sadd.s32 %s92, 1
      %s94 = scalar_select %p91, %s92, %s93
      %p97 = pneg %p91
      %p98 = scmp.eq.s32.totalorder %s82, 1
      %p99 = por %p97, %p98
      %p100 = scmp.ne.s32.totalorder %s92, %s95
      %p101 = scmp.eq.s32.totalorder %s82, 0
      %p102 = por %p100, %p101
      %p103 = scmp.ne.s32.totalorder %s92, %s95
      %p104 = scmp.eq.s32.totalorder %s87, 1
      %p105 = por %p103, %p104
      %p106 = scmp.ne.s32.totalorder %s95, %s96
      %p107 = scmp.eq.s32.totalorder %s87, 0
      %p108 = por %p106, %p107
      %p109 = scmp.ne.s32.totalorder %s95, %s96
      %p110 = scmp.eq.s32.totalorder %s88, 1
      %p111 = por %p109, %p110
      %p113 = scmp.ne.s32.totalorder %s96, %s112
      %p114 = scmp.eq.s32.totalorder %s88, 0
      %p115 = por %p113, %p114
      %s117 = sadd.s32 %s116, 1
      %p120 = scmp.eq.s32.totalorder %s82, 1
      %p121 = scmp.ne.s32.totalorder %s116, %s118
      %p122 = scmp.eq.s32.totalorder %s82, 0
      %p123 = por %p121, %p122
      %p124 = scmp.ne.s32.totalorder %s116, %s118
      %p125 = scmp.eq.s32.totalorder %s87, 1
      %p126 = por %p124, %p125
      %p127 = scmp.ne.s32.totalorder %s118, %s119
      %p128 = scmp.eq.s32.totalorder %s87, 0
      %p129 = por %p127, %p128
      %p130 = scmp.ne.s32.totalorder %s118, %s119
      %p131 = scmp.eq.s32.totalorder %s88, 1
      %p132 = por %p130, %p131
      %p134 = scmp.ne.s32.totalorder %s119, %s133
      %p135 = scmp.eq.s32.totalorder %s88, 0
      %p136 = por %p134, %p135
      %s138 = sadd.s32 %s137, 1
      %p141 = scmp.eq.s32.totalorder %s82, 1
      %p142 = scmp.ne.s32.totalorder %s137, %s139
      %p143 = scmp.eq.s32.totalorder %s82, 0
      %p144 = por %p142, %p143
      %p145 = scmp.ne.s32.totalorder %s137, %s139
      %p146 = scmp.eq.s32.totalorder %s87, 1
      %p147 = por %p145, %p146
      %p148 = scmp.ne.s32.totalorder %s139, %s140
      %p149 = scmp.eq.s32.totalorder %s87, 0
      %p150 = por %p148, %p149
      %p151 = scmp.ne.s32.totalorder %s139, %s140
      %p152 = scmp.eq.s32.totalorder %s88, 1
      %p153 = por %p151, %p152
      %p155 = scmp.ne.s32.totalorder %s140, %s154
      %p156 = scmp.eq.s32.totalorder %s88, 0
      %p157 = por %p155, %p156
      %s159 = sadd.s32 %s158, 1
      %p162 = scmp.eq.s32.totalorder %s82, 1
      %p163 = scmp.ne.s32.totalorder %s158, %s160
      %p164 = scmp.eq.s32.totalorder %s82, 0
      %p165 = por %p163, %p164
      %p166 = scmp.ne.s32.totalorder %s158, %s160
      %p167 = scmp.eq.s32.totalorder %s87, 1
      %p168 = por %p166, %p167
      %p169 = scmp.ne.s32.totalorder %s160, %s161
      %p170 = scmp.eq.s32.totalorder %s87, 0
      %p171 = por %p169, %p170
      %p172 = scmp.ne.s32.totalorder %s160, %s161
      %p173 = scmp.eq.s32.totalorder %s88, 1
      %p174 = por %p172, %p173
      %p176 = scmp.ne.s32.totalorder %s161, %s175
      %p177 = scmp.eq.s32.totalorder %s88, 0
      %p178 = por %p176, %p177
      %s180 = sadd.s32 %s179, 1
      %p183 = scmp.eq.s32.totalorder %s82, 1
      %p184 = scmp.ne.s32.totalorder %s179, %s181
      %p185 = scmp.eq.s32.totalorder %s82, 0
      %p186 = por %p184, %p185
      %p187 = scmp.ne.s32.totalorder %s179, %s181
      %p188 = scmp.eq.s32.totalorder %s87, 1
      %p189 = por %p187, %p188
      %p190 = scmp.ne.s32.totalorder %s181, %s182
      %p191 = scmp.eq.s32.totalorder %s87, 0
      %p192 = por %p190, %p191
      %p193 = scmp.ne.s32.totalorder %s181, %s182
      %p194 = scmp.eq.s32.totalorder %s88, 1
      %p195 = por %p193, %p194
      %p197 = scmp.ne.s32.totalorder %s182, %s196
      %p198 = scmp.eq.s32.totalorder %s88, 0
      %p199 = por %p197, %p198
      %s201 = sadd.s32 %s200, 1
      %p204 = scmp.eq.s32.totalorder %s82, 1
      %p205 = scmp.ne.s32.totalorder %s200, %s202
      %p206 = scmp.eq.s32.totalorder %s82, 0
      %p207 = por %p205, %p206
      %p208 = scmp.ne.s32.totalorder %s200, %s202
      %p209 = scmp.eq.s32.totalorder %s87, 1
      %p210 = por %p208, %p209
      %p211 = scmp.ne.s32.totalorder %s202, %s203
      %p212 = scmp.eq.s32.totalorder %s87, 0
      %p213 = por %p211, %p212
      %p214 = scmp.ne.s32.totalorder %s202, %s203
      %p215 = scmp.eq.s32.totalorder %s88, 1
      %p216 = por %p214, %p215
      %p218 = scmp.ne.s32.totalorder %s203, %s217
      %p219 = scmp.eq.s32.totalorder %s88, 0
      %p220 = por %p218, %p219
      %s222 = sadd.s32 %s221, 1
      %p225 = scmp.eq.s32.totalorder %s82, 1
      %p226 = scmp.ne.s32.totalorder %s221, %s223
      %p227 = scmp.eq.s32.totalorder %s82, 0
      %p228 = por %p226, %p227
      %p229 = scmp.ne.s32.totalorder %s221, %s223
      %p230 = scmp.eq.s32.totalorder %s87, 1
      %p231 = por %p229, %p230
      %p232 = scmp.ne.s32.totalorder %s223, %s224
      %p233 = scmp.eq.s32.totalorder %s87, 0
      %p234 = por %p232, %p233
      %p235 = scmp.ne.s32.totalorder %s223, %s224
      %p236 = scmp.eq.s32.totalorder %s88, 1
      %p237 = por %p235, %p236
      %p239 = scmp.ne.s32.totalorder %s224, %s238
      %p240 = scmp.eq.s32.totalorder %s88, 0
      %p241 = por %p239, %p240
      %s243 = sadd.s32 %s242, 1
      %p246 = scmp.eq.s32.totalorder %s82, 1
      %p247 = scmp.ne.s32.totalorder %s242, %s244
      %p248 = scmp.eq.s32.totalorder %s82, 0
      %p249 = por %p247, %p248
      %p250 = scmp.ne.s32.totalorder %s242, %s244
      %p251 = scmp.eq.s32.totalorder %s87, 1
      %p252 = por %p250, %p251
      %p253 = scmp.ne.s32.totalorder %s244, %s245
      %p254 = scmp.eq.s32.totalorder %s87, 0
      %p255 = por %p253, %p254
      %p256 = scmp.ne.s32.totalorder %s244, %s245
      %p257 = scmp.eq.s32.totalorder %s88, 1
      %p258 = por %p256, %p257
      %p260 = scmp.ne.s32.totalorder %s245, %s259
      %p261 = scmp.eq.s32.totalorder %s88, 0
      %p262 = por %p260, %p261
      %s264 = sadd.s32 %s263, 1
      %p267 = scmp.eq.s32.totalorder %s82, 1
      %p268 = scmp.ne.s32.totalorder %s263, %s265
      %p269 = scmp.eq.s32.totalorder %s82, 0
      %p270 = por %p268, %p269
      %p271 = scmp.ne.s32.totalorder %s263, %s265
      %p272 = scmp.eq.s32.totalorder %s87, 1
      %p273 = por %p271, %p272
      %p274 = scmp.ne.s32.totalorder %s265, %s266
      %p275 = scmp.eq.s32.totalorder %s87, 0
      %p276 = por %p274, %p275
      %p277 = scmp.ne.s32.totalorder %s265, %s266
      %p278 = scmp.eq.s32.totalorder %s88, 1
      %p279 = por %p277, %p278
      %p281 = scmp.ne.s32.totalorder %s266, %s280
      %p282 = scmp.eq.s32.totalorder %s88, 0
      %p283 = por %p281, %p282
      %s285 = sadd.s32 %s284, 1
      %p288 = scmp.eq.s32.totalorder %s82, 1
      %p289 = scmp.ne.s32.totalorder %s284, %s286
      %p290 = scmp.eq.s32.totalorder %s82, 0
      %p291 = por %p289, %p290
      %p292 = scmp.ne.s32.totalorder %s284, %s286
      %p293 = scmp.eq.s32.totalorder %s87, 1
      %p294 = por %p292, %p293
      %p295 = scmp.ne.s32.totalorder %s286, %s287
      %p296 = scmp.eq.s32.totalorder %s87, 0
      %p297 = por %p295, %p296
      %p298 = scmp.ne.s32.totalorder %s286, %s287
      %p299 = scmp.eq.s32.totalorder %s88, 1
      %p300 = por %p298, %p299
      %p302 = scmp.ne.s32.totalorder %s287, %s301
      %p303 = scmp.eq.s32.totalorder %s88, 0
      %p304 = por %p302, %p303
      %s306 = sadd.s32 %s305, 1
      %p309 = scmp.eq.s32.totalorder %s82, 1
      %p310 = scmp.ne.s32.totalorder %s305, %s307
      %p311 = scmp.eq.s32.totalorder %s82, 0
      %p312 = por %p310, %p311
      %p313 = scmp.ne.s32.totalorder %s305, %s307
      %p314 = scmp.eq.s32.totalorder %s87, 1
      %p315 = por %p313, %p314
      %p316 = scmp.ne.s32.totalorder %s307, %s308
      %p317 = scmp.eq.s32.totalorder %s87, 0
      %p318 = por %p316, %p317
      %p319 = scmp.ne.s32.totalorder %s307, %s308
      %p320 = scmp.eq.s32.totalorder %s88, 1
      %p321 = por %p319, %p320
      %p323 = scmp.ne.s32.totalorder %s308, %s322
      %p324 = scmp.eq.s32.totalorder %s88, 0
      %p325 = por %p323, %p324
      %s327 = sadd.s32 %s326, 1
      %p330 = scmp.eq.s32.totalorder %s82, 1
      %p331 = scmp.ne.s32.totalorder %s326, %s328
      %p332 = scmp.eq.s32.totalorder %s82, 0
      %p333 = por %p331, %p332
      %p334 = scmp.ne.s32.totalorder %s326, %s328
      %p335 = scmp.eq.s32.totalorder %s87, 1
      %p336 = por %p334, %p335
      %p337 = scmp.ne.s32.totalorder %s328, %s329
      %p338 = scmp.eq.s32.totalorder %s87, 0
      %p339 = por %p337, %p338
      %p340 = scmp.ne.s32.totalorder %s328, %s329
      %p341 = scmp.eq.s32.totalorder %s88, 1
      %p342 = por %p340, %p341
      %p344 = scmp.ne.s32.totalorder %s329, %s343
      %p345 = scmp.eq.s32.totalorder %s88, 0
      %p346 = por %p344, %p345
      %s348 = sadd.s32 %s347, 1
      %p351 = scmp.eq.s32.totalorder %s82, 1
      %p352 = scmp.ne.s32.totalorder %s347, %s349
      %p353 = scmp.eq.s32.totalorder %s82, 0
      %p354 = por %p352, %p353
      %p355 = scmp.ne.s32.totalorder %s347, %s349
      %p356 = scmp.eq.s32.totalorder %s87, 1
      %p357 = por %p355, %p356
      %p358 = scmp.ne.s32.totalorder %s349, %s350
      %p359 = scmp.eq.s32.totalorder %s87, 0
      %p360 = por %p358, %p359
      %p361 = scmp.ne.s32.totalorder %s349, %s350
      %p362 = scmp.eq.s32.totalorder %s88, 1
      %p363 = por %p361, %p362
      %p365 = scmp.ne.s32.totalorder %s350, %s364
      %p366 = scmp.eq.s32.totalorder %s88, 0
      %p367 = por %p365, %p366
      %s369 = sadd.s32 %s368, 1
      %p372 = scmp.eq.s32.totalorder %s82, 1
      %p373 = scmp.ne.s32.totalorder %s368, %s370
      %p374 = scmp.eq.s32.totalorder %s82, 0
      %p375 = por %p373, %p374
      %p376 = scmp.ne.s32.totalorder %s368, %s370
      %p377 = scmp.eq.s32.totalorder %s87, 1
      %p378 = por %p376, %p377
      %p379 = scmp.ne.s32.totalorder %s370, %s371
      %p380 = scmp.eq.s32.totalorder %s87, 0
      %p381 = por %p379, %p380
      %p382 = scmp.ne.s32.totalorder %s370, %s371
      %p383 = scmp.eq.s32.totalorder %s88, 1
      %p384 = por %p382, %p383
      %p386 = scmp.ne.s32.totalorder %s371, %s385
      %p387 = scmp.eq.s32.totalorder %s88, 0
      %p388 = por %p386, %p387
      %s390 = sadd.s32 %s389, 1
      %p393 = scmp.eq.s32.totalorder %s82, 1
      %p394 = scmp.ne.s32.totalorder %s389, %s391
      %p395 = scmp.eq.s32.totalorder %s82, 0
      %p396 = por %p394, %p395
      %p397 = scmp.ne.s32.totalorder %s389, %s391
      %p398 = scmp.eq.s32.totalorder %s87, 1
      %p399 = por %p397, %p398
      %p400 = scmp.ne.s32.totalorder %s391, %s392
      %p401 = scmp.eq.s32.totalorder %s87, 0
      %p402 = por %p400, %p401
      %p403 = scmp.ne.s32.totalorder %s391, %s392
      %p404 = scmp.eq.s32.totalorder %s88, 1
      %p405 = por %p403, %p404
      %p407 = scmp.ne.s32.totalorder %s392, %s406
      %p408 = scmp.eq.s32.totalorder %s88, 0
      %p409 = por %p407, %p408
      %s411 = sadd.s32 %s410, 1
      %p414 = scmp.eq.s32.totalorder %s82, 1
      %p415 = scmp.ne.s32.totalorder %s410, %s412
      %p416 = scmp.eq.s32.totalorder %s82, 0
      %p417 = por %p415, %p416
      %p418 = scmp.ne.s32.totalorder %s410, %s412
      %p419 = scmp.eq.s32.totalorder %s87, 1
      %p420 = por %p418, %p419
      %p421 = scmp.ne.s32.totalorder %s412, %s413
      %p422 = scmp.eq.s32.totalorder %s87, 0
      %p423 = por %p421, %p422
      %p424 = scmp.ne.s32.totalorder %s412, %s413
      %p425 = scmp.eq.s32.totalorder %s88, 1
      %p426 = por %p424, %p425
      %p428 = scmp.ne.s32.totalorder %s413, %s427
      %p429 = scmp.eq.s32.totalorder %s88, 0
      %p430 = por %p428, %p429
      %s432 = sadd.s32 %s431, 1
      %p435 = scmp.eq.s32.totalorder %s82, 1
      %p436 = scmp.ne.s32.totalorder %s431, %s433
      %p437 = scmp.eq.s32.totalorder %s82, 0
      %p438 = por %p436, %p437
      %p439 = scmp.ne.s32.totalorder %s431, %s433
      %p440 = scmp.eq.s32.totalorder %s87, 1
      %p441 = por %p439, %p440
      %p442 = scmp.ne.s32.totalorder %s433, %s434
      %p443 = scmp.eq.s32.totalorder %s87, 0
      %p444 = por %p442, %p443
      %p445 = scmp.ne.s32.totalorder %s433, %s434
      %p446 = scmp.eq.s32.totalorder %s88, 1
      %p447 = por %p445, %p446
      %p449 = scmp.ne.s32.totalorder %s434, %s448
      %p450 = scmp.eq.s32.totalorder %s88, 0
      %p451 = por %p449, %p450
      %s453 = sadd.s32 %s452, 1
      %p456 = scmp.eq.s32.totalorder %s82, 1
      %p457 = scmp.ne.s32.totalorder %s452, %s454
      %p458 = scmp.eq.s32.totalorder %s82, 0
      %p459 = por %p457, %p458
      %p460 = scmp.ne.s32.totalorder %s452, %s454
      %p461 = scmp.eq.s32.totalorder %s87, 1
      %p462 = por %p460, %p461
      %p463 = scmp.ne.s32.totalorder %s454, %s455
      %p464 = scmp.eq.s32.totalorder %s87, 0
      %p465 = por %p463, %p464
      %p466 = scmp.ne.s32.totalorder %s454, %s455
      %p467 = scmp.eq.s32.totalorder %s88, 1
      %p468 = por %p466, %p467
      %p470 = scmp.ne.s32.totalorder %s455, %s469
      %p471 = scmp.eq.s32.totalorder %s88, 0
      %p472 = por %p470, %p471
      %s474 = sadd.s32 %s473, 1
      %p477 = scmp.eq.s32.totalorder %s82, 1
      %p478 = scmp.ne.s32.totalorder %s473, %s475
      %p479 = scmp.eq.s32.totalorder %s82, 0
      %p480 = por %p478, %p479
      %p481 = scmp.ne.s32.totalorder %s473, %s475
      %p482 = scmp.eq.s32.totalorder %s87, 1
      %p483 = por %p481, %p482
      %p484 = scmp.ne.s32.totalorder %s475, %s476
      %p485 = scmp.eq.s32.totalorder %s87, 0
      %p486 = por %p484, %p485
      %p487 = scmp.ne.s32.totalorder %s475, %s476
      %p488 = scmp.eq.s32.totalorder %s88, 1
      %p489 = por %p487, %p488
      %p491 = scmp.ne.s32.totalorder %s476, %s490
      %p492 = scmp.eq.s32.totalorder %s88, 0
      %p493 = por %p491, %p492
      %s495 = sadd.s32 %s494, 1
      %p498 = scmp.eq.s32.totalorder %s82, 1
      %p499 = scmp.ne.s32.totalorder %s494, %s496
      %p500 = scmp.eq.s32.totalorder %s82, 0
      %p501 = por %p499, %p500
      %p502 = scmp.ne.s32.totalorder %s494, %s496
      %p503 = scmp.eq.s32.totalorder %s87, 1
      %p504 = por %p502, %p503
      %p505 = scmp.ne.s32.totalorder %s496, %s497
      %p506 = scmp.eq.s32.totalorder %s87, 0
      %p507 = por %p505, %p506
      %p508 = scmp.ne.s32.totalorder %s496, %s497
      %p509 = scmp.eq.s32.totalorder %s88, 1
      %p510 = por %p508, %p509
      %p512 = scmp.ne.s32.totalorder %s497, %s511
      %p513 = scmp.eq.s32.totalorder %s88, 0
      %p514 = por %p512, %p513
      %s516 = sadd.s32 %s515, 1
      %p519 = scmp.eq.s32.totalorder %s82, 1
      %p520 = scmp.ne.s32.totalorder %s515, %s517
      %p521 = scmp.eq.s32.totalorder %s82, 0
      %p522 = por %p520, %p521
      %p523 = scmp.ne.s32.totalorder %s515, %s517
      %p524 = scmp.eq.s32.totalorder %s87, 1
      %p525 = por %p523, %p524
      %p526 = scmp.ne.s32.totalorder %s517, %s518
      %p527 = scmp.eq.s32.totalorder %s87, 0
      %p528 = por %p526, %p527
      %p529 = scmp.ne.s32.totalorder %s517, %s518
      %p530 = scmp.eq.s32.totalorder %s88, 1
      %p531 = por %p529, %p530
      %p533 = scmp.ne.s32.totalorder %s518, %s532
      %p534 = scmp.eq.s32.totalorder %s88, 0
      %p535 = por %p533, %p534
      %s537 = sadd.s32 %s536, 1
      %p540 = scmp.eq.s32.totalorder %s82, 1
      %p541 = scmp.ne.s32.totalorder %s536, %s538
      %p542 = scmp.eq.s32.totalorder %s82, 0
      %p543 = por %p541, %p542
      %p544 = scmp.ne.s32.totalorder %s536, %s538
      %p545 = scmp.eq.s32.totalorder %s87, 1
      %p546 = por %p544, %p545
      %p547 = scmp.ne.s32.totalorder %s538, %s539
      %p548 = scmp.eq.s32.totalorder %s87, 0
      %p549 = por %p547, %p548
      %p550 = scmp.ne.s32.totalorder %s538, %s539
      %p551 = scmp.eq.s32.totalorder %s88, 1
      %p552 = por %p550, %p551
      %p554 = scmp.ne.s32.totalorder %s539, %s553
      %p555 = scmp.eq.s32.totalorder %s88, 0
      %p556 = por %p554, %p555
      %s558 = sadd.s32 %s557, 1
      %p561 = scmp.eq.s32.totalorder %s82, 1
      %p562 = scmp.ne.s32.totalorder %s557, %s559
      %p563 = scmp.eq.s32.totalorder %s82, 0
      %p564 = por %p562, %p563
      %p565 = scmp.ne.s32.totalorder %s557, %s559
      %p566 = scmp.eq.s32.totalorder %s87, 1
      %p567 = por %p565, %p566
      %p568 = scmp.ne.s32.totalorder %s559, %s560
      %p569 = scmp.eq.s32.totalorder %s87, 0
      %p570 = por %p568, %p569
      %p571 = scmp.ne.s32.totalorder %s559, %s560
      %p572 = scmp.eq.s32.totalorder %s88, 1
      %p573 = por %p571, %p572
      %p575 = scmp.ne.s32.totalorder %s560, %s574
      %p576 = scmp.eq.s32.totalorder %s88, 0
      %p577 = por %p575, %p576
      %s579 = sadd.s32 %s578, 1
      %p582 = scmp.eq.s32.totalorder %s82, 1
      %p583 = scmp.ne.s32.totalorder %s578, %s580
      %p584 = scmp.eq.s32.totalorder %s82, 0
      %p585 = por %p583, %p584
      %p586 = scmp.ne.s32.totalorder %s578, %s580
      %p587 = scmp.eq.s32.totalorder %s87, 1
      %p588 = por %p586, %p587
      %p589 = scmp.ne.s32.totalorder %s580, %s581
      %p590 = scmp.eq.s32.totalorder %s87, 0
      %p591 = por %p589, %p590
      %p592 = scmp.ne.s32.totalorder %s580, %s581
      %p593 = scmp.eq.s32.totalorder %s88, 1
      %p594 = por %p592, %p593
      %p596 = scmp.ne.s32.totalorder %s581, %s595
      %p597 = scmp.eq.s32.totalorder %s88, 0
      %p598 = por %p596, %p597
      %s600 = sadd.s32 %s599, 1
      %p603 = scmp.eq.s32.totalorder %s82, 1
      %p604 = scmp.ne.s32.totalorder %s599, %s601
      %p605 = scmp.eq.s32.totalorder %s82, 0
      %p606 = por %p604, %p605
      %p607 = scmp.ne.s32.totalorder %s599, %s601
      %p608 = scmp.eq.s32.totalorder %s87, 1
      %p609 = por %p607, %p608
      %p610 = scmp.ne.s32.totalorder %s601, %s602
      %p611 = scmp.eq.s32.totalorder %s87, 0
      %p612 = por %p610, %p611
      %p613 = scmp.ne.s32.totalorder %s601, %s602
      %p614 = scmp.eq.s32.totalorder %s88, 1
      %p615 = por %p613, %p614
      %p617 = scmp.ne.s32.totalorder %s602, %s616
      %p618 = scmp.eq.s32.totalorder %s88, 0
      %p619 = por %p617, %p618
      %s621 = sadd.s32 %s620, 1
      %p624 = scmp.eq.s32.totalorder %s82, 1
      %p625 = scmp.ne.s32.totalorder %s620, %s622
      %p626 = scmp.eq.s32.totalorder %s82, 0
      %p627 = por %p625, %p626
      %p628 = scmp.ne.s32.totalorder %s620, %s622
      %p629 = scmp.eq.s32.totalorder %s87, 1
      %p630 = por %p628, %p629
      %p631 = scmp.ne.s32.totalorder %s622, %s623
      %p632 = scmp.eq.s32.totalorder %s87, 0
      %p633 = por %p631, %p632
      %p634 = scmp.ne.s32.totalorder %s622, %s623
      %p635 = scmp.eq.s32.totalorder %s88, 1
      %p636 = por %p634, %p635
      %p638 = scmp.ne.s32.totalorder %s623, %s637
      %p639 = scmp.eq.s32.totalorder %s88, 0
      %p640 = por %p638, %p639
      %s642 = sadd.s32 %s641, 1
      %p645 = scmp.eq.s32.totalorder %s82, 1
      %p646 = scmp.ne.s32.totalorder %s641, %s643
      %p647 = scmp.eq.s32.totalorder %s82, 0
      %p648 = por %p646, %p647
      %p649 = scmp.ne.s32.totalorder %s641, %s643
      %p650 = scmp.eq.s32.totalorder %s87, 1
      %p651 = por %p649, %p650
      %p652 = scmp.ne.s32.totalorder %s643, %s644
      %p653 = scmp.eq.s32.totalorder %s87, 0
      %p654 = por %p652, %p653
      %p655 = scmp.ne.s32.totalorder %s643, %s644
      %p656 = scmp.eq.s32.totalorder %s88, 1
      %p657 = por %p655, %p656
      %p659 = scmp.ne.s32.totalorder %s644, %s658
      %p660 = scmp.eq.s32.totalorder %s88, 0
      %p661 = por %p659, %p660
      %s663 = sadd.s32 %s662, 1
      %p666 = scmp.eq.s32.totalorder %s82, 1
      %p667 = scmp.ne.s32.totalorder %s662, %s664
      %p668 = scmp.eq.s32.totalorder %s82, 0
      %p669 = por %p667, %p668
      %p670 = scmp.ne.s32.totalorder %s662, %s664
      %p671 = scmp.eq.s32.totalorder %s87, 1
      %p672 = por %p670, %p671
      %p673 = scmp.ne.s32.totalorder %s664, %s665
      %p674 = scmp.eq.s32.totalorder %s87, 0
      %p675 = por %p673, %p674
      %p676 = scmp.ne.s32.totalorder %s664, %s665
      %p677 = scmp.eq.s32.totalorder %s88, 1
      %p678 = por %p676, %p677
      %p680 = scmp.ne.s32.totalorder %s665, %s679
      %p681 = scmp.eq.s32.totalorder %s88, 0
      %p682 = por %p680, %p681
      %s684 = sadd.s32 %s683, 1
      %p687 = scmp.eq.s32.totalorder %s82, 1
      %p688 = scmp.ne.s32.totalorder %s683, %s685
      %p689 = scmp.eq.s32.totalorder %s82, 0
      %p690 = por %p688, %p689
      %p691 = scmp.ne.s32.totalorder %s683, %s685
      %p692 = scmp.eq.s32.totalorder %s87, 1
      %p693 = por %p691, %p692
      %p694 = scmp.ne.s32.totalorder %s685, %s686
      %p695 = scmp.eq.s32.totalorder %s87, 0
      %p696 = por %p694, %p695
      %p697 = scmp.ne.s32.totalorder %s685, %s686
      %p698 = scmp.eq.s32.totalorder %s88, 1
      %p699 = por %p697, %p698
      %p701 = scmp.ne.s32.totalorder %s686, %s700
      %p702 = scmp.eq.s32.totalorder %s88, 0
      %p703 = por %p701, %p702
      %s705 = sadd.s32 %s704, 1
      %p708 = scmp.eq.s32.totalorder %s82, 1
      %p709 = scmp.ne.s32.totalorder %s704, %s706
      %p710 = scmp.eq.s32.totalorder %s82, 0
      %p711 = por %p709, %p710
      %p712 = scmp.ne.s32.totalorder %s704, %s706
      %p713 = scmp.eq.s32.totalorder %s87, 1
      %p714 = por %p712, %p713
      %p715 = scmp.ne.s32.totalorder %s706, %s707
      %p716 = scmp.eq.s32.totalorder %s87, 0
      %p717 = por %p715, %p716
      %p718 = scmp.ne.s32.totalorder %s706, %s707
      %p719 = scmp.eq.s32.totalorder %s88, 1
      %p720 = por %p718, %p719
      %p722 = scmp.ne.s32.totalorder %s707, %s721
      %p723 = scmp.eq.s32.totalorder %s88, 0
      %p724 = por %p722, %p723
      %s726 = sadd.s32 %s725, 1
      %p729 = scmp.eq.s32.totalorder %s82, 1
      %p730 = scmp.ne.s32.totalorder %s725, %s727
      %p731 = scmp.eq.s32.totalorder %s82, 0
      %p732 = por %p730, %p731
      %p733 = scmp.ne.s32.totalorder %s725, %s727
      %p734 = scmp.eq.s32.totalorder %s87, 1
      %p735 = por %p733, %p734
      %p736 = scmp.ne.s32.totalorder %s727, %s728
      %p737 = scmp.eq.s32.totalorder %s87, 0
      %p738 = por %p736, %p737
      %p739 = scmp.ne.s32.totalorder %s727, %s728
      %p740 = scmp.eq.s32.totalorder %s88, 1
      %p741 = por %p739, %p740
      %p743 = scmp.ne.s32.totalorder %s728, %s742
      %p744 = scmp.eq.s32.totalorder %s88, 0
      %p745 = por %p743, %p744
      %s747 = sadd.s32 %s746, 1
      %p750 = scmp.eq.s32.totalorder %s82, 1
      %p751 = scmp.ne.s32.totalorder %s746, %s748
      %p752 = scmp.eq.s32.totalorder %s82, 0
      %p753 = por %p751, %p752
      %p754 = scmp.ne.s32.totalorder %s746, %s748
      %p755 = scmp.eq.s32.totalorder %s87, 1
      %p756 = por %p754, %p755
      %p757 = scmp.ne.s32.totalorder %s748, %s749
      %p758 = scmp.eq.s32.totalorder %s87, 0
      %p759 = por %p757, %p758
      %p760 = scmp.ne.s32.totalorder %s748, %s749
      %p761 = scmp.eq.s32.totalorder %s88, 1
      %p762 = por %p760, %p761
      %p764 = scmp.ne.s32.totalorder %s749, %s763
      %p765 = scmp.eq.s32.totalorder %s88, 0
      %p766 = por %p764, %p765
      %s768 = sadd.s32 %s767, 1
      %p771 = scmp.eq.s32.totalorder %s82, 1
      %p772 = scmp.ne.s32.totalorder %s767, %s769
      %p773 = scmp.eq.s32.totalorder %s82, 0
      %p774 = por %p772, %p773
      %p775 = scmp.ne.s32.totalorder %s767, %s769
      %p776 = scmp.eq.s32.totalorder %s87, 1
      %p777 = por %p775, %p776
      %p778 = scmp.ne.s32.totalorder %s769, %s770
      %p779 = scmp.eq.s32.totalorder %s87, 0
      %p780 = por %p778, %p779
      %p781 = scmp.ne.s32.totalorder %s769, %s770
      %p782 = scmp.eq.s32.totalorder %s88, 1
      %p783 = por %p781, %p782
      %p785 = scmp.ne.s32.totalorder %s770, %s784
      %p786 = scmp.eq.s32.totalorder %s88, 0
      %p787 = por %p785, %p786
      %s789 = sadd.s32 %s788, 1
      %p792 = scmp.eq.s32.totalorder %s82, 1
      %p793 = scmp.ne.s32.totalorder %s788, %s790
      %p794 = scmp.eq.s32.totalorder %s82, 0
      %p795 = por %p793, %p794
      %p796 = scmp.ne.s32.totalorder %s788, %s790
      %p797 = scmp.eq.s32.totalorder %s87, 1
      %p798 = por %p796, %p797
      %p799 = scmp.ne.s32.totalorder %s790, %s791
      %p800 = scmp.eq.s32.totalorder %s87, 0
      %p801 = por %p799, %p800
      %p802 = scmp.ne.s32.totalorder %s790, %s791
      %p803 = scmp.eq.s32.totalorder %s88, 1
      %p804 = por %p802, %p803
      %p806 = scmp.ne.s32.totalorder %s791, %s805
      %p807 = scmp.eq.s32.totalorder %s88, 0
      %p808 = por %p806, %p807
      %s810 = sadd.s32 %s809, 1
      %p813 = scmp.eq.s32.totalorder %s82, 1
      %p814 = scmp.ne.s32.totalorder %s809, %s811
      %p815 = scmp.eq.s32.totalorder %s82, 0
      %p816 = por %p814, %p815
      %p817 = scmp.ne.s32.totalorder %s809, %s811
      %p818 = scmp.eq.s32.totalorder %s87, 1
      %p819 = por %p817, %p818
      %p820 = scmp.ne.s32.totalorder %s811, %s812
      %p821 = scmp.eq.s32.totalorder %s87, 0
      %p822 = por %p820, %p821
      %p823 = scmp.ne.s32.totalorder %s811, %s812
      %p824 = scmp.eq.s32.totalorder %s88, 1
      %p825 = por %p823, %p824
      %p827 = scmp.ne.s32.totalorder %s812, %s826
      %p828 = scmp.eq.s32.totalorder %s88, 0
      %p829 = por %p827, %p828
      %s831 = sadd.s32 %s830, 1
      %p834 = scmp.eq.s32.totalorder %s82, 1
      %p835 = scmp.ne.s32.totalorder %s830, %s832
      %p836 = scmp.eq.s32.totalorder %s82, 0
      %p837 = por %p835, %p836
      %p838 = scmp.ne.s32.totalorder %s830, %s832
      %p839 = scmp.eq.s32.totalorder %s87, 1
      %p840 = por %p838, %p839
      %p841 = scmp.ne.s32.totalorder %s832, %s833
      %p842 = scmp.eq.s32.totalorder %s87, 0
      %p843 = por %p841, %p842
      %p844 = scmp.ne.s32.totalorder %s832, %s833
      %p845 = scmp.eq.s32.totalorder %s88, 1
      %p846 = por %p844, %p845
      %p848 = scmp.ne.s32.totalorder %s833, %s847
      %p849 = scmp.eq.s32.totalorder %s88, 0
      %p850 = por %p848, %p849
      %s851 = ssub.s32 %s82, %s89
      %p852 = scmp.eq.s32.totalorder %s851, 0
      %s854 = sadd.s32 %s853, 1
      %s855 = scalar_select %p852, %s853, %s854
      %p858 = pneg %p852
      %p859 = scmp.eq.s32.totalorder %s82, 1
      %p860 = por %p858, %p859
      %p861 = scmp.ne.s32.totalorder %s853, %s856
      %p862 = scmp.eq.s32.totalorder %s82, 0
      %p863 = por %p861, %p862
      %p864 = scmp.ne.s32.totalorder %s853, %s856
      %p865 = scmp.eq.s32.totalorder %s87, 1
      %p866 = por %p864, %p865
      %p867 = scmp.ne.s32.totalorder %s856, %s857
      %p868 = scmp.eq.s32.totalorder %s87, 0
      %p869 = por %p867, %p868
      %p870 = scmp.ne.s32.totalorder %s856, %s857
      %p871 = scmp.eq.s32.totalorder %s88, 1
      %p872 = por %p870, %p871
      %p874 = scmp.ne.s32.totalorder %s857, %s873
      %p875 = scmp.eq.s32.totalorder %s88, 0
      %p876 = por %p874, %p875
      %p877 = scmp.le.s32.totalorder 1, %s82
      %p878 = scmp.lt.s32.totalorder %s82, 3
      %p879 = pnand %p877, %p878
      %p880 = pneg %p879
      // Predicated region
      $region9: #{_lambda_.1} parent=5 // pred_check
        _
      $region10: #{_lambda_.1} parent=5 // pred_check_branch
        %882 = sbr.rel (%p879) target = $region12
      $region11: #{_lambda_.1} parent=5 // pred_region
        %s883 = ssub.s32 %s82, 1
        // Predicated region
        $region13: #{_lambda_.1} parent=11 // pred_check
          %p884 = pneg %p129
        $region14: #{_lambda_.1} parent=11 // pred_check_branch
          %886 = sbr.rel (%p884) target = $region16
        $region15: #{_lambda_.1} parent=11 // pred_region
          _
        $region16: #{_lambda_.1} parent=11 // pred_fallthru
          _
        // Predicated region
        $region17: #{_lambda_.1} parent=11 // pred_check
          %p887 = pneg %p150
        $region18: #{_lambda_.1} parent=11 // pred_check_branch
          %889 = sbr.rel (%p887) target = $region20
        $region19: #{_lambda_.1} parent=11 // pred_region
          _
        $region20: #{_lambda_.1} parent=11 // pred_fallthru
          _
        // Predicated region
        $region21: #{_lambda_.1} parent=11 // pred_check
          %p890 = pneg %p171
        $region22: #{_lambda_.1} parent=11 // pred_check_branch
          %892 = sbr.rel (%p890) target = $region24
        $region23: #{_lambda_.1} parent=11 // pred_region
          _
        $region24: #{_lambda_.1} parent=11 // pred_fallthru
          _
        // Predicated region
        $region25: #{_lambda_.1} parent=11 // pred_check
          %p893 = pneg %p192
        $region26: #{_lambda_.1} parent=11 // pred_check_branch
          %895 = sbr.rel (%p893) target = $region28
        $region27: #{_lambda_.1} parent=11 // pred_region
          _
        $region28: #{_lambda_.1} parent=11 // pred_fallthru
          _
        // Predicated region
        $region29: #{_lambda_.1} parent=11 // pred_check
          %p896 = pneg %p213
        $region30: #{_lambda_.1} parent=11 // pred_check_branch
          %898 = sbr.rel (%p896) target = $region32
        $region31: #{_lambda_.1} parent=11 // pred_region
          _
        $region32: #{_lambda_.1} parent=11 // pred_fallthru
          _
        // Predicated region
        $region33: #{_lambda_.1} parent=11 // pred_check
          %p899 = pneg %p234
        $region34: #{_lambda_.1} parent=11 // pred_check_branch
          %901 = sbr.rel (%p899) target = $region36
        $region35: #{_lambda_.1} parent=11 // pred_region
          _
        $region36: #{_lambda_.1} parent=11 // pred_fallthru
          _
        // Predicated region
        $region37: #{_lambda_.1} parent=11 // pred_check
          %p902 = pneg %p255
        $region38: #{_lambda_.1} parent=11 // pred_check_branch
          %904 = sbr.rel (%p902) target = $region40
        $region39: #{_lambda_.1} parent=11 // pred_region
          _
        $region40: #{_lambda_.1} parent=11 // pred_fallthru
          _
        // Predicated region
        $region41: #{_lambda_.1} parent=11 // pred_check
          %p905 = pneg %p276
        $region42: #{_lambda_.1} parent=11 // pred_check_branch
          %907 = sbr.rel (%p905) target = $region44
        $region43: #{_lambda_.1} parent=11 // pred_region
          _
        $region44: #{_lambda_.1} parent=11 // pred_fallthru
          _
        // Predicated region
        $region45: #{_lambda_.1} parent=11 // pred_check
          %p908 = pneg %p297
        $region46: #{_lambda_.1} parent=11 // pred_check_branch
          %910 = sbr.rel (%p908) target = $region48
        $region47: #{_lambda_.1} parent=11 // pred_region
          _
        $region48: #{_lambda_.1} parent=11 // pred_fallthru
          _
        // Predicated region
        $region49: #{_lambda_.1} parent=11 // pred_check
          %p911 = pneg %p318
        $region50: #{_lambda_.1} parent=11 // pred_check_branch
          %913 = sbr.rel (%p911) target = $region52
        $region51: #{_lambda_.1} parent=11 // pred_region
          _
        $region52: #{_lambda_.1} parent=11 // pred_fallthru
          _
        // Predicated region
        $region53: #{_lambda_.1} parent=11 // pred_check
          %p914 = pneg %p339
        $region54: #{_lambda_.1} parent=11 // pred_check_branch
          %916 = sbr.rel (%p914) target = $region56
        $region55: #{_lambda_.1} parent=11 // pred_region
          _
        $region56: #{_lambda_.1} parent=11 // pred_fallthru
          _
        // Predicated region
        $region57: #{_lambda_.1} parent=11 // pred_check
          %p917 = pneg %p360
        $region58: #{_lambda_.1} parent=11 // pred_check_branch
          %919 = sbr.rel (%p917) target = $region60
        $region59: #{_lambda_.1} parent=11 // pred_region
          _
        $region60: #{_lambda_.1} parent=11 // pred_fallthru
          _
        // Predicated region
        $region61: #{_lambda_.1} parent=11 // pred_check
          %p920 = pneg %p381
        $region62: #{_lambda_.1} parent=11 // pred_check_branch
          %922 = sbr.rel (%p920) target = $region64
        $region63: #{_lambda_.1} parent=11 // pred_region
          _
        $region64: #{_lambda_.1} parent=11 // pred_fallthru
          _
        // Predicated region
        $region65: #{_lambda_.1} parent=11 // pred_check
          %p923 = pneg %p402
        $region66: #{_lambda_.1} parent=11 // pred_check_branch
          %925 = sbr.rel (%p923) target = $region68
        $region67: #{_lambda_.1} parent=11 // pred_region
          _
        $region68: #{_lambda_.1} parent=11 // pred_fallthru
          _
        // Predicated region
        $region69: #{_lambda_.1} parent=11 // pred_check
          %p926 = pneg %p423
        $region70: #{_lambda_.1} parent=11 // pred_check_branch
          %928 = sbr.rel (%p926) target = $region72
        $region71: #{_lambda_.1} parent=11 // pred_region
          _
        $region72: #{_lambda_.1} parent=11 // pred_fallthru
          _
        // Predicated region
        $region73: #{_lambda_.1} parent=11 // pred_check
          %p929 = pneg %p444
        $region74: #{_lambda_.1} parent=11 // pred_check_branch
          %931 = sbr.rel (%p929) target = $region76
        $region75: #{_lambda_.1} parent=11 // pred_region
          _
        $region76: #{_lambda_.1} parent=11 // pred_fallthru
          _
        // Predicated region
        $region77: #{_lambda_.1} parent=11 // pred_check
          %p932 = pneg %p465
        $region78: #{_lambda_.1} parent=11 // pred_check_branch
          %934 = sbr.rel (%p932) target = $region80
        $region79: #{_lambda_.1} parent=11 // pred_region
          _
        $region80: #{_lambda_.1} parent=11 // pred_fallthru
          _
        // Predicated region
        $region81: #{_lambda_.1} parent=11 // pred_check
          %p935 = pneg %p486
        $region82: #{_lambda_.1} parent=11 // pred_check_branch
          %937 = sbr.rel (%p935) target = $region84
        $region83: #{_lambda_.1} parent=11 // pred_region
          _
        $region84: #{_lambda_.1} parent=11 // pred_fallthru
          _
        // Predicated region
        $region85: #{_lambda_.1} parent=11 // pred_check
          %p938 = pneg %p507
        $region86: #{_lambda_.1} parent=11 // pred_check_branch
          %940 = sbr.rel (%p938) target = $region88
        $region87: #{_lambda_.1} parent=11 // pred_region
          _
        $region88: #{_lambda_.1} parent=11 // pred_fallthru
          _
        // Predicated region
        $region89: #{_lambda_.1} parent=11 // pred_check
          %p941 = pneg %p528
        $region90: #{_lambda_.1} parent=11 // pred_check_branch
          %943 = sbr.rel (%p941) target = $region92
        $region91: #{_lambda_.1} parent=11 // pred_region
          _
        $region92: #{_lambda_.1} parent=11 // pred_fallthru
          _
        // Predicated region
        $region93: #{_lambda_.1} parent=11 // pred_check
          %p944 = pneg %p549
        $region94: #{_lambda_.1} parent=11 // pred_check_branch
          %946 = sbr.rel (%p944) target = $region96
        $region95: #{_lambda_.1} parent=11 // pred_region
          _
        $region96: #{_lambda_.1} parent=11 // pred_fallthru
          _
        // Predicated region
        $region97: #{_lambda_.1} parent=11 // pred_check
          %p947 = pneg %p570
        $region98: #{_lambda_.1} parent=11 // pred_check_branch
          %949 = sbr.rel (%p947) target = $region100
        $region99: #{_lambda_.1} parent=11 // pred_region
          _
        $region100: #{_lambda_.1} parent=11 // pred_fallthru
          _
        // Predicated region
        $region101: #{_lambda_.1} parent=11 // pred_check
          %p950 = pneg %p591
        $region102: #{_lambda_.1} parent=11 // pred_check_branch
          %952 = sbr.rel (%p950) target = $region104
        $region103: #{_lambda_.1} parent=11 // pred_region
          _
        $region104: #{_lambda_.1} parent=11 // pred_fallthru
          _
        // Predicated region
        $region105: #{_lambda_.1} parent=11 // pred_check
          %p953 = pneg %p612
        $region106: #{_lambda_.1} parent=11 // pred_check_branch
          %955 = sbr.rel (%p953) target = $region108
        $region107: #{_lambda_.1} parent=11 // pred_region
          _
        $region108: #{_lambda_.1} parent=11 // pred_fallthru
          _
        // Predicated region
        $region109: #{_lambda_.1} parent=11 // pred_check
          %p956 = pneg %p633
        $region110: #{_lambda_.1} parent=11 // pred_check_branch
          %958 = sbr.rel (%p956) target = $region112
        $region111: #{_lambda_.1} parent=11 // pred_region
          _
        $region112: #{_lambda_.1} parent=11 // pred_fallthru
          _
        // Predicated region
        $region113: #{_lambda_.1} parent=11 // pred_check
          %p959 = pneg %p654
        $region114: #{_lambda_.1} parent=11 // pred_check_branch
          %961 = sbr.rel (%p959) target = $region116
        $region115: #{_lambda_.1} parent=11 // pred_region
          _
        $region116: #{_lambda_.1} parent=11 // pred_fallthru
          _
        // Predicated region
        $region117: #{_lambda_.1} parent=11 // pred_check
          %p962 = pneg %p675
        $region118: #{_lambda_.1} parent=11 // pred_check_branch
          %964 = sbr.rel (%p962) target = $region120
        $region119: #{_lambda_.1} parent=11 // pred_region
          _
        $region120: #{_lambda_.1} parent=11 // pred_fallthru
          _
        // Predicated region
        $region121: #{_lambda_.1} parent=11 // pred_check
          %p965 = pneg %p696
        $region122: #{_lambda_.1} parent=11 // pred_check_branch
          %967 = sbr.rel (%p965) target = $region124
        $region123: #{_lambda_.1} parent=11 // pred_region
          _
        $region124: #{_lambda_.1} parent=11 // pred_fallthru
          _
        // Predicated region
        $region125: #{_lambda_.1} parent=11 // pred_check
          %p968 = pneg %p717
        $region126: #{_lambda_.1} parent=11 // pred_check_branch
          %970 = sbr.rel (%p968) target = $region128
        $region127: #{_lambda_.1} parent=11 // pred_region
          _
        $region128: #{_lambda_.1} parent=11 // pred_fallthru
          _
        // Predicated region
        $region129: #{_lambda_.1} parent=11 // pred_check
          %p971 = pneg %p738
        $region130: #{_lambda_.1} parent=11 // pred_check_branch
          %973 = sbr.rel (%p971) target = $region132
        $region131: #{_lambda_.1} parent=11 // pred_region
          _
        $region132: #{_lambda_.1} parent=11 // pred_fallthru
          _
        // Predicated region
        $region133: #{_lambda_.1} parent=11 // pred_check
          %p974 = pneg %p759
        $region134: #{_lambda_.1} parent=11 // pred_check_branch
          %976 = sbr.rel (%p974) target = $region136
        $region135: #{_lambda_.1} parent=11 // pred_region
          _
        $region136: #{_lambda_.1} parent=11 // pred_fallthru
          _
        // Predicated region
        $region137: #{_lambda_.1} parent=11 // pred_check
          %p977 = pneg %p780
        $region138: #{_lambda_.1} parent=11 // pred_check_branch
          %979 = sbr.rel (%p977) target = $region140
        $region139: #{_lambda_.1} parent=11 // pred_region
          _
        $region140: #{_lambda_.1} parent=11 // pred_fallthru
          _
        // Predicated region
        $region141: #{_lambda_.1} parent=11 // pred_check
          %p980 = pneg %p801
        $region142: #{_lambda_.1} parent=11 // pred_check_branch
          %982 = sbr.rel (%p980) target = $region144
        $region143: #{_lambda_.1} parent=11 // pred_region
          _
        $region144: #{_lambda_.1} parent=11 // pred_fallthru
          _
        // Predicated region
        $region145: #{_lambda_.1} parent=11 // pred_check
          %p983 = pneg %p822
        $region146: #{_lambda_.1} parent=11 // pred_check_branch
          %985 = sbr.rel (%p983) target = $region148
        $region147: #{_lambda_.1} parent=11 // pred_region
          _
        $region148: #{_lambda_.1} parent=11 // pred_fallthru
          _
        // Predicated region
        $region149: #{_lambda_.1} parent=11 // pred_check
          %p986 = pneg %p843
        $region150: #{_lambda_.1} parent=11 // pred_check_branch
          %988 = sbr.rel (%p986) target = $region152
        $region151: #{_lambda_.1} parent=11 // pred_region
          _
        $region152: #{_lambda_.1} parent=11 // pred_fallthru
          _
      $region12: #{_lambda_.1} parent=5 // pred_fallthru
        _
      %p989 = scmp.lt.s32.totalorder %s82, 2
      // Predicated region
      $region153: #{_lambda_.1} parent=5 // pred_check
        %p990 = pneg %p989
      $region154: #{_lambda_.1} parent=5 // pred_check_branch
        %992 = sbr.rel (%p990) target = $region156
      $region155: #{_lambda_.1} parent=5 // pred_region
        // Predicated region
        $region157: #{_lambda_.1} parent=155 // pred_check
          %p993 = pneg %p102
        $region158: #{_lambda_.1} parent=155 // pred_check_branch
          %995 = sbr.rel (%p993) target = $region160
        $region159: #{_lambda_.1} parent=155 // pred_region
          %p996 = scmp.lt.s32.totalorder %s82, 1
          %s997 = scalar_select %p996, %s82, 1
          %s998 = smul.addr %s997, 8
          %s999 = smul.addr %s998, 4
          %s1000 = scalar_lea.vmem %s1, %s999
        $region160: #{_lambda_.1} parent=155 // pred_fallthru
          _
      $region156: #{_lambda_.1} parent=5 // pred_fallthru
        _
      %p1001 = scmp.le.s32.totalorder 1, %s82
      %p1002 = scmp.lt.s32.totalorder %s82, 3
      %p1003 = pnand %p1001, %p1002
      %p1004 = pneg %p1003
      // Predicated region
      $region161: #{_lambda_.1} parent=5 // pred_check
        _
      $region162: #{_lambda_.1} parent=5 // pred_check_branch
        %1006 = sbr.rel (%p1003) target = $region164
      $region163: #{_lambda_.1} parent=5 // pred_region
        %s1007 = ssub.s32 %s82, 1
        %p1008 = scmp.lt.s32.totalorder %s87, 1
        %s1009 = scalar_select %p1008, %s87, 1
        %s1010 = smul.addr %s1009, 8
        %s1011 = smul.addr %s1010, 4
        %s1012 = scalar_lea.vmem %s1, %s1011
        %p1013 = pneg %p108
        %p1014 = pneg %p105
        %p1015 = pneg %p129
        %p1016 = pneg %p126
        %p1017 = pneg %p150
        %p1018 = pneg %p147
        %p1019 = pneg %p171
        %p1020 = pneg %p168
        %p1021 = pneg %p192
        %p1022 = pneg %p189
        %p1023 = pneg %p213
        %p1024 = pneg %p210
        %p1025 = pneg %p234
        %p1026 = pneg %p231
        %p1027 = pneg %p255
        %p1028 = pneg %p252
        %p1029 = pneg %p276
        %p1030 = pneg %p273
        %p1031 = pneg %p297
        %p1032 = pneg %p294
        %p1033 = pneg %p318
        %p1034 = pneg %p315
        %p1035 = pneg %p339
        %p1036 = pneg %p336
        %p1037 = pneg %p360
        %p1038 = pneg %p357
        %p1039 = pneg %p381
        %p1040 = pneg %p378
        %p1041 = pneg %p402
        %p1042 = pneg %p399
        %p1043 = pneg %p423
        %p1044 = pneg %p420
        %p1045 = pneg %p444
        %p1046 = pneg %p441
        %p1047 = pneg %p465
        %p1048 = pneg %p462
        %p1049 = pneg %p486
        %p1050 = pneg %p483
        %p1051 = pneg %p507
        %p1052 = pneg %p504
        %p1053 = pneg %p528
        %p1054 = pneg %p525
        %p1055 = pneg %p549
        %p1056 = pneg %p546
        %p1057 = pneg %p570
        %p1058 = pneg %p567
        %p1059 = pneg %p591
        %p1060 = pneg %p588
        %p1061 = pneg %p612
        %p1062 = pneg %p609
        %p1063 = pneg %p633
        %p1064 = pneg %p630
        %p1065 = pneg %p654
        %p1066 = pneg %p651
        %p1067 = pneg %p675
        %p1068 = pneg %p672
        %p1069 = pneg %p696
        %p1070 = pneg %p693
        %p1071 = pneg %p717
        %p1072 = pneg %p714
        %p1073 = pneg %p738
        %p1074 = pneg %p735
        %p1075 = pneg %p759
        %p1076 = pneg %p756
        %p1077 = pneg %p780
        %p1078 = pneg %p777
        %p1079 = pneg %p801
        %p1080 = pneg %p798
        %p1081 = pneg %p822
        %p1082 = pneg %p819
        %p1083 = pneg %p843
        %p1084 = pneg %p840
        %p1085 = pneg %p869
        %p1086 = pneg %p866
        %s1087 = sand.u32 %s856, 1
        %s1088 = scalar_lea.sflag [#allocation6], %s1087
        %s1089 = sand.u32 %s856, 1
        %s1090 = scalar_lea.vmem [#allocation5], %s1089
        %p1091 = scmp.lt.s32.totalorder %s87, 1
        %s1092 = scalar_select %p1091, %s87, 1
        %s1093 = smul.addr %s1092, 8
        %s1094 = smul.addr %s1093, 4
        %s1095 = scalar_lea.vmem %s1, %s1094
        %v1097 = vld [vmem:[%s1095] sm:$0xf]
        %v1098 = vld [vmem:[%s1095 + $0x4] sm:$0xf]
        %v1099 = vld [vmem:[%s1095 + $0x8] sm:$0xf]
        %v1100 = vld [vmem:[%s1095 + $0xc] sm:$0xf]
        %v1101 = vld [vmem:[%s1095 + $0x10] sm:$0xf]
        %v1102 = vld [vmem:[%s1095 + $0x14] sm:$0xf]
        %v1103 = vld [vmem:[%s1095 + $0x18] sm:$0xf]
        %v1104 = vld [vmem:[%s1095 + $0x1c] sm:$0xf]
        %v1105 = vld [vmem:[%s3] sm:$0xf]
        %v1106 = vld [vmem:[%s3 + $0x4] sm:$0xf]
        %v1107 = vld [vmem:[%s3 + $0x8] sm:$0xf]
        %v1108 = vld [vmem:[%s3 + $0xc] sm:$0x3]
        %v1109 = vld [vmem:[%s5] sm:$0x1]
        %v1111 = vlaneseq
        %v1112 = vshrl.u32 %v1111, 7
        %v1113 = vsub.s32 0, %v1112
        %v1114 = vrot.slane %v1109, %v1113
        %v1124 = vunpack.c.l.b16 %v1097
        %v1125 = vunpack.c.l.b16 %v1098
        %v1126 = vunpack.c.l.b16 %v1099
        %v1127 = vunpack.c.l.b16 %v1100
        %v1128 = vunpack.c.l.b16 %v1101
        %v1129 = vunpack.c.l.b16 %v1102
        %v1130 = vunpack.c.l.b16 %v1103
        %v1131 = vunpack.c.l.b16 %v1104
        %v1132 = vpack.c.b16 %v1125, %v1124
        %v1133 = vpack.c.b16 %v1127, %v1126
        %v1134 = vpack.c.b16 %v1129, %v1128
        %v1135 = vpack.c.b16 %v1131, %v1130
        %v1140 = vunpack.c.l.b16 %v1105
        %v1141 = vunpack.c.l.b16 %v1106
        %v1142 = vunpack.c.l.b16 %v1107
        %v1143 = vunpack.c.l.b16 %v1108
        %v1144 = vpack.c.b16 %v1141, %v1140
        %v1145 = vpack.c.b16 %v1143, %v1142
        %vm1147 = vcmask 220160
        %v1149 = vsel %vm1147, %v1132, 0
        %v1152 = vsel %vm1147, %v1133, 0
        %v1155 = vsel %vm1147, %v1134, 0
        %v1158 = vsel %vm1147, %v1135, 0
        %vm1160 = vcmask 1044480
        %vm1161 = vcmask 1045504
        %v1162 = vsel %vm1160, 4294967295, 65535
        %v1163 = vsel %vm1161, %v1162, 0
        %v1165 = vand.u32 %v1145, %v1163
        %1167 = vmatprep.subr.bf16.mxu0 0
        %1168 = vmatpush1.bf16.msra.mxu0 %v1144
        %1169 = vmatprep.subr.bf16.mxu0 0
        %1170 = vmatpush1.bf16.msra.mxu0 %v1165
        %1171 = vmatprep.subr.bf16.mxu0 0
        %1172 = vmatpush1.bf16.msra.mxu0 0
        %1173 = vmatprep.subr.bf16.mxu0 0
        %1174 = vmatpush1.bf16.msra.mxu0 0
        %1175 = vmatprep.subr.bf16.mxu0 0
        %1176 = vmatpush1.bf16.msra.mxu0 0
        %1177 = vmatprep.subr.bf16.mxu0 0
        %1178 = vmatpush1.bf16.msra.mxu0 0
        %1179 = vmatprep.subr.bf16.mxu0 0
        %1180 = vmatpush1.bf16.msra.mxu0 0
        %1181 = vmatprep.subr.bf16.mxu0 0
        %1182 = vmatpush1.bf16.msra.mxu0 0
        %1183 = vmatprep.subr.bf16.mxu0 0
        %1184 = vmatpush1.bf16.msra.mxu0 0
        %1185 = vmatprep.subr.bf16.mxu0 0
        %1186 = vmatpush1.bf16.msra.mxu0 0
        %1187 = vmatprep.subr.bf16.mxu0 0
        %1188 = vmatpush1.bf16.msra.mxu0 0
        %1189 = vmatprep.subr.bf16.mxu0 0
        %1190 = vmatpush1.bf16.msra.mxu0 0
        %1191 = vmatprep.subr.bf16.mxu0 0
        %1192 = vmatpush1.bf16.msra.mxu0 0
        %1193 = vmatprep.subr.bf16.mxu0 0
        %1194 = vmatpush1.bf16.msra.mxu0 0
        %1195 = vmatprep.subr.bf16.mxu0 0
        %1196 = vmatpush1.bf16.msra.mxu0 0
        %1197 = vmatprep.subr.bf16.mxu0 0
        %1198 = vmatpush1.bf16.msra.mxu0 0
        %1199 = vmatprep.mubr.bf16.mxu0 0
        %1200 = vmatmul.mubr.bf16.gmra.mrb[0].mxu0 %v1149
        %v1201 = vpop.f32.mrb[0].mxu0
        %v1202 = vadd.f32 %v1114, %v1201
        %v1203 = vpop.f32.mrb[0].mxu0
        %v1204 = vpop.f32.mrb[0].mxu0
        %v1205 = vadd.f32 %v1114, %v1204
        %v1206 = vpop.f32.mrb[0].mxu0
        %1207 = vmatprep.mubr.bf16.mxu0 0
        %1208 = vmatmul.mubr.bf16.gmra.mrb[0].mxu0 %v1152
        %v1209 = vpop.f32.mrb[0].mxu0
        %v1210 = vadd.f32 %v1114, %v1209
        %v1211 = vpop.f32.mrb[0].mxu0
        %v1212 = vpop.f32.mrb[0].mxu0
        %v1213 = vadd.f32 %v1114, %v1212
        %v1214 = vpop.f32.mrb[0].mxu0
        %1215 = vmatprep.mubr.bf16.mxu0 0
        %1216 = vmatmul.mubr.bf16.gmra.mrb[0].mxu0 %v1155
        %v1217 = vpop.f32.mrb[0].mxu0
        %v1218 = vadd.f32 %v1114, %v1217
        %v1219 = vpop.f32.mrb[0].mxu0
        %v1220 = vpop.f32.mrb[0].mxu0
        %v1221 = vadd.f32 %v1114, %v1220
        %v1222 = vpop.f32.mrb[0].mxu0
        %1223 = vmatprep.mubr.bf16.mxu0 0
        %1224 = vmatmul.mubr.bf16.gmra.mrb[0].mxu0 %v1158
        %v1225 = vpop.f32.mrb[0].mxu0
        %v1226 = vadd.f32 %v1114, %v1225
        %v1227 = vpop.f32.mrb[0].mxu0
        %v1228 = vpop.f32.mrb[0].mxu0
        %v1229 = vadd.f32 %v1114, %v1228
        %v1230 = vpop.f32.mrb[0].mxu0
        %1231 = vdwg.mxu0
        %v1232 = vxor.u32 %v1202, 2147483648
        %v1233 = vxor.u32 %v1205, 2147483648
        %v1234 = vxor.u32 %v1210, 2147483648
        %v1235 = vxor.u32 %v1213, 2147483648
        %v1236 = vxor.u32 %v1218, 2147483648
        %v1237 = vxor.u32 %v1221, 2147483648
        %v1238 = vxor.u32 %v1226, 2147483648
        %v1239 = vxor.u32 %v1229, 2147483648
        %v1240 = vmul.f32 %v1232, 1.442695
        %v1241 = vpow.pop %v1240
        %v1242 = vmul.f32 %v1233, 1.442695
        %v1243 = vpow.pop %v1242
        %v1244 = vmul.f32 %v1234, 1.442695
        %v1245 = vpow.pop %v1244
        %v1246 = vmul.f32 %v1235, 1.442695
        %v1247 = vpow.pop %v1246
        %v1248 = vmul.f32 %v1236, 1.442695
        %v1249 = vpow.pop %v1248
        %v1250 = vmul.f32 %v1237, 1.442695
        %v1251 = vpow.pop %v1250
        %v1252 = vmul.f32 %v1238, 1.442695
        %v1253 = vpow.pop %v1252
        %v1254 = vmul.f32 %v1239, 1.442695
        %v1255 = vpow.pop %v1254
        %v1256 = vadd.f32 %v1241, 1.0
        %v1257 = vadd.f32 %v1243, 1.0
        %v1258 = vadd.f32 %v1245, 1.0
        %v1259 = vadd.f32 %v1247, 1.0
        %v1260 = vadd.f32 %v1249, 1.0
        %v1261 = vadd.f32 %v1251, 1.0
        %v1262 = vadd.f32 %v1253, 1.0
        %v1263 = vadd.f32 %v1255, 1.0
        %v1264 = vrcp.pop %v1256
        %v1265 = vmul.f32 1.0, %v1264
        %v1266 = vrcp.pop %v1257
        %v1267 = vmul.f32 1.0, %v1266
        %v1268 = vrcp.pop %v1258
        %v1269 = vmul.f32 1.0, %v1268
        %v1270 = vrcp.pop %v1259
        %v1271 = vmul.f32 1.0, %v1270
        %v1272 = vrcp.pop %v1260
        %v1273 = vmul.f32 1.0, %v1272
        %v1274 = vrcp.pop %v1261
        %v1275 = vmul.f32 1.0, %v1274
        %v1276 = vrcp.pop %v1262
        %v1277 = vmul.f32 1.0, %v1276
        %v1278 = vrcp.pop %v1263
        %v1279 = vmul.f32 1.0, %v1278
        %v1280 = vmul.f32 %v1202, %v1265
        %v1281 = vmul.f32 %v1205, %v1267
        %v1282 = vmul.f32 %v1210, %v1269
        %v1283 = vmul.f32 %v1213, %v1271
        %v1284 = vmul.f32 %v1218, %v1273
        %v1285 = vmul.f32 %v1221, %v1275
        %v1286 = vmul.f32 %v1226, %v1277
        %v1287 = vmul.f32 %v1229, %v1279
        %vm1288 = vcmask 64512
        %1289 = vst.msk [vmem:[#allocation2] sm:$0xff] %vm1288, 0.0
        %vm1290 = vcmask 57344
        %1291 = vst.msk [vmem:[#allocation2 + $0x8] sm:$0x1] %vm1290, 0.0
        %1292 = vst.msk [vmem:[#allocation2 + $0x9] sm:$0xff] %vm1288, %v1280
        %1293 = vst.msk [vmem:[#allocation2 + $0x11] sm:$0xff] %vm1288, %v1281
        %1294 = vst.msk [vmem:[#allocation2 + $0x19] sm:$0xff] %vm1288, %v1282
        %1295 = vst.msk [vmem:[#allocation2 + $0x21] sm:$0xff] %vm1288, %v1283
        %1296 = vst.msk [vmem:[#allocation2 + $0x29] sm:$0xff] %vm1288, %v1284
        %1297 = vst.msk [vmem:[#allocation2 + $0x31] sm:$0xff] %vm1288, %v1285
        %1298 = vst.msk [vmem:[#allocation2 + $0x39] sm:$0xff] %vm1288, %v1286
        %1299 = vst.msk [vmem:[#allocation2 + $0x41] sm:$0xff] %vm1288, %v1287
        %1300 = vst.msk [vmem:[#allocation2 + $0x49] sm:$0xff] %vm1288, 0.0
        %1301 = vst.msk [vmem:[#allocation2 + $0x51] sm:$0x1] %vm1290, 0.0
        %v1302 = vld [vmem:[%s7] sm:$0xff]
        %v1303 = vld [vmem:[%s7 + $0x8] sm:$0x1]
        %v1304 = vlaneseq
        %v1305 = vshrl.u32 %v1304, 7
        %v1306 = vadd.s32 %v1305, 8
        %v1307 = vadd.s32 %v1305, 16
        %v1308 = vadd.s32 %v1305, 24
        %v1309 = vadd.s32 %v1305, 32
        %v1310 = vadd.s32 %v1305, 40
        %v1311 = vadd.s32 %v1305, 48
        %v1312 = vadd.s32 %v1305, 56
        %vm1313 = vcmp.lt.s32.totalorder %v1305, 0
        %v1314 = vsub.s32 0, %v1305
        %v1315 = vsel %vm1313, %v1314, %v1305
        %v1316 = vshrl.u32 %v1315, 3
        %v1317 = vand.u32 %v1315, 7
        %v1318 = vsub.s32 0, %v1317
        %v1319 = vsel %vm1313, %v1318, %v1317
        %vm1320 = vcmp.lt.s32.totalorder %v1306, 0
        %v1321 = vsub.s32 0, %v1306
        %v1322 = vsel %vm1320, %v1321, %v1306
        %v1323 = vshrl.u32 %v1322, 3
        %v1324 = vand.u32 %v1322, 7
        %v1325 = vsub.s32 0, %v1324
        %v1326 = vsel %vm1320, %v1325, %v1324
        %vm1327 = vcmp.lt.s32.totalorder %v1307, 0
        %v1328 = vsub.s32 0, %v1307
        %v1329 = vsel %vm1327, %v1328, %v1307
        %v1330 = vshrl.u32 %v1329, 3
        %v1331 = vand.u32 %v1329, 7
        %v1332 = vsub.s32 0, %v1331
        %v1333 = vsel %vm1327, %v1332, %v1331
        %vm1334 = vcmp.lt.s32.totalorder %v1308, 0
        %v1335 = vsub.s32 0, %v1308
        %v1336 = vsel %vm1334, %v1335, %v1308
        %v1337 = vshrl.u32 %v1336, 3
        %v1338 = vand.u32 %v1336, 7
        %v1339 = vsub.s32 0, %v1338
        %v1340 = vsel %vm1334, %v1339, %v1338
        %vm1341 = vcmp.lt.s32.totalorder %v1309, 0
        %v1342 = vsub.s32 0, %v1309
        %v1343 = vsel %vm1341, %v1342, %v1309
        %v1344 = vshrl.u32 %v1343, 3
        %v1345 = vand.u32 %v1343, 7
        %v1346 = vsub.s32 0, %v1345
        %v1347 = vsel %vm1341, %v1346, %v1345
        %vm1348 = vcmp.lt.s32.totalorder %v1310, 0
        %v1349 = vsub.s32 0, %v1310
        %v1350 = vsel %vm1348, %v1349, %v1310
        %v1351 = vshrl.u32 %v1350, 3
        %v1352 = vand.u32 %v1350, 7
        %v1353 = vsub.s32 0, %v1352
        %v1354 = vsel %vm1348, %v1353, %v1352
        %vm1355 = vcmp.lt.s32.totalorder %v1311, 0
        %v1356 = vsub.s32 0, %v1311
        %v1357 = vsel %vm1355, %v1356, %v1311
        %v1358 = vshrl.u32 %v1357, 3
        %v1359 = vand.u32 %v1357, 7
        %v1360 = vsub.s32 0, %v1359
        %v1361 = vsel %vm1355, %v1360, %v1359
        %vm1362 = vcmp.lt.s32.totalorder %v1312, 0
        %v1363 = vsub.s32 0, %v1312
        %v1364 = vsel %vm1362, %v1363, %v1312
        %v1365 = vshrl.u32 %v1364, 3
        %v1366 = vand.u32 %v1364, 7
        %v1367 = vsub.s32 0, %v1366
        %v1368 = vsel %vm1362, %v1367, %v1366
        %vm1369 = vcmp.ne.s32.totalorder %v1319, 0
        %vm1370 = vcmp.ne.s32.totalorder %v1326, 0
        %vm1371 = vcmp.ne.s32.totalorder %v1333, 0
        %vm1372 = vcmp.ne.s32.totalorder %v1340, 0
        %vm1373 = vcmp.ne.s32.totalorder %v1347, 0
        %vm1374 = vcmp.ne.s32.totalorder %v1354, 0
        %vm1375 = vcmp.ne.s32.totalorder %v1361, 0
        %vm1376 = vcmp.ne.s32.totalorder %v1368, 0
        %vm1377 = vcmp.lt.s32.totalorder %v1319, 0
        %vm1378 = vcmp.lt.s32.totalorder %v1326, 0
        %vm1379 = vcmp.lt.s32.totalorder %v1333, 0
        %vm1380 = vcmp.lt.s32.totalorder %v1340, 0
        %vm1381 = vcmp.lt.s32.totalorder %v1347, 0
        %vm1382 = vcmp.lt.s32.totalorder %v1354, 0
        %vm1383 = vcmp.lt.s32.totalorder %v1361, 0
        %vm1384 = vcmp.lt.s32.totalorder %v1368, 0
        %vm1385 = vmand %vm1377, %vm1369
        %vm1386 = vmand %vm1378, %vm1370
        %vm1387 = vmand %vm1379, %vm1371
        %vm1388 = vmand %vm1380, %vm1372
        %vm1389 = vmand %vm1381, %vm1373
        %vm1390 = vmand %vm1382, %vm1374
        %vm1391 = vmand %vm1383, %vm1375
        %vm1392 = vmand %vm1384, %vm1376
        %v1393 = vadd.s32 %v1319, 8
        %v1394 = vadd.s32 %v1326, 8
        %v1395 = vadd.s32 %v1333, 8
        %v1396 = vadd.s32 %v1340, 8
        %v1397 = vadd.s32 %v1347, 8
        %v1398 = vadd.s32 %v1354, 8
        %v1399 = vadd.s32 %v1361, 8
        %v1400 = vadd.s32 %v1368, 8
        %v1401 = vsel %vm1385, %v1393, %v1319
        %v1402 = vsel %vm1386, %v1394, %v1326
        %v1403 = vsel %vm1387, %v1395, %v1333
        %v1404 = vsel %vm1388, %v1396, %v1340
        %v1405 = vsel %vm1389, %v1397, %v1347
        %v1406 = vsel %vm1390, %v1398, %v1354
        %v1407 = vsel %vm1391, %v1399, %v1361
        %v1408 = vsel %vm1392, %v1400, %v1368
        %v1409 = vld [vmem:[#allocation2] sm:$0xff]
        %v1410 = vld [vmem:[#allocation2 + $0x8] sm:$0xff]
        %v1411 = vld [vmem:[#allocation2 + $0x10] sm:$0xff]
        %v1412 = vld [vmem:[#allocation2 + $0x18] sm:$0xff]
        %v1413 = vld [vmem:[#allocation2 + $0x20] sm:$0xff]
        %v1414 = vld [vmem:[#allocation2 + $0x28] sm:$0xff]
        %v1415 = vld [vmem:[#allocation2 + $0x30] sm:$0xff]
        %v1416 = vld [vmem:[#allocation2 + $0x38] sm:$0xff]
        %v1417 = vlaneseq
        %v1418 = vshrl.u32 %v1417, 7
        %v1419 = vsub.s32 0, %v1418
        %v1420 = vrot.slane %v1302, %v1419
        %v1421 = vmul.f32 %v1409, %v1420
        %v1422 = vmul.f32 %v1410, %v1420
        %v1423 = vmul.f32 %v1411, %v1420
        %v1424 = vmul.f32 %v1412, %v1420
        %v1425 = vmul.f32 %v1413, %v1420
        %v1426 = vmul.f32 %v1414, %v1420
        %v1427 = vmul.f32 %v1415, %v1420
        %v1428 = vmul.f32 %v1416, %v1420
        %v1429 = vadd.s32 %v1401, 4294967295
        %v1430 = vadd.s32 %v1402, 4294967295
        %v1431 = vadd.s32 %v1403, 4294967295
        %v1432 = vadd.s32 %v1404, 4294967295
        %v1433 = vadd.s32 %v1405, 4294967295
        %v1434 = vadd.s32 %v1406, 4294967295
        %v1435 = vadd.s32 %v1407, 4294967295
        %v1436 = vadd.s32 %v1408, 4294967295
        %vm1437 = vcmp.ge.s32.totalorder %v1429, 0
        %vm1438 = vcmp.ge.s32.totalorder %v1430, 0
        %vm1439 = vcmp.ge.s32.totalorder %v1431, 0
        %vm1440 = vcmp.ge.s32.totalorder %v1432, 0
        %vm1441 = vcmp.ge.s32.totalorder %v1433, 0
        %vm1442 = vcmp.ge.s32.totalorder %v1434, 0
        %vm1443 = vcmp.ge.s32.totalorder %v1435, 0
        %vm1444 = vcmp.ge.s32.totalorder %v1436, 0
        %vm1445 = vcmp.lt.s32.totalorder %v1429, 8
        %vm1446 = vcmp.lt.s32.totalorder %v1430, 8
        %vm1447 = vcmp.lt.s32.totalorder %v1431, 8
        %vm1448 = vcmp.lt.s32.totalorder %v1432, 8
        %vm1449 = vcmp.lt.s32.totalorder %v1433, 8
        %vm1450 = vcmp.lt.s32.totalorder %v1434, 8
        %vm1451 = vcmp.lt.s32.totalorder %v1435, 8
        %vm1452 = vcmp.lt.s32.totalorder %v1436, 8
        %vm1453 = vmand %vm1437, %vm1445
        %vm1454 = vmand %vm1438, %vm1446
        %vm1455 = vmand %vm1439, %vm1447
        %vm1456 = vmand %vm1440, %vm1448
        %vm1457 = vmand %vm1441, %vm1449
        %vm1458 = vmand %vm1442, %vm1450
        %vm1459 = vmand %vm1443, %vm1451
        %vm1460 = vmand %vm1444, %vm1452
        %v1461 = vsel %vm1453, 1, 0
        %v1462 = vsel %vm1454, 1, 0
        %v1463 = vsel %vm1455, 1, 0
        %v1464 = vsel %vm1456, 1, 0
        %v1465 = vsel %vm1457, 1, 0
        %v1466 = vsel %vm1458, 1, 0
        %v1467 = vsel %vm1459, 1, 0
        %v1468 = vsel %vm1460, 1, 0
        %vm1469 = vcmp.eq.s32.totalorder %v1461, 1
        %vm1470 = vcmp.eq.s32.totalorder %v1462, 1
        %vm1471 = vcmp.eq.s32.totalorder %v1463, 1
        %vm1472 = vcmp.eq.s32.totalorder %v1464, 1
        %vm1473 = vcmp.eq.s32.totalorder %v1465, 1
        %vm1474 = vcmp.eq.s32.totalorder %v1466, 1
        %vm1475 = vcmp.eq.s32.totalorder %v1467, 1
        %vm1476 = vcmp.eq.s32.totalorder %v1468, 1
        %v1477 = vsel %vm1469, %v1421, 0.0
        %v1478 = vsel %vm1470, %v1422, 0.0
        %v1479 = vsel %vm1471, %v1423, 0.0
        %v1480 = vsel %vm1472, %v1424, 0.0
        %v1481 = vsel %vm1473, %v1425, 0.0
        %v1482 = vsel %vm1474, %v1426, 0.0
        %v1483 = vsel %vm1475, %v1427, 0.0
        %v1484 = vsel %vm1476, %v1428, 0.0
        %v1485 = vld [vmem:[#allocation2 + $0x1] sm:$0xff]
        %v1486 = vld [vmem:[#allocation2 + $0x9] sm:$0xff]
        %v1487 = vld [vmem:[#allocation2 + $0x11] sm:$0xff]
        %v1488 = vld [vmem:[#allocation2 + $0x19] sm:$0xff]
        %v1489 = vld [vmem:[#allocation2 + $0x21] sm:$0xff]
        %v1490 = vld [vmem:[#allocation2 + $0x29] sm:$0xff]
        %v1491 = vld [vmem:[#allocation2 + $0x31] sm:$0xff]
        %v1492 = vld [vmem:[#allocation2 + $0x39] sm:$0xff]
        %v1493 = vlaneseq
        %v1494 = vshrl.u32 %v1493, 7
        %v1495 = vsub.s32 1, %v1494
        %v1496 = vrot.slane %v1302, %v1495
        %v1497 = vmul.f32 %v1485, %v1496
        %v1498 = vmul.f32 %v1486, %v1496
        %v1499 = vmul.f32 %v1487, %v1496
        %v1500 = vmul.f32 %v1488, %v1496
        %v1501 = vmul.f32 %v1489, %v1496
        %v1502 = vmul.f32 %v1490, %v1496
        %v1503 = vmul.f32 %v1491, %v1496
        %v1504 = vmul.f32 %v1492, %v1496
        %v1505 = vadd.f32 %v1477, %v1497
        %v1506 = vadd.f32 %v1478, %v1498
        %v1507 = vadd.f32 %v1479, %v1499
        %v1508 = vadd.f32 %v1480, %v1500
        %v1509 = vadd.f32 %v1481, %v1501
        %v1510 = vadd.f32 %v1482, %v1502
        %v1511 = vadd.f32 %v1483, %v1503
        %v1512 = vadd.f32 %v1484, %v1504
        %v1513 = vld [vmem:[#allocation2 + $0x2] sm:$0xff]
        %v1514 = vld [vmem:[#allocation2 + $0xa] sm:$0xff]
        %v1515 = vld [vmem:[#allocation2 + $0x12] sm:$0xff]
        %v1516 = vld [vmem:[#allocation2 + $0x1a] sm:$0xff]
        %v1517 = vld [vmem:[#allocation2 + $0x22] sm:$0xff]
        %v1518 = vld [vmem:[#allocation2 + $0x2a] sm:$0xff]
        %v1519 = vld [vmem:[#allocation2 + $0x32] sm:$0xff]
        %v1520 = vld [vmem:[#allocation2 + $0x3a] sm:$0xff]
        %v1521 = vlaneseq
        %v1522 = vshrl.u32 %v1521, 7
        %v1523 = vsub.s32 2, %v1522
        %v1524 = vrot.slane %v1302, %v1523
        %v1525 = vmul.f32 %v1513, %v1524
        %v1526 = vmul.f32 %v1514, %v1524
        %v1527 = vmul.f32 %v1515, %v1524
        %v1528 = vmul.f32 %v1516, %v1524
        %v1529 = vmul.f32 %v1517, %v1524
        %v1530 = vmul.f32 %v1518, %v1524
        %v1531 = vmul.f32 %v1519, %v1524
        %v1532 = vmul.f32 %v1520, %v1524
        %v1533 = vadd.s32 %v1401, 1
        %v1534 = vadd.s32 %v1402, 1
        %v1535 = vadd.s32 %v1403, 1
        %v1536 = vadd.s32 %v1404, 1
        %v1537 = vadd.s32 %v1405, 1
        %v1538 = vadd.s32 %v1406, 1
        %v1539 = vadd.s32 %v1407, 1
        %v1540 = vadd.s32 %v1408, 1
        %vm1541 = vcmp.ge.s32.totalorder %v1533, 0
        %vm1542 = vcmp.ge.s32.totalorder %v1534, 0
        %vm1543 = vcmp.ge.s32.totalorder %v1535, 0
        %vm1544 = vcmp.ge.s32.totalorder %v1536, 0
        %vm1545 = vcmp.ge.s32.totalorder %v1537, 0
        %vm1546 = vcmp.ge.s32.totalorder %v1538, 0
        %vm1547 = vcmp.ge.s32.totalorder %v1539, 0
        %vm1548 = vcmp.ge.s32.totalorder %v1540, 0
        %vm1549 = vcmp.lt.s32.totalorder %v1533, 8
        %vm1550 = vcmp.lt.s32.totalorder %v1534, 8
        %vm1551 = vcmp.lt.s32.totalorder %v1535, 8
        %vm1552 = vcmp.lt.s32.totalorder %v1536, 8
        %vm1553 = vcmp.lt.s32.totalorder %v1537, 8
        %vm1554 = vcmp.lt.s32.totalorder %v1538, 8
        %vm1555 = vcmp.lt.s32.totalorder %v1539, 8
        %vm1556 = vcmp.lt.s32.totalorder %v1540, 8
        %vm1557 = vmand %vm1541, %vm1549
        %vm1558 = vmand %vm1542, %vm1550
        %vm1559 = vmand %vm1543, %vm1551
        %vm1560 = vmand %vm1544, %vm1552
        %vm1561 = vmand %vm1545, %vm1553
        %vm1562 = vmand %vm1546, %vm1554
        %vm1563 = vmand %vm1547, %vm1555
        %vm1564 = vmand %vm1548, %vm1556
        %v1565 = vsel %vm1557, 1, 0
        %v1566 = vsel %vm1558, 1, 0
        %v1567 = vsel %vm1559, 1, 0
        %v1568 = vsel %vm1560, 1, 0
        %v1569 = vsel %vm1561, 1, 0
        %v1570 = vsel %vm1562, 1, 0
        %v1571 = vsel %vm1563, 1, 0
        %v1572 = vsel %vm1564, 1, 0
        %vm1573 = vcmp.eq.s32.totalorder %v1565, 1
        %vm1574 = vcmp.eq.s32.totalorder %v1566, 1
        %vm1575 = vcmp.eq.s32.totalorder %v1567, 1
        %vm1576 = vcmp.eq.s32.totalorder %v1568, 1
        %vm1577 = vcmp.eq.s32.totalorder %v1569, 1
        %vm1578 = vcmp.eq.s32.totalorder %v1570, 1
        %vm1579 = vcmp.eq.s32.totalorder %v1571, 1
        %vm1580 = vcmp.eq.s32.totalorder %v1572, 1
        %v1581 = vsel %vm1573, %v1525, 0.0
        %v1582 = vsel %vm1574, %v1526, 0.0
        %v1583 = vsel %vm1575, %v1527, 0.0
        %v1584 = vsel %vm1576, %v1528, 0.0
        %v1585 = vsel %vm1577, %v1529, 0.0
        %v1586 = vsel %vm1578, %v1530, 0.0
        %v1587 = vsel %vm1579, %v1531, 0.0
        %v1588 = vsel %vm1580, %v1532, 0.0
        %v1589 = vadd.f32 %v1505, %v1581
        %v1590 = vadd.f32 %v1506, %v1582
        %v1591 = vadd.f32 %v1507, %v1583
        %v1592 = vadd.f32 %v1508, %v1584
        %v1593 = vadd.f32 %v1509, %v1585
        %v1594 = vadd.f32 %v1510, %v1586
        %v1595 = vadd.f32 %v1511, %v1587
        %v1596 = vadd.f32 %v1512, %v1588
        %v1597 = vld [vmem:[#allocation2 + $0x40] sm:$0xff]
        %v1598 = vlaneseq
        %v1599 = vshrl.u32 %v1598, 7
        %v1600 = vsub.s32 3, %v1599
        %v1601 = vrot.slane %v1302, %v1600
        %v1602 = vmul.f32 %v1410, %v1601
        %v1603 = vmul.f32 %v1411, %v1601
        %v1604 = vmul.f32 %v1412, %v1601
        %v1605 = vmul.f32 %v1413, %v1601
        %v1606 = vmul.f32 %v1414, %v1601
        %v1607 = vmul.f32 %v1415, %v1601
        %v1608 = vmul.f32 %v1416, %v1601
        %v1609 = vmul.f32 %v1597, %v1601
        %v1610 = vsel %vm1469, %v1602, 0.0
        %v1611 = vsel %vm1470, %v1603, 0.0
        %v1612 = vsel %vm1471, %v1604, 0.0
        %v1613 = vsel %vm1472, %v1605, 0.0
        %v1614 = vsel %vm1473, %v1606, 0.0
        %v1615 = vsel %vm1474, %v1607, 0.0
        %v1616 = vsel %vm1475, %v1608, 0.0
        %v1617 = vsel %vm1476, %v1609, 0.0
        %v1618 = vadd.f32 %v1589, %v1610
        %v1619 = vadd.f32 %v1590, %v1611
        %v1620 = vadd.f32 %v1591, %v1612
        %v1621 = vadd.f32 %v1592, %v1613
        %v1622 = vadd.f32 %v1593, %v1614
        %v1623 = vadd.f32 %v1594, %v1615
        %v1624 = vadd.f32 %v1595, %v1616
        %v1625 = vadd.f32 %v1596, %v1617
        %v1626 = vld [vmem:[#allocation2 + $0x41] sm:$0xff]
        %v1627 = vlaneseq
        %v1628 = vshrl.u32 %v1627, 7
        %v1629 = vsub.s32 4, %v1628
        %v1630 = vrot.slane %v1302, %v1629
        %v1631 = vmul.f32 %v1486, %v1630
        %v1632 = vmul.f32 %v1487, %v1630
        %v1633 = vmul.f32 %v1488, %v1630
        %v1634 = vmul.f32 %v1489, %v1630
        %v1635 = vmul.f32 %v1490, %v1630
        %v1636 = vmul.f32 %v1491, %v1630
        %v1637 = vmul.f32 %v1492, %v1630
        %v1638 = vmul.f32 %v1626, %v1630
        %v1639 = vadd.f32 %v1618, %v1631
        %v1640 = vadd.f32 %v1619, %v1632
        %v1641 = vadd.f32 %v1620, %v1633
        %v1642 = vadd.f32 %v1621, %v1634
        %v1643 = vadd.f32 %v1622, %v1635
        %v1644 = vadd.f32 %v1623, %v1636
        %v1645 = vadd.f32 %v1624, %v1637
        %v1646 = vadd.f32 %v1625, %v1638
        %v1647 = vld [vmem:[#allocation2 + $0x42] sm:$0xff]
        %v1648 = vlaneseq
        %v1649 = vshrl.u32 %v1648, 7
        %v1650 = vsub.s32 5, %v1649
        %v1651 = vrot.slane %v1302, %v1650
        %v1652 = vmul.f32 %v1514, %v1651
        %v1653 = vmul.f32 %v1515, %v1651
        %v1654 = vmul.f32 %v1516, %v1651
        %v1655 = vmul.f32 %v1517, %v1651
        %v1656 = vmul.f32 %v1518, %v1651
        %v1657 = vmul.f32 %v1519, %v1651
        %v1658 = vmul.f32 %v1520, %v1651
        %v1659 = vmul.f32 %v1647, %v1651
        %v1660 = vsel %vm1573, %v1652, 0.0
        %v1661 = vsel %vm1574, %v1653, 0.0
        %v1662 = vsel %vm1575, %v1654, 0.0
        %v1663 = vsel %vm1576, %v1655, 0.0
        %v1664 = vsel %vm1577, %v1656, 0.0
        %v1665 = vsel %vm1578, %v1657, 0.0
        %v1666 = vsel %vm1579, %v1658, 0.0
        %v1667 = vsel %vm1580, %v1659, 0.0
        %v1668 = vadd.f32 %v1639, %v1660
        %v1669 = vadd.f32 %v1640, %v1661
        %v1670 = vadd.f32 %v1641, %v1662
        %v1671 = vadd.f32 %v1642, %v1663
        %v1672 = vadd.f32 %v1643, %v1664
        %v1673 = vadd.f32 %v1644, %v1665
        %v1674 = vadd.f32 %v1645, %v1666
        %v1675 = vadd.f32 %v1646, %v1667
        %v1676 = vld [vmem:[#allocation2 + $0x48] sm:$0xff]
        %v1677 = vlaneseq
        %v1678 = vshrl.u32 %v1677, 7
        %v1679 = vsub.s32 6, %v1678
        %v1680 = vrot.slane %v1302, %v1679
        %v1681 = vmul.f32 %v1411, %v1680
        %v1682 = vmul.f32 %v1412, %v1680
        %v1683 = vmul.f32 %v1413, %v1680
        %v1684 = vmul.f32 %v1414, %v1680
        %v1685 = vmul.f32 %v1415, %v1680
        %v1686 = vmul.f32 %v1416, %v1680
        %v1687 = vmul.f32 %v1597, %v1680
        %v1688 = vmul.f32 %v1676, %v1680
        %v1689 = vsel %vm1469, %v1681, 0.0
        %v1690 = vsel %vm1470, %v1682, 0.0
        %v1691 = vsel %vm1471, %v1683, 0.0
        %v1692 = vsel %vm1472, %v1684, 0.0
        %v1693 = vsel %vm1473, %v1685, 0.0
        %v1694 = vsel %vm1474, %v1686, 0.0
        %v1695 = vsel %vm1475, %v1687, 0.0
        %v1696 = vsel %vm1476, %v1688, 0.0
        %v1697 = vadd.f32 %v1668, %v1689
        %v1698 = vadd.f32 %v1669, %v1690
        %v1699 = vadd.f32 %v1670, %v1691
        %v1700 = vadd.f32 %v1671, %v1692
        %v1701 = vadd.f32 %v1672, %v1693
        %v1702 = vadd.f32 %v1673, %v1694
        %v1703 = vadd.f32 %v1674, %v1695
        %v1704 = vadd.f32 %v1675, %v1696
        %v1705 = vld [vmem:[#allocation2 + $0x49] sm:$0xff]
        %v1706 = vlaneseq
        %v1707 = vshrl.u32 %v1706, 7
        %v1708 = vsub.s32 7, %v1707
        %v1709 = vrot.slane %v1302, %v1708
        %v1710 = vmul.f32 %v1487, %v1709
        %v1711 = vmul.f32 %v1488, %v1709
        %v1712 = vmul.f32 %v1489, %v1709
        %v1713 = vmul.f32 %v1490, %v1709
        %v1714 = vmul.f32 %v1491, %v1709
        %v1715 = vmul.f32 %v1492, %v1709
        %v1716 = vmul.f32 %v1626, %v1709
        %v1717 = vmul.f32 %v1705, %v1709
        %v1718 = vadd.f32 %v1697, %v1710
        %v1719 = vadd.f32 %v1698, %v1711
        %v1720 = vadd.f32 %v1699, %v1712
        %v1721 = vadd.f32 %v1700, %v1713
        %v1722 = vadd.f32 %v1701, %v1714
        %v1723 = vadd.f32 %v1702, %v1715
        %v1724 = vadd.f32 %v1703, %v1716
        %v1725 = vadd.f32 %v1704, %v1717
        %v1726 = vld [vmem:[#allocation2 + $0x4a] sm:$0xff]
        %v1727 = vlaneseq
        %v1728 = vshrl.u32 %v1727, 7
        %v1729 = vsub.s32 0, %v1728
        %v1730 = vrot.slane %v1303, %v1729
        %v1731 = vmul.f32 %v1515, %v1730
        %v1732 = vmul.f32 %v1516, %v1730
        %v1733 = vmul.f32 %v1517, %v1730
        %v1734 = vmul.f32 %v1518, %v1730
        %v1735 = vmul.f32 %v1519, %v1730
        %v1736 = vmul.f32 %v1520, %v1730
        %v1737 = vmul.f32 %v1647, %v1730
        %v1738 = vmul.f32 %v1726, %v1730
        %v1739 = vsel %vm1573, %v1731, 0.0
        %v1740 = vsel %vm1574, %v1732, 0.0
        %v1741 = vsel %vm1575, %v1733, 0.0
        %v1742 = vsel %vm1576, %v1734, 0.0
        %v1743 = vsel %vm1577, %v1735, 0.0
        %v1744 = vsel %vm1578, %v1736, 0.0
        %v1745 = vsel %vm1579, %v1737, 0.0
        %v1746 = vsel %vm1580, %v1738, 0.0
        %v1747 = vadd.f32 %v1718, %v1739
        %v1748 = vadd.f32 %v1719, %v1740
        %v1749 = vadd.f32 %v1720, %v1741
        %v1750 = vadd.f32 %v1721, %v1742
        %v1751 = vadd.f32 %v1722, %v1743
        %v1752 = vadd.f32 %v1723, %v1744
        %v1753 = vadd.f32 %v1724, %v1745
        %v1754 = vadd.f32 %v1725, %v1746
        %v1755 = vld [vmem:[%s9] sm:$0x1]
        %v1757 = vlaneseq
        %v1758 = vshrl.u32 %v1757, 7
        %v1759 = vsub.s32 0, %v1758
        %v1760 = vrot.slane %v1755, %v1759
        %v1762 = vadd.f32 %v1747, %v1760
        %v1763 = vadd.f32 %v1748, %v1760
        %v1764 = vadd.f32 %v1749, %v1760
        %v1765 = vadd.f32 %v1750, %v1760
        %v1766 = vadd.f32 %v1751, %v1760
        %v1767 = vadd.f32 %v1752, %v1760
        %v1768 = vadd.f32 %v1753, %v1760
        %v1769 = vadd.f32 %v1754, %v1760
        %v1770 = vxor.u32 %v1762, 2147483648
        %v1771 = vxor.u32 %v1763, 2147483648
        %v1772 = vxor.u32 %v1764, 2147483648
        %v1773 = vxor.u32 %v1765, 2147483648
        %v1774 = vxor.u32 %v1766, 2147483648
        %v1775 = vxor.u32 %v1767, 2147483648
        %v1776 = vxor.u32 %v1768, 2147483648
        %v1777 = vxor.u32 %v1769, 2147483648
        %v1778 = vmul.f32 %v1770, 1.442695
        %v1779 = vpow.pop %v1778
        %v1780 = vmul.f32 %v1771, 1.442695
        %v1781 = vpow.pop %v1780
        %v1782 = vmul.f32 %v1772, 1.442695
        %v1783 = vpow.pop %v1782
        %v1784 = vmul.f32 %v1773, 1.442695
        %v1785 = vpow.pop %v1784
        %v1786 = vmul.f32 %v1774, 1.442695
        %v1787 = vpow.pop %v1786
        %v1788 = vmul.f32 %v1775, 1.442695
        %v1789 = vpow.pop %v1788
        %v1790 = vmul.f32 %v1776, 1.442695
        %v1791 = vpow.pop %v1790
        %v1792 = vmul.f32 %v1777, 1.442695
        %v1793 = vpow.pop %v1792
        %v1794 = vadd.f32 %v1779, 1.0
        %v1795 = vadd.f32 %v1781, 1.0
        %v1796 = vadd.f32 %v1783, 1.0
        %v1797 = vadd.f32 %v1785, 1.0
        %v1798 = vadd.f32 %v1787, 1.0
        %v1799 = vadd.f32 %v1789, 1.0
        %v1800 = vadd.f32 %v1791, 1.0
        %v1801 = vadd.f32 %v1793, 1.0
        %v1802 = vrcp.pop %v1794
        %v1803 = vmul.f32 1.0, %v1802
        %v1804 = vrcp.pop %v1795
        %v1805 = vmul.f32 1.0, %v1804
        %v1806 = vrcp.pop %v1796
        %v1807 = vmul.f32 1.0, %v1806
        %v1808 = vrcp.pop %v1797
        %v1809 = vmul.f32 1.0, %v1808
        %v1810 = vrcp.pop %v1798
        %v1811 = vmul.f32 1.0, %v1810
        %v1812 = vrcp.pop %v1799
        %v1813 = vmul.f32 1.0, %v1812
        %v1814 = vrcp.pop %v1800
        %v1815 = vmul.f32 1.0, %v1814
        %v1816 = vrcp.pop %v1801
        %v1817 = vmul.f32 1.0, %v1816
        %v1818 = vmul.f32 %v1762, %v1803
        %v1819 = vmul.f32 %v1763, %v1805
        %v1820 = vmul.f32 %v1764, %v1807
        %v1821 = vmul.f32 %v1765, %v1809
        %v1822 = vmul.f32 %v1766, %v1811
        %v1823 = vmul.f32 %v1767, %v1813
        %v1824 = vmul.f32 %v1768, %v1815
        %v1825 = vmul.f32 %v1769, %v1817
        %v1826 = vsel %vm1288, %v1818, 0.0
        %v1827 = vsel %vm1288, %v1819, 0.0
        %v1828 = vadd.f32 %v1826, %v1827
        %v1829 = vsel %vm1288, %v1820, 0.0
        %v1830 = vadd.f32 %v1828, %v1829
        %v1831 = vsel %vm1288, %v1821, 0.0
        %v1832 = vadd.f32 %v1830, %v1831
        %v1833 = vsel %vm1288, %v1822, 0.0
        %v1834 = vadd.f32 %v1832, %v1833
        %v1835 = vsel %vm1288, %v1823, 0.0
        %v1836 = vadd.f32 %v1834, %v1835
        %v1837 = vsel %vm1288, %v1824, 0.0
        %v1838 = vadd.f32 %v1836, %v1837
        %v1839 = vsel %vm1288, %v1825, 0.0
        %v1840 = vadd.f32 %v1838, %v1839
        %v1841 = vrot.slane %v1840, 4
        %v1842 = vadd.f32 %v1840, %v1841
        %v1843 = vrot.slane %v1842, 2
        %v1844 = vadd.f32 %v1842, %v1843
        %v1845 = vrot.slane %v1844, 1
        %v1846 = vadd.f32 %v1844, %v1845
        %v1847 = vmul.f32 %v1846, 0.015625
        %v1848 = vld [vmem:[%s11] sm:$0xff]
        %v1849 = vld [vmem:[%s13] sm:$0x1]
        %v1851 = vsel %vm1288, %v1847, 0
        %1853 = vmatprep.subr.mxu0 0.0
        %1854 = vmatpush1.msra.mxu0 %v1848
        %1855 = vmatprep.subr.mxu0 0.0
        %1856 = vmatpush1.msra.mxu0 0.0
        %1857 = vmatprep.subr.mxu0 0.0
        %1858 = vmatpush1.msra.mxu0 0.0
        %1859 = vmatprep.subr.mxu0 0.0
        %1860 = vmatpush1.msra.mxu0 0.0
        %1861 = vmatprep.subr.mxu0 0.0
        %1862 = vmatpush1.msra.mxu0 0.0
        %1863 = vmatprep.subr.mxu0 0.0
        %1864 = vmatpush1.msra.mxu0 0.0
        %1865 = vmatprep.subr.mxu0 0.0
        %1866 = vmatpush1.msra.mxu0 0.0
        %1867 = vmatprep.subr.mxu0 0.0
        %1868 = vmatpush1.msra.mxu0 0.0
        %1869 = vmatprep.subr.mxu0 0.0
        %1870 = vmatpush1.msra.mxu0 0.0
        %1871 = vmatprep.subr.mxu0 0.0
        %1872 = vmatpush1.msra.mxu0 0.0
        %1873 = vmatprep.subr.mxu0 0.0
        %1874 = vmatpush1.msra.mxu0 0.0
        %1875 = vmatprep.subr.mxu0 0.0
        %1876 = vmatpush1.msra.mxu0 0.0
        %1877 = vmatprep.subr.mxu0 0.0
        %1878 = vmatpush1.msra.mxu0 0.0
        %1879 = vmatprep.subr.mxu0 0.0
        %1880 = vmatpush1.msra.mxu0 0.0
        %1881 = vmatprep.subr.mxu0 0.0
        %1882 = vmatpush1.msra.mxu0 0.0
        %1883 = vmatprep.subr.mxu0 0.0
        %1884 = vmatpush1.msra.mxu0 0.0
        %1885 = vmatprep.subr.mxu0 0.0
        %1886 = vmatpush1.msra.mxu0 0.0
        %1887 = vmatprep.subr.mxu0 0.0
        %1888 = vmatpush1.msra.mxu0 0.0
        %1889 = vmatprep.subr.mxu0 0.0
        %1890 = vmatpush1.msra.mxu0 0.0
        %1891 = vmatprep.subr.mxu0 0.0
        %1892 = vmatpush1.msra.mxu0 0.0
        %1893 = vmatprep.subr.mxu0 0.0
        %1894 = vmatpush1.msra.mxu0 0.0
        %1895 = vmatprep.subr.mxu0 0.0
        %1896 = vmatpush1.msra.mxu0 0.0
        %1897 = vmatprep.subr.mxu0 0.0
        %1898 = vmatpush1.msra.mxu0 0.0
        %1899 = vmatprep.subr.mxu0 0.0
        %1900 = vmatpush1.msra.mxu0 0.0
        %1901 = vmatprep.subr.mxu0 0.0
        %1902 = vmatpush1.msra.mxu0 0.0
        %1903 = vmatprep.subr.mxu0 0.0
        %1904 = vmatpush1.msra.mxu0 0.0
        %1905 = vmatprep.subr.mxu0 0.0
        %1906 = vmatpush1.msra.mxu0 0.0
        %1907 = vmatprep.subr.mxu0 0.0
        %1908 = vmatpush1.msra.mxu0 0.0
        %1909 = vmatprep.subr.mxu0 0.0
        %1910 = vmatpush1.msra.mxu0 0.0
        %1911 = vmatprep.subr.mxu0 0.0
        %1912 = vmatpush1.msra.mxu0 0.0
        %1913 = vmatprep.subr.mxu0 0.0
        %1914 = vmatpush1.msra.mxu0 0.0
        %1915 = vmatprep.subr.mxu0 0.0
        %1916 = vmatpush1.msra.mxu0 0.0
        %1917 = vmatprep.mubr.f32.mxu0 0.0
        %1918 = vmatmul.mubr.f32.gmra.mrb[0].mxu0 %v1851
        %v1919 = vpop.f32.mrb[0].mxu0
        %v1920 = vadd.f32 %v1849, %v1919
        %v1921 = vpop.f32.mrb[0].mxu0
        %1922 = vdwg.mxu0
        %v1923 = vxor.u32 %v1920, 2147483648
        %v1924 = vmul.f32 %v1923, 1.442695
        %v1925 = vpow.pop %v1924
        %v1926 = vadd.f32 %v1925, 1.0
        %v1927 = vrcp.pop %v1926
        %v1928 = vmul.f32 1.0, %v1927
        %v1929 = vmul.f32 %v1920, %v1928
        %v1930 = vld [vmem:[%s15] sm:$0x3]
        %v1931 = vld [vmem:[%s17] sm:$0x1]
        %vm1932 = vcmask 15360
        %v1934 = vsel %vm1932, %v1929, 0
        %vm1936 = vcmask 1041408
        %v1938 = vsel %vm1936, %v1930, 0
        %1940 = vmatprep.subr.mxu0 0.0
        %1941 = vmatpush1.msra.mxu0 %v1938
        %1942 = vmatprep.subr.mxu0 0.0
        %1943 = vmatpush1.msra.mxu0 0.0
        %1944 = vmatprep.subr.mxu0 0.0
        %1945 = vmatpush1.msra.mxu0 0.0
        %1946 = vmatprep.subr.mxu0 0.0
        %1947 = vmatpush1.msra.mxu0 0.0
        %1948 = vmatprep.subr.mxu0 0.0
        %1949 = vmatpush1.msra.mxu0 0.0
        %1950 = vmatprep.subr.mxu0 0.0
        %1951 = vmatpush1.msra.mxu0 0.0
        %1952 = vmatprep.subr.mxu0 0.0
        %1953 = vmatpush1.msra.mxu0 0.0
        %1954 = vmatprep.subr.mxu0 0.0
        %1955 = vmatpush1.msra.mxu0 0.0
        %1956 = vmatprep.subr.mxu0 0.0
        %1957 = vmatpush1.msra.mxu0 0.0
        %1958 = vmatprep.subr.mxu0 0.0
        %1959 = vmatpush1.msra.mxu0 0.0
        %1960 = vmatprep.subr.mxu0 0.0
        %1961 = vmatpush1.msra.mxu0 0.0
        %1962 = vmatprep.subr.mxu0 0.0
        %1963 = vmatpush1.msra.mxu0 0.0
        %1964 = vmatprep.subr.mxu0 0.0
        %1965 = vmatpush1.msra.mxu0 0.0
        %1966 = vmatprep.subr.mxu0 0.0
        %1967 = vmatpush1.msra.mxu0 0.0
        %1968 = vmatprep.subr.mxu0 0.0
        %1969 = vmatpush1.msra.mxu0 0.0
        %1970 = vmatprep.subr.mxu0 0.0
        %1971 = vmatpush1.msra.mxu0 0.0
        %1972 = vmatprep.subr.mxu0 0.0
        %1973 = vmatpush1.msra.mxu0 0.0
        %1974 = vmatprep.subr.mxu0 0.0
        %1975 = vmatpush1.msra.mxu0 0.0
        %1976 = vmatprep.subr.mxu0 0.0
        %1977 = vmatpush1.msra.mxu0 0.0
        %1978 = vmatprep.subr.mxu0 0.0
        %1979 = vmatpush1.msra.mxu0 0.0
        %1980 = vmatprep.subr.mxu0 0.0
        %1981 = vmatpush1.msra.mxu0 0.0
        %1982 = vmatprep.subr.mxu0 0.0
        %1983 = vmatpush1.msra.mxu0 0.0
        %1984 = vmatprep.subr.mxu0 0.0
        %1985 = vmatpush1.msra.mxu0 0.0
        %1986 = vmatprep.subr.mxu0 0.0
        %1987 = vmatpush1.msra.mxu0 0.0
        %1988 = vmatprep.subr.mxu0 0.0
        %1989 = vmatpush1.msra.mxu0 0.0
        %1990 = vmatprep.subr.mxu0 0.0
        %1991 = vmatpush1.msra.mxu0 0.0
        %1992 = vmatprep.subr.mxu0 0.0
        %1993 = vmatpush1.msra.mxu0 0.0
        %1994 = vmatprep.subr.mxu0 0.0
        %1995 = vmatpush1.msra.mxu0 0.0
        %1996 = vmatprep.subr.mxu0 0.0
        %1997 = vmatpush1.msra.mxu0 0.0
        %1998 = vmatprep.subr.mxu0 0.0
        %1999 = vmatpush1.msra.mxu0 0.0
        %2000 = vmatprep.subr.mxu0 0.0
        %2001 = vmatpush1.msra.mxu0 0.0
        %2002 = vmatprep.subr.mxu0 0.0
        %2003 = vmatpush1.msra.mxu0 0.0
        %2004 = vmatprep.mubr.f32.mxu0 0.0
        %2005 = vmatmul.mubr.f32.gmra.mrb[0].mxu0 %v1934
        %v2006 = vpop.f32.mrb[0].mxu0
        %v2007 = vadd.f32 %v1931, %v2006
        %v2008 = vpop.f32.mrb[0].mxu0
        %2009 = vdwg.mxu0
        %v2010 = vxor.u32 %v2007, 2147483648
        %v2011 = vmul.f32 %v2010, 1.442695
        %v2012 = vpow.pop %v2011
        %v2013 = vadd.f32 %v2012, 1.0
        %v2014 = vrcp.pop %v2013
        %v2015 = vmul.f32 1.0, %v2014
        %v2016 = vlaneseq
        %v2017 = vshrl.u32 %v2016, 7
        %v2018 = vsub.s32 0, %v2017
        %v2019 = vrot.slane %v2015, %v2018
        %v2020 = vmul.f32 %v1818, %v2019
        %v2021 = vmul.f32 %v1819, %v2019
        %v2022 = vmul.f32 %v1820, %v2019
        %v2023 = vmul.f32 %v1821, %v2019
        %v2024 = vmul.f32 %v1822, %v2019
        %v2025 = vmul.f32 %v1823, %v2019
        %v2026 = vmul.f32 %v1824, %v2019
        %v2027 = vmul.f32 %v1825, %v2019
        %v2028 = vpack.c.bf16 %v2021, %v2020
        %v2029 = vpack.c.bf16 %v2023, %v2022
        %v2030 = vpack.c.bf16 %v2025, %v2024
        %v2031 = vpack.c.bf16 %v2027, %v2026
        %v2032 = vld [vmem:[%s19] sm:$0xf]
        %v2033 = vld [vmem:[%s21] sm:$0x1]
        %v2035 = vlaneseq
        %v2036 = vshrl.u32 %v2035, 7
        %v2037 = vsub.s32 0, %v2036
        %v2038 = vrot.slane %v2033, %v2037
        %v2041 = vsel %vm1288, %v2028, 0
        %v2044 = vsel %vm1288, %v2029, 0
        %v2047 = vsel %vm1288, %v2030, 0
        %v2050 = vsel %vm1288, %v2031, 0
        %vm2052 = vcmask 1043456
        %v2054 = vsel %vm2052, %v2032, 0
        %2056 = vmatprep.subr.bf16.mxu0 0
        %2057 = vmatpush1.bf16.msra.mxu0 %v2054
        %2058 = vmatprep.subr.bf16.mxu0 0
        %2059 = vmatpush1.bf16.msra.mxu0 0
        %2060 = vmatprep.subr.bf16.mxu0 0
        %2061 = vmatpush1.bf16.msra.mxu0 0
        %2062 = vmatprep.subr.bf16.mxu0 0
        %2063 = vmatpush1.bf16.msra.mxu0 0
        %2064 = vmatprep.subr.bf16.mxu0 0
        %2065 = vmatpush1.bf16.msra.mxu0 0
        %2066 = vmatprep.subr.bf16.mxu0 0
        %2067 = vmatpush1.bf16.msra.mxu0 0
        %2068 = vmatprep.subr.bf16.mxu0 0
        %2069 = vmatpush1.bf16.msra.mxu0 0
        %2070 = vmatprep.subr.bf16.mxu0 0
        %2071 = vmatpush1.bf16.msra.mxu0 0
        %2072 = vmatprep.subr.bf16.mxu0 0
        %2073 = vmatpush1.bf16.msra.mxu0 0
        %2074 = vmatprep.subr.bf16.mxu0 0
        %2075 = vmatpush1.bf16.msra.mxu0 0
        %2076 = vmatprep.subr.bf16.mxu0 0
        %2077 = vmatpush1.bf16.msra.mxu0 0
        %2078 = vmatprep.subr.bf16.mxu0 0
        %2079 = vmatpush1.bf16.msra.mxu0 0
        %2080 = vmatprep.subr.bf16.mxu0 0
        %2081 = vmatpush1.bf16.msra.mxu0 0
        %2082 = vmatprep.subr.bf16.mxu0 0
        %2083 = vmatpush1.bf16.msra.mxu0 0
        %2084 = vmatprep.subr.bf16.mxu0 0
        %2085 = vmatpush1.bf16.msra.mxu0 0
        %2086 = vmatprep.subr.bf16.mxu0 0
        %2087 = vmatpush1.bf16.msra.mxu0 0
        %2088 = vmatprep.mubr.bf16.mxu0 0
        %2089 = vmatmul.mubr.bf16.gmra.mrb[0].mxu0 %v2041
        %v2090 = vpop.f32.mrb[0].mxu0
        %v2091 = vadd.f32 %v2038, %v2090
        %v2092 = vpop.f32.mrb[0].mxu0
        %v2093 = vpop.f32.mrb[0].mxu0
        %v2094 = vadd.f32 %v2038, %v2093
        %v2095 = vpop.f32.mrb[0].mxu0
        %2096 = vmatprep.mubr.bf16.mxu0 0
        %2097 = vmatmul.mubr.bf16.gmra.mrb[0].mxu0 %v2044
        %v2098 = vpop.f32.mrb[0].mxu0
        %v2099 = vadd.f32 %v2038, %v2098
        %v2100 = vpop.f32.mrb[0].mxu0
        %v2101 = vpop.f32.mrb[0].mxu0
        %v2102 = vadd.f32 %v2038, %v2101
        %v2103 = vpop.f32.mrb[0].mxu0
        %2104 = vmatprep.mubr.bf16.mxu0 0
        %2105 = vmatmul.mubr.bf16.gmra.mrb[0].mxu0 %v2047
        %v2106 = vpop.f32.mrb[0].mxu0
        %v2107 = vadd.f32 %v2038, %v2106
        %v2108 = vpop.f32.mrb[0].mxu0
        %v2109 = vpop.f32.mrb[0].mxu0
        %v2110 = vadd.f32 %v2038, %v2109
        %v2111 = vpop.f32.mrb[0].mxu0
        %2112 = vmatprep.mubr.bf16.mxu0 0
        %2113 = vmatmul.mubr.bf16.gmra.mrb[0].mxu0 %v2050
        %v2114 = vpop.f32.mrb[0].mxu0
        %v2115 = vadd.f32 %v2038, %v2114
        %v2116 = vpop.f32.mrb[0].mxu0
        %v2117 = vpop.f32.mrb[0].mxu0
        %v2118 = vadd.f32 %v2038, %v2117
        %v2119 = vpop.f32.mrb[0].mxu0
        %2120 = vdwg.mxu0
        %v2121 = vadd.f32 %v2091, %v1280
        %v2122 = vadd.f32 %v2094, %v1281
        %v2123 = vadd.f32 %v2099, %v1282
        %v2124 = vadd.f32 %v2102, %v1283
        %v2125 = vadd.f32 %v2107, %v1284
        %v2126 = vadd.f32 %v2110, %v1285
        %v2127 = vadd.f32 %v2115, %v1286
        %v2128 = vadd.f32 %v2118, %v1287
        %v2129 = vpack.c.bf16 %v2122, %v2121
        %v2130 = vpack.c.bf16 %v2124, %v2123
        %v2131 = vpack.c.bf16 %v2126, %v2125
        %v2132 = vpack.c.bf16 %v2128, %v2127
        %v2133 = vld [vmem:[%s23] sm:$0xf]
        %v2134 = vld [vmem:[%s25] sm:$0x1]
        %v2136 = vlaneseq
        %v2137 = vshrl.u32 %v2136, 7
        %v2138 = vsub.s32 0, %v2137
        %v2139 = vrot.slane %v2134, %v2138
        %v2142 = vsel %vm1288, %v2129, 0
        %v2145 = vsel %vm1288, %v2130, 0
        %v2148 = vsel %vm1288, %v2131, 0
        %v2151 = vsel %vm1288, %v2132, 0
        %v2154 = vsel %vm2052, %v2133, 0
        %2156 = vmatprep.subr.bf16.mxu0 0
        %2157 = vmatpush1.bf16.msra.mxu0 %v2154
        %2158 = vmatprep.subr.bf16.mxu0 0
        %2159 = vmatpush1.bf16.msra.mxu0 0
        %2160 = vmatprep.subr.bf16.mxu0 0
        %2161 = vmatpush1.bf16.msra.mxu0 0
        %2162 = vmatprep.subr.bf16.mxu0 0
        %2163 = vmatpush1.bf16.msra.mxu0 0
        %2164 = vmatprep.subr.bf16.mxu0 0
        %2165 = vmatpush1.bf16.msra.mxu0 0
        %2166 = vmatprep.subr.bf16.mxu0 0
        %2167 = vmatpush1.bf16.msra.mxu0 0
        %2168 = vmatprep.subr.bf16.mxu0 0
        %2169 = vmatpush1.bf16.msra.mxu0 0
        %2170 = vmatprep.subr.bf16.mxu0 0
        %2171 = vmatpush1.bf16.msra.mxu0 0
        %2172 = vmatprep.subr.bf16.mxu0 0
        %2173 = vmatpush1.bf16.msra.mxu0 0
        %2174 = vmatprep.subr.bf16.mxu0 0
        %2175 = vmatpush1.bf16.msra.mxu0 0
        %2176 = vmatprep.subr.bf16.mxu0 0
        %2177 = vmatpush1.bf16.msra.mxu0 0
        %2178 = vmatprep.subr.bf16.mxu0 0
        %2179 = vmatpush1.bf16.msra.mxu0 0
        %2180 = vmatprep.subr.bf16.mxu0 0
        %2181 = vmatpush1.bf16.msra.mxu0 0
        %2182 = vmatprep.subr.bf16.mxu0 0
        %2183 = vmatpush1.bf16.msra.mxu0 0
        %2184 = vmatprep.subr.bf16.mxu0 0
        %2185 = vmatpush1.bf16.msra.mxu0 0
        %2186 = vmatprep.subr.bf16.mxu0 0
        %2187 = vmatpush1.bf16.msra.mxu0 0
        %2188 = vmatprep.mubr.bf16.mxu0 0
        %2189 = vmatmul.mubr.bf16.gmra.mrb[0].mxu0 %v2142
        %v2190 = vpop.f32.mrb[0].mxu0
        %v2191 = vadd.f32 %v2139, %v2190
        %v2192 = vpop.f32.mrb[0].mxu0
        %v2193 = vpop.f32.mrb[0].mxu0
        %v2194 = vadd.f32 %v2139, %v2193
        %v2195 = vpop.f32.mrb[0].mxu0
        %2196 = vmatprep.mubr.bf16.mxu0 0
        %2197 = vmatmul.mubr.bf16.gmra.mrb[0].mxu0 %v2145
        %v2198 = vpop.f32.mrb[0].mxu0
        %v2199 = vadd.f32 %v2139, %v2198
        %v2200 = vpop.f32.mrb[0].mxu0
        %v2201 = vpop.f32.mrb[0].mxu0
        %v2202 = vadd.f32 %v2139, %v2201
        %v2203 = vpop.f32.mrb[0].mxu0
        %2204 = vmatprep.mubr.bf16.mxu0 0
        %2205 = vmatmul.mubr.bf16.gmra.mrb[0].mxu0 %v2148
        %v2206 = vpop.f32.mrb[0].mxu0
        %v2207 = vadd.f32 %v2139, %v2206
        %v2208 = vpop.f32.mrb[0].mxu0
        %v2209 = vpop.f32.mrb[0].mxu0
        %v2210 = vadd.f32 %v2139, %v2209
        %v2211 = vpop.f32.mrb[0].mxu0
        %2212 = vmatprep.mubr.bf16.mxu0 0
        %2213 = vmatmul.mubr.bf16.gmra.mrb[0].mxu0 %v2151
        %v2214 = vpop.f32.mrb[0].mxu0
        %v2215 = vadd.f32 %v2139, %v2214
        %v2216 = vpop.f32.mrb[0].mxu0
        %v2217 = vpop.f32.mrb[0].mxu0
        %v2218 = vadd.f32 %v2139, %v2217
        %v2219 = vpop.f32.mrb[0].mxu0
        %2220 = vdwg.mxu0
        %v2221 = vxor.u32 %v2191, 2147483648
        %v2222 = vxor.u32 %v2194, 2147483648
        %v2223 = vxor.u32 %v2199, 2147483648
        %v2224 = vxor.u32 %v2202, 2147483648
        %v2225 = vxor.u32 %v2207, 2147483648
        %v2226 = vxor.u32 %v2210, 2147483648
        %v2227 = vxor.u32 %v2215, 2147483648
        %v2228 = vxor.u32 %v2218, 2147483648
        %v2229 = vmul.f32 %v2221, 1.442695
        %v2230 = vpow.pop %v2229
        %v2231 = vmul.f32 %v2222, 1.442695
        %v2232 = vpow.pop %v2231
        %v2233 = vmul.f32 %v2223, 1.442695
        %v2234 = vpow.pop %v2233
        %v2235 = vmul.f32 %v2224, 1.442695
        %v2236 = vpow.pop %v2235
        %v2237 = vmul.f32 %v2225, 1.442695
        %v2238 = vpow.pop %v2237
        %v2239 = vmul.f32 %v2226, 1.442695
        %v2240 = vpow.pop %v2239
        %v2241 = vmul.f32 %v2227, 1.442695
        %v2242 = vpow.pop %v2241
        %v2243 = vmul.f32 %v2228, 1.442695
        %v2244 = vpow.pop %v2243
        %v2245 = vadd.f32 %v2230, 1.0
        %v2246 = vadd.f32 %v2232, 1.0
        %v2247 = vadd.f32 %v2234, 1.0
        %v2248 = vadd.f32 %v2236, 1.0
        %v2249 = vadd.f32 %v2238, 1.0
        %v2250 = vadd.f32 %v2240, 1.0
        %v2251 = vadd.f32 %v2242, 1.0
        %v2252 = vadd.f32 %v2244, 1.0
        %v2253 = vrcp.pop %v2245
        %v2254 = vmul.f32 1.0, %v2253
        %v2255 = vrcp.pop %v2246
        %v2256 = vmul.f32 1.0, %v2255
        %v2257 = vrcp.pop %v2247
        %v2258 = vmul.f32 1.0, %v2257
        %v2259 = vrcp.pop %v2248
        %v2260 = vmul.f32 1.0, %v2259
        %v2261 = vrcp.pop %v2249
        %v2262 = vmul.f32 1.0, %v2261
        %v2263 = vrcp.pop %v2250
        %v2264 = vmul.f32 1.0, %v2263
        %v2265 = vrcp.pop %v2251
        %v2266 = vmul.f32 1.0, %v2265
        %v2267 = vrcp.pop %v2252
        %v2268 = vmul.f32 1.0, %v2267
        %v2269 = vmul.f32 %v2191, %v2254
        %v2270 = vmul.f32 %v2194, %v2256
        %v2271 = vmul.f32 %v2199, %v2258
        %v2272 = vmul.f32 %v2202, %v2260
        %v2273 = vmul.f32 %v2207, %v2262
        %v2274 = vmul.f32 %v2210, %v2264
        %v2275 = vmul.f32 %v2215, %v2266
        %v2276 = vmul.f32 %v2218, %v2268
        %vm2277 = vcmask 130048
        %2278 = vst.msk [vmem:[#allocation3] sm:$0xff] %vm2277, %v2269
        %2279 = vst.msk [vmem:[#allocation3 + $0x8] sm:$0xff] %vm2277, %v2270
        %2280 = vst.msk [vmem:[#allocation3 + $0x10] sm:$0xff] %vm2277, %v2271
        %2281 = vst.msk [vmem:[#allocation3 + $0x18] sm:$0xff] %vm2277, %v2272
        %2282 = vst.msk [vmem:[#allocation3 + $0x20] sm:$0xff] %vm2277, %v2273
        %2283 = vst.msk [vmem:[#allocation3 + $0x28] sm:$0xff] %vm2277, %v2274
        %2284 = vst.msk [vmem:[#allocation3 + $0x30] sm:$0xff] %vm2277, %v2275
        %2285 = vst.msk [vmem:[#allocation3 + $0x38] sm:$0xff] %vm2277, %v2276
        %2286 = vst.msk [vmem:[#allocation3 + $0x40] sm:$0xff] %vm2277, 0.0
        %2287 = vst.msk [vmem:[#allocation3 + $0x48] sm:$0xff] %vm2277, 0.0
        %vm2288 = vcmask 123904
        %2289 = vst.msk [vmem:[#allocation3 + $0x50] sm:$0x3] %vm2288, 0.0
        %v2290 = vld [vmem:[%s27] sm:$0xff]
        %v2291 = vld [vmem:[%s27 + $0x8] sm:$0x1]
        %v2292 = vld [vmem:[#allocation3] sm:$0xff]
        %v2293 = vld [vmem:[#allocation3 + $0x8] sm:$0xff]
        %v2294 = vld [vmem:[#allocation3 + $0x10] sm:$0xff]
        %v2295 = vld [vmem:[#allocation3 + $0x18] sm:$0xff]
        %v2296 = vld [vmem:[#allocation3 + $0x20] sm:$0xff]
        %v2297 = vld [vmem:[#allocation3 + $0x28] sm:$0xff]
        %v2298 = vld [vmem:[#allocation3 + $0x30] sm:$0xff]
        %v2299 = vld [vmem:[#allocation3 + $0x38] sm:$0xff]
        %v2300 = vlaneseq
        %v2301 = vshrl.u32 %v2300, 7
        %v2302 = vsub.s32 0, %v2301
        %v2303 = vrot.slane %v2290, %v2302
        %v2304 = vmul.f32 %v2292, %v2303
        %v2305 = vmul.f32 %v2293, %v2303
        %v2306 = vmul.f32 %v2294, %v2303
        %v2307 = vmul.f32 %v2295, %v2303
        %v2308 = vmul.f32 %v2296, %v2303
        %v2309 = vmul.f32 %v2297, %v2303
        %v2310 = vmul.f32 %v2298, %v2303
        %v2311 = vmul.f32 %v2299, %v2303
        %v2312 = vld [vmem:[#allocation3 + $0x1] sm:$0xff]
        %v2313 = vld [vmem:[#allocation3 + $0x9] sm:$0xff]
        %v2314 = vld [vmem:[#allocation3 + $0x11] sm:$0xff]
        %v2315 = vld [vmem:[#allocation3 + $0x19] sm:$0xff]
        %v2316 = vld [vmem:[#allocation3 + $0x21] sm:$0xff]
        %v2317 = vld [vmem:[#allocation3 + $0x29] sm:$0xff]
        %v2318 = vld [vmem:[#allocation3 + $0x31] sm:$0xff]
        %v2319 = vld [vmem:[#allocation3 + $0x39] sm:$0xff]
        %v2320 = vlaneseq
        %v2321 = vshrl.u32 %v2320, 7
        %v2322 = vsub.s32 1, %v2321
        %v2323 = vrot.slane %v2290, %v2322
        %v2324 = vmul.f32 %v2312, %v2323
        %v2325 = vmul.f32 %v2313, %v2323
        %v2326 = vmul.f32 %v2314, %v2323
        %v2327 = vmul.f32 %v2315, %v2323
        %v2328 = vmul.f32 %v2316, %v2323
        %v2329 = vmul.f32 %v2317, %v2323
        %v2330 = vmul.f32 %v2318, %v2323
        %v2331 = vmul.f32 %v2319, %v2323
        %v2332 = vsel %vm1573, %v2324, 0.0
        %v2333 = vsel %vm1574, %v2325, 0.0
        %v2334 = vsel %vm1575, %v2326, 0.0
        %v2335 = vsel %vm1576, %v2327, 0.0
        %v2336 = vsel %vm1577, %v2328, 0.0
        %v2337 = vsel %vm1578, %v2329, 0.0
        %v2338 = vsel %vm1579, %v2330, 0.0
        %v2339 = vsel %vm1580, %v2331, 0.0
        %v2340 = vadd.f32 %v2304, %v2332
        %v2341 = vadd.f32 %v2305, %v2333
        %v2342 = vadd.f32 %v2306, %v2334
        %v2343 = vadd.f32 %v2307, %v2335
        %v2344 = vadd.f32 %v2308, %v2336
        %v2345 = vadd.f32 %v2309, %v2337
        %v2346 = vadd.f32 %v2310, %v2338
        %v2347 = vadd.f32 %v2311, %v2339
        %v2348 = vld [vmem:[#allocation3 + $0x2] sm:$0xff]
        %v2349 = vld [vmem:[#allocation3 + $0xa] sm:$0xff]
        %v2350 = vld [vmem:[#allocation3 + $0x12] sm:$0xff]
        %v2351 = vld [vmem:[#allocation3 + $0x1a] sm:$0xff]
        %v2352 = vld [vmem:[#allocation3 + $0x22] sm:$0xff]
        %v2353 = vld [vmem:[#allocation3 + $0x2a] sm:$0xff]
        %v2354 = vld [vmem:[#allocation3 + $0x32] sm:$0xff]
        %v2355 = vld [vmem:[#allocation3 + $0x3a] sm:$0xff]
        %v2356 = vlaneseq
        %v2357 = vshrl.u32 %v2356, 7
        %v2358 = vsub.s32 2, %v2357
        %v2359 = vrot.slane %v2290, %v2358
        %v2360 = vmul.f32 %v2348, %v2359
        %v2361 = vmul.f32 %v2349, %v2359
        %v2362 = vmul.f32 %v2350, %v2359
        %v2363 = vmul.f32 %v2351, %v2359
        %v2364 = vmul.f32 %v2352, %v2359
        %v2365 = vmul.f32 %v2353, %v2359
        %v2366 = vmul.f32 %v2354, %v2359
        %v2367 = vmul.f32 %v2355, %v2359
        %v2368 = vadd.s32 %v1401, 2
        %v2369 = vadd.s32 %v1402, 2
        %v2370 = vadd.s32 %v1403, 2
        %v2371 = vadd.s32 %v1404, 2
        %v2372 = vadd.s32 %v1405, 2
        %v2373 = vadd.s32 %v1406, 2
        %v2374 = vadd.s32 %v1407, 2
        %v2375 = vadd.s32 %v1408, 2
        %vm2376 = vcmp.ge.s32.totalorder %v2368, 0
        %vm2377 = vcmp.ge.s32.totalorder %v2369, 0
        %vm2378 = vcmp.ge.s32.totalorder %v2370, 0
        %vm2379 = vcmp.ge.s32.totalorder %v2371, 0
        %vm2380 = vcmp.ge.s32.totalorder %v2372, 0
        %vm2381 = vcmp.ge.s32.totalorder %v2373, 0
        %vm2382 = vcmp.ge.s32.totalorder %v2374, 0
        %vm2383 = vcmp.ge.s32.totalorder %v2375, 0
        %vm2384 = vcmp.lt.s32.totalorder %v2368, 8
        %vm2385 = vcmp.lt.s32.totalorder %v2369, 8
        %vm2386 = vcmp.lt.s32.totalorder %v2370, 8
        %vm2387 = vcmp.lt.s32.totalorder %v2371, 8
        %vm2388 = vcmp.lt.s32.totalorder %v2372, 8
        %vm2389 = vcmp.lt.s32.totalorder %v2373, 8
        %vm2390 = vcmp.lt.s32.totalorder %v2374, 8
        %vm2391 = vcmp.lt.s32.totalorder %v2375, 8
        %vm2392 = vmand %vm2376, %vm2384
        %vm2393 = vmand %vm2377, %vm2385
        %vm2394 = vmand %vm2378, %vm2386
        %vm2395 = vmand %vm2379, %vm2387
        %vm2396 = vmand %vm2380, %vm2388
        %vm2397 = vmand %vm2381, %vm2389
        %vm2398 = vmand %vm2382, %vm2390
        %vm2399 = vmand %vm2383, %vm2391
        %v2400 = vsel %vm2392, 1, 0
        %v2401 = vsel %vm2393, 1, 0
        %v2402 = vsel %vm2394, 1, 0
        %v2403 = vsel %vm2395, 1, 0
        %v2404 = vsel %vm2396, 1, 0
        %v2405 = vsel %vm2397, 1, 0
        %v2406 = vsel %vm2398, 1, 0
        %v2407 = vsel %vm2399, 1, 0
        %vm2408 = vcmp.eq.s32.totalorder %v2400, 1
        %vm2409 = vcmp.eq.s32.totalorder %v2401, 1
        %vm2410 = vcmp.eq.s32.totalorder %v2402, 1
        %vm2411 = vcmp.eq.s32.totalorder %v2403, 1
        %vm2412 = vcmp.eq.s32.totalorder %v2404, 1
        %vm2413 = vcmp.eq.s32.totalorder %v2405, 1
        %vm2414 = vcmp.eq.s32.totalorder %v2406, 1
        %vm2415 = vcmp.eq.s32.totalorder %v2407, 1
        %v2416 = vsel %vm2408, %v2360, 0.0
        %v2417 = vsel %vm2409, %v2361, 0.0
        %v2418 = vsel %vm2410, %v2362, 0.0
        %v2419 = vsel %vm2411, %v2363, 0.0
        %v2420 = vsel %vm2412, %v2364, 0.0
        %v2421 = vsel %vm2413, %v2365, 0.0
        %v2422 = vsel %vm2414, %v2366, 0.0
        %v2423 = vsel %vm2415, %v2367, 0.0
        %v2424 = vadd.f32 %v2340, %v2416
        %v2425 = vadd.f32 %v2341, %v2417
        %v2426 = vadd.f32 %v2342, %v2418
        %v2427 = vadd.f32 %v2343, %v2419
        %v2428 = vadd.f32 %v2344, %v2420
        %v2429 = vadd.f32 %v2345, %v2421
        %v2430 = vadd.f32 %v2346, %v2422
        %v2431 = vadd.f32 %v2347, %v2423
        %v2432 = vld [vmem:[#allocation3 + $0x40] sm:$0xff]
        %v2433 = vlaneseq
        %v2434 = vshrl.u32 %v2433, 7
        %v2435 = vsub.s32 3, %v2434
        %v2436 = vrot.slane %v2290, %v2435
        %v2437 = vmul.f32 %v2293, %v2436
        %v2438 = vmul.f32 %v2294, %v2436
        %v2439 = vmul.f32 %v2295, %v2436
        %v2440 = vmul.f32 %v2296, %v2436
        %v2441 = vmul.f32 %v2297, %v2436
        %v2442 = vmul.f32 %v2298, %v2436
        %v2443 = vmul.f32 %v2299, %v2436
        %v2444 = vmul.f32 %v2432, %v2436
        %v2445 = vadd.f32 %v2424, %v2437
        %v2446 = vadd.f32 %v2425, %v2438
        %v2447 = vadd.f32 %v2426, %v2439
        %v2448 = vadd.f32 %v2427, %v2440
        %v2449 = vadd.f32 %v2428, %v2441
        %v2450 = vadd.f32 %v2429, %v2442
        %v2451 = vadd.f32 %v2430, %v2443
        %v2452 = vadd.f32 %v2431, %v2444
        %v2453 = vld [vmem:[#allocation3 + $0x41] sm:$0xff]
        %v2454 = vlaneseq
        %v2455 = vshrl.u32 %v2454, 7
        %v2456 = vsub.s32 4, %v2455
        %v2457 = vrot.slane %v2290, %v2456
        %v2458 = vmul.f32 %v2313, %v2457
        %v2459 = vmul.f32 %v2314, %v2457
        %v2460 = vmul.f32 %v2315, %v2457
        %v2461 = vmul.f32 %v2316, %v2457
        %v2462 = vmul.f32 %v2317, %v2457
        %v2463 = vmul.f32 %v2318, %v2457
        %v2464 = vmul.f32 %v2319, %v2457
        %v2465 = vmul.f32 %v2453, %v2457
        %v2466 = vsel %vm1573, %v2458, 0.0
        %v2467 = vsel %vm1574, %v2459, 0.0
        %v2468 = vsel %vm1575, %v2460, 0.0
        %v2469 = vsel %vm1576, %v2461, 0.0
        %v2470 = vsel %vm1577, %v2462, 0.0
        %v2471 = vsel %vm1578, %v2463, 0.0
        %v2472 = vsel %vm1579, %v2464, 0.0
        %v2473 = vsel %vm1580, %v2465, 0.0
        %v2474 = vadd.f32 %v2445, %v2466
        %v2475 = vadd.f32 %v2446, %v2467
        %v2476 = vadd.f32 %v2447, %v2468
        %v2477 = vadd.f32 %v2448, %v2469
        %v2478 = vadd.f32 %v2449, %v2470
        %v2479 = vadd.f32 %v2450, %v2471
        %v2480 = vadd.f32 %v2451, %v2472
        %v2481 = vadd.f32 %v2452, %v2473
        %v2482 = vld [vmem:[#allocation3 + $0x42] sm:$0xff]
        %v2483 = vlaneseq
        %v2484 = vshrl.u32 %v2483, 7
        %v2485 = vsub.s32 5, %v2484
        %v2486 = vrot.slane %v2290, %v2485
        %v2487 = vmul.f32 %v2349, %v2486
        %v2488 = vmul.f32 %v2350, %v2486
        %v2489 = vmul.f32 %v2351, %v2486
        %v2490 = vmul.f32 %v2352, %v2486
        %v2491 = vmul.f32 %v2353, %v2486
        %v2492 = vmul.f32 %v2354, %v2486
        %v2493 = vmul.f32 %v2355, %v2486
        %v2494 = vmul.f32 %v2482, %v2486
        %v2495 = vsel %vm2408, %v2487, 0.0
        %v2496 = vsel %vm2409, %v2488, 0.0
        %v2497 = vsel %vm2410, %v2489, 0.0
        %v2498 = vsel %vm2411, %v2490, 0.0
        %v2499 = vsel %vm2412, %v2491, 0.0
        %v2500 = vsel %vm2413, %v2492, 0.0
        %v2501 = vsel %vm2414, %v2493, 0.0
        %v2502 = vsel %vm2415, %v2494, 0.0
        %v2503 = vadd.f32 %v2474, %v2495
        %v2504 = vadd.f32 %v2475, %v2496
        %v2505 = vadd.f32 %v2476, %v2497
        %v2506 = vadd.f32 %v2477, %v2498
        %v2507 = vadd.f32 %v2478, %v2499
        %v2508 = vadd.f32 %v2479, %v2500
        %v2509 = vadd.f32 %v2480, %v2501
        %v2510 = vadd.f32 %v2481, %v2502
        %v2511 = vld [vmem:[#allocation3 + $0x48] sm:$0xff]
        %v2512 = vlaneseq
        %v2513 = vshrl.u32 %v2512, 7
        %v2514 = vsub.s32 6, %v2513
        %v2515 = vrot.slane %v2290, %v2514
        %v2516 = vmul.f32 %v2294, %v2515
        %v2517 = vmul.f32 %v2295, %v2515
        %v2518 = vmul.f32 %v2296, %v2515
        %v2519 = vmul.f32 %v2297, %v2515
        %v2520 = vmul.f32 %v2298, %v2515
        %v2521 = vmul.f32 %v2299, %v2515
        %v2522 = vmul.f32 %v2432, %v2515
        %v2523 = vmul.f32 %v2511, %v2515
        %v2524 = vadd.f32 %v2503, %v2516
        %v2525 = vadd.f32 %v2504, %v2517
        %v2526 = vadd.f32 %v2505, %v2518
        %v2527 = vadd.f32 %v2506, %v2519
        %v2528 = vadd.f32 %v2507, %v2520
        %v2529 = vadd.f32 %v2508, %v2521
        %v2530 = vadd.f32 %v2509, %v2522
        %v2531 = vadd.f32 %v2510, %v2523
        %v2532 = vld [vmem:[#allocation3 + $0x49] sm:$0xff]
        %v2533 = vlaneseq
        %v2534 = vshrl.u32 %v2533, 7
        %v2535 = vsub.s32 7, %v2534
        %v2536 = vrot.slane %v2290, %v2535
        %v2537 = vmul.f32 %v2314, %v2536
        %v2538 = vmul.f32 %v2315, %v2536
        %v2539 = vmul.f32 %v2316, %v2536
        %v2540 = vmul.f32 %v2317, %v2536
        %v2541 = vmul.f32 %v2318, %v2536
        %v2542 = vmul.f32 %v2319, %v2536
        %v2543 = vmul.f32 %v2453, %v2536
        %v2544 = vmul.f32 %v2532, %v2536
        %v2545 = vsel %vm1573, %v2537, 0.0
        %v2546 = vsel %vm1574, %v2538, 0.0
        %v2547 = vsel %vm1575, %v2539, 0.0
        %v2548 = vsel %vm1576, %v2540, 0.0
        %v2549 = vsel %vm1577, %v2541, 0.0
        %v2550 = vsel %vm1578, %v2542, 0.0
        %v2551 = vsel %vm1579, %v2543, 0.0
        %v2552 = vsel %vm1580, %v2544, 0.0
        %v2553 = vadd.f32 %v2524, %v2545
        %v2554 = vadd.f32 %v2525, %v2546
        %v2555 = vadd.f32 %v2526, %v2547
        %v2556 = vadd.f32 %v2527, %v2548
        %v2557 = vadd.f32 %v2528, %v2549
        %v2558 = vadd.f32 %v2529, %v2550
        %v2559 = vadd.f32 %v2530, %v2551
        %v2560 = vadd.f32 %v2531, %v2552
        %v2561 = vld [vmem:[#allocation3 + $0x4a] sm:$0xff]
        %v2562 = vlaneseq
        %v2563 = vshrl.u32 %v2562, 7
        %v2564 = vsub.s32 0, %v2563
        %v2565 = vrot.slane %v2291, %v2564
        %v2566 = vmul.f32 %v2350, %v2565
        %v2567 = vmul.f32 %v2351, %v2565
        %v2568 = vmul.f32 %v2352, %v2565
        %v2569 = vmul.f32 %v2353, %v2565
        %v2570 = vmul.f32 %v2354, %v2565
        %v2571 = vmul.f32 %v2355, %v2565
        %v2572 = vmul.f32 %v2482, %v2565
        %v2573 = vmul.f32 %v2561, %v2565
        %v2574 = vsel %vm2408, %v2566, 0.0
        %v2575 = vsel %vm2409, %v2567, 0.0
        %v2576 = vsel %vm2410, %v2568, 0.0
        %v2577 = vsel %vm2411, %v2569, 0.0
        %v2578 = vsel %vm2412, %v2570, 0.0
        %v2579 = vsel %vm2413, %v2571, 0.0
        %v2580 = vsel %vm2414, %v2572, 0.0
        %v2581 = vsel %vm2415, %v2573, 0.0
        %v2582 = vadd.f32 %v2553, %v2574
        %v2583 = vadd.f32 %v2554, %v2575
        %v2584 = vadd.f32 %v2555, %v2576
        %v2585 = vadd.f32 %v2556, %v2577
        %v2586 = vadd.f32 %v2557, %v2578
        %v2587 = vadd.f32 %v2558, %v2579
        %v2588 = vadd.f32 %v2559, %v2580
        %v2589 = vadd.f32 %v2560, %v2581
        %v2590 = vld [vmem:[%s31] sm:$0xff]
        %v2591 = vld [vmem:[%s31 + $0x8] sm:$0xff]
        %v2592 = vld [vmem:[%s29] sm:$0x1]
        %v2594 = vlaneseq
        %v2595 = vshrl.u32 %v2594, 7
        %v2596 = vsub.s32 0, %v2595
        %v2597 = vrot.slane %v2592, %v2596
        %vm2599 = vcmask 523264
        %v2601 = vsel %vm2599, %v2590, 0
        %v2604 = vsel %vm2599, %v2591, 0
        %2606 = vmatprep.subr.mxu0 0.0
        %2607 = vmatpush1.msra.mxu0 %v2582
        %2608 = vmatprep.subr.mxu0 0.0
        %2609 = vmatpush1.msra.mxu0 %v2583
        %2610 = vmatprep.subr.mxu0 0.0
        %2611 = vmatpush1.msra.mxu0 %v2584
        %2612 = vmatprep.subr.mxu0 0.0
        %2613 = vmatpush1.msra.mxu0 %v2585
        %2614 = vmatprep.subr.mxu0 0.0
        %2615 = vmatpush1.msra.mxu0 %v2586
        %2616 = vmatprep.subr.mxu0 0.0
        %2617 = vmatpush1.msra.mxu0 %v2587
        %2618 = vmatprep.subr.mxu0 0.0
        %2619 = vmatpush1.msra.mxu0 %v2588
        %2620 = vmatprep.subr.mxu0 0.0
        %2621 = vmatpush1.msra.mxu0 %v2589
        %2622 = vmatprep.subr.mxu0 0.0
        %2623 = vmatpush1.msra.mxu0 0.0
        %2624 = vmatprep.subr.mxu0 0.0
        %2625 = vmatpush1.msra.mxu0 0.0
        %2626 = vmatprep.subr.mxu0 0.0
        %2627 = vmatpush1.msra.mxu0 0.0
        %2628 = vmatprep.subr.mxu0 0.0
        %2629 = vmatpush1.msra.mxu0 0.0
        %2630 = vmatprep.subr.mxu0 0.0
        %2631 = vmatpush1.msra.mxu0 0.0
        %2632 = vmatprep.subr.mxu0 0.0
        %2633 = vmatpush1.msra.mxu0 0.0
        %2634 = vmatprep.subr.mxu0 0.0
        %2635 = vmatpush1.msra.mxu0 0.0
        %2636 = vmatprep.subr.mxu0 0.0
        %2637 = vmatpush1.msra.mxu0 0.0
        %2638 = vmatprep.subr.mxu0 0.0
        %2639 = vmatpush1.msra.mxu0 0.0
        %2640 = vmatprep.subr.mxu0 0.0
        %2641 = vmatpush1.msra.mxu0 0.0
        %2642 = vmatprep.subr.mxu0 0.0
        %2643 = vmatpush1.msra.mxu0 0.0
        %2644 = vmatprep.subr.mxu0 0.0
        %2645 = vmatpush1.msra.mxu0 0.0
        %2646 = vmatprep.subr.mxu0 0.0
        %2647 = vmatpush1.msra.mxu0 0.0
        %2648 = vmatprep.subr.mxu0 0.0
        %2649 = vmatpush1.msra.mxu0 0.0
        %2650 = vmatprep.subr.mxu0 0.0
        %2651 = vmatpush1.msra.mxu0 0.0
        %2652 = vmatprep.subr.mxu0 0.0
        %2653 = vmatpush1.msra.mxu0 0.0
        %2654 = vmatprep.subr.mxu0 0.0
        %2655 = vmatpush1.msra.mxu0 0.0
        %2656 = vmatprep.subr.mxu0 0.0
        %2657 = vmatpush1.msra.mxu0 0.0
        %2658 = vmatprep.subr.mxu0 0.0
        %2659 = vmatpush1.msra.mxu0 0.0
        %2660 = vmatprep.subr.mxu0 0.0
        %2661 = vmatpush1.msra.mxu0 0.0
        %2662 = vmatprep.subr.mxu0 0.0
        %2663 = vmatpush1.msra.mxu0 0.0
        %2664 = vmatprep.subr.mxu0 0.0
        %2665 = vmatpush1.msra.mxu0 0.0
        %2666 = vmatprep.subr.mxu0 0.0
        %2667 = vmatpush1.msra.mxu0 0.0
        %2668 = vmatprep.subr.mxu0 0.0
        %2669 = vmatpush1.msra.mxu0 0.0
        %2670 = vmatprep.mubr.f32.mxu0 0.0
        %2671 = vmatmul.mubr.f32.gmra.mrb[0].mxu0 %v2601
        %v2672 = vpop.f32.mrb[0].mxu0
        %v2673 = vadd.f32 %v2597, %v2672
        %v2674 = vpop.f32.mrb[0].mxu0
        %2675 = vmatprep.mubr.f32.mxu0 0.0
        %2676 = vmatmul.mubr.f32.gmra.mrb[0].mxu0 %v2604
        %v2677 = vpop.f32.mrb[0].mxu0
        %v2678 = vadd.f32 %v2597, %v2677
        %v2679 = vpop.f32.mrb[0].mxu0
        %2680 = vdwg.mxu0
        %v2681 = vxor.u32 %v2673, 2147483648
        %v2682 = vxor.u32 %v2678, 2147483648
        %v2683 = vmul.f32 %v2681, 1.442695
        %v2684 = vpow.pop %v2683
        %v2685 = vmul.f32 %v2682, 1.442695
        %v2686 = vpow.pop %v2685
        %v2687 = vadd.f32 %v2684, 1.0
        %v2688 = vadd.f32 %v2686, 1.0
        %v2689 = vrcp.pop %v2687
        %v2690 = vmul.f32 1.0, %v2689
        %v2691 = vrcp.pop %v2688
        %v2692 = vmul.f32 1.0, %v2691
        %v2693 = vmul.f32 %v2673, %v2690
        %v2694 = vmul.f32 %v2678, %v2692
        %v2695 = vsel %vm2277, %v2693, 0.0
        %v2696 = vsel %vm2277, %v2694, 0.0
        %v2697 = vadd.f32 %v2695, %v2696
        %v2698 = vrot.slane %v2697, 4
        %v2699 = vadd.f32 %v2697, %v2698
        %v2700 = vrot.slane %v2699, 2
        %v2701 = vadd.f32 %v2699, %v2700
        %v2702 = vrot.slane %v2701, 1
        %v2703 = vadd.f32 %v2701, %v2702
        %v2704 = vmul.f32 %v2703, 0.0625
        %v2705 = vld [vmem:[%s33] sm:$0xff]
        %v2706 = vld [vmem:[%s33 + $0x8] sm:$0xff]
        %v2707 = vld [vmem:[%s35] sm:$0x1]
        %v2709 = vsel %vm2277, %v2704, 0
        %2711 = vmatprep.subr.mxu0 0.0
        %2712 = vmatpush1.msra.mxu0 %v2705
        %2713 = vmatprep.subr.mxu0 0.0
        %2714 = vmatpush1.msra.mxu0 %v2706
        %2715 = vmatprep.subr.mxu0 0.0
        %2716 = vmatpush1.msra.mxu0 0.0
        %2717 = vmatprep.subr.mxu0 0.0
        %2718 = vmatpush1.msra.mxu0 0.0
        %2719 = vmatprep.subr.mxu0 0.0
        %2720 = vmatpush1.msra.mxu0 0.0
        %2721 = vmatprep.subr.mxu0 0.0
        %2722 = vmatpush1.msra.mxu0 0.0
        %2723 = vmatprep.subr.mxu0 0.0
        %2724 = vmatpush1.msra.mxu0 0.0
        %2725 = vmatprep.subr.mxu0 0.0
        %2726 = vmatpush1.msra.mxu0 0.0
        %2727 = vmatprep.subr.mxu0 0.0
        %2728 = vmatpush1.msra.mxu0 0.0
        %2729 = vmatprep.subr.mxu0 0.0
        %2730 = vmatpush1.msra.mxu0 0.0
        %2731 = vmatprep.subr.mxu0 0.0
        %2732 = vmatpush1.msra.mxu0 0.0
        %2733 = vmatprep.subr.mxu0 0.0
        %2734 = vmatpush1.msra.mxu0 0.0
        %2735 = vmatprep.subr.mxu0 0.0
        %2736 = vmatpush1.msra.mxu0 0.0
        %2737 = vmatprep.subr.mxu0 0.0
        %2738 = vmatpush1.msra.mxu0 0.0
        %2739 = vmatprep.subr.mxu0 0.0
        %2740 = vmatpush1.msra.mxu0 0.0
        %2741 = vmatprep.subr.mxu0 0.0
        %2742 = vmatpush1.msra.mxu0 0.0
        %2743 = vmatprep.subr.mxu0 0.0
        %2744 = vmatpush1.msra.mxu0 0.0
        %2745 = vmatprep.subr.mxu0 0.0
        %2746 = vmatpush1.msra.mxu0 0.0
        %2747 = vmatprep.subr.mxu0 0.0
        %2748 = vmatpush1.msra.mxu0 0.0
        %2749 = vmatprep.subr.mxu0 0.0
        %2750 = vmatpush1.msra.mxu0 0.0
        %2751 = vmatprep.subr.mxu0 0.0
        %2752 = vmatpush1.msra.mxu0 0.0
        %2753 = vmatprep.subr.mxu0 0.0
        %2754 = vmatpush1.msra.mxu0 0.0
        %2755 = vmatprep.subr.mxu0 0.0
        %2756 = vmatpush1.msra.mxu0 0.0
        %2757 = vmatprep.subr.mxu0 0.0
        %2758 = vmatpush1.msra.mxu0 0.0
        %2759 = vmatprep.subr.mxu0 0.0
        %2760 = vmatpush1.msra.mxu0 0.0
        %2761 = vmatprep.subr.mxu0 0.0
        %2762 = vmatpush1.msra.mxu0 0.0
        %2763 = vmatprep.subr.mxu0 0.0
        %2764 = vmatpush1.msra.mxu0 0.0
        %2765 = vmatprep.subr.mxu0 0.0
        %2766 = vmatpush1.msra.mxu0 0.0
        %2767 = vmatprep.subr.mxu0 0.0
        %2768 = vmatpush1.msra.mxu0 0.0
        %2769 = vmatprep.subr.mxu0 0.0
        %2770 = vmatpush1.msra.mxu0 0.0
        %2771 = vmatprep.subr.mxu0 0.0
        %2772 = vmatpush1.msra.mxu0 0.0
        %2773 = vmatprep.subr.mxu0 0.0
        %2774 = vmatpush1.msra.mxu0 0.0
        %2775 = vmatprep.mubr.f32.mxu0 0.0
        %2776 = vmatmul.mubr.f32.gmra.mrb[0].mxu0 %v2709
        %v2777 = vpop.f32.mrb[0].mxu0
        %v2778 = vadd.f32 %v2707, %v2777
        %v2779 = vpop.f32.mrb[0].mxu0
        %2780 = vdwg.mxu0
        %v2781 = vxor.u32 %v2778, 2147483648
        %v2782 = vmul.f32 %v2781, 1.442695
        %v2783 = vpow.pop %v2782
        %v2784 = vadd.f32 %v2783, 1.0
        %v2785 = vrcp.pop %v2784
        %v2786 = vmul.f32 1.0, %v2785
        %v2787 = vmul.f32 %v2778, %v2786
        %v2788 = vld [vmem:[%s37] sm:$0x3]
        %v2789 = vld [vmem:[%s39] sm:$0x1]
        %v2791 = vsel %vm1932, %v2787, 0
        %v2794 = vsel %vm1936, %v2788, 0
        %2796 = vmatprep.subr.mxu0 0.0
        %2797 = vmatpush1.msra.mxu0 %v2794
        %2798 = vmatprep.subr.mxu0 0.0
        %2799 = vmatpush1.msra.mxu0 0.0
        %2800 = vmatprep.subr.mxu0 0.0
        %2801 = vmatpush1.msra.mxu0 0.0
        %2802 = vmatprep.subr.mxu0 0.0
        %2803 = vmatpush1.msra.mxu0 0.0
        %2804 = vmatprep.subr.mxu0 0.0
        %2805 = vmatpush1.msra.mxu0 0.0
        %2806 = vmatprep.subr.mxu0 0.0
        %2807 = vmatpush1.msra.mxu0 0.0
        %2808 = vmatprep.subr.mxu0 0.0
        %2809 = vmatpush1.msra.mxu0 0.0
        %2810 = vmatprep.subr.mxu0 0.0
        %2811 = vmatpush1.msra.mxu0 0.0
        %2812 = vmatprep.subr.mxu0 0.0
        %2813 = vmatpush1.msra.mxu0 0.0
        %2814 = vmatprep.subr.mxu0 0.0
        %2815 = vmatpush1.msra.mxu0 0.0
        %2816 = vmatprep.subr.mxu0 0.0
        %2817 = vmatpush1.msra.mxu0 0.0
        %2818 = vmatprep.subr.mxu0 0.0
        %2819 = vmatpush1.msra.mxu0 0.0
        %2820 = vmatprep.subr.mxu0 0.0
        %2821 = vmatpush1.msra.mxu0 0.0
        %2822 = vmatprep.subr.mxu0 0.0
        %2823 = vmatpush1.msra.mxu0 0.0
        %2824 = vmatprep.subr.mxu0 0.0
        %2825 = vmatpush1.msra.mxu0 0.0
        %2826 = vmatprep.subr.mxu0 0.0
        %2827 = vmatpush1.msra.mxu0 0.0
        %2828 = vmatprep.subr.mxu0 0.0
        %2829 = vmatpush1.msra.mxu0 0.0
        %2830 = vmatprep.subr.mxu0 0.0
        %2831 = vmatpush1.msra.mxu0 0.0
        %2832 = vmatprep.subr.mxu0 0.0
        %2833 = vmatpush1.msra.mxu0 0.0
        %2834 = vmatprep.subr.mxu0 0.0
        %2835 = vmatpush1.msra.mxu0 0.0
        %2836 = vmatprep.subr.mxu0 0.0
        %2837 = vmatpush1.msra.mxu0 0.0
        %2838 = vmatprep.subr.mxu0 0.0
        %2839 = vmatpush1.msra.mxu0 0.0
        %2840 = vmatprep.subr.mxu0 0.0
        %2841 = vmatpush1.msra.mxu0 0.0
        %2842 = vmatprep.subr.mxu0 0.0
        %2843 = vmatpush1.msra.mxu0 0.0
        %2844 = vmatprep.subr.mxu0 0.0
        %2845 = vmatpush1.msra.mxu0 0.0
        %2846 = vmatprep.subr.mxu0 0.0
        %2847 = vmatpush1.msra.mxu0 0.0
        %2848 = vmatprep.subr.mxu0 0.0
        %2849 = vmatpush1.msra.mxu0 0.0
        %2850 = vmatprep.subr.mxu0 0.0
        %2851 = vmatpush1.msra.mxu0 0.0
        %2852 = vmatprep.subr.mxu0 0.0
        %2853 = vmatpush1.msra.mxu0 0.0
        %2854 = vmatprep.subr.mxu0 0.0
        %2855 = vmatpush1.msra.mxu0 0.0
        %2856 = vmatprep.subr.mxu0 0.0
        %2857 = vmatpush1.msra.mxu0 0.0
        %2858 = vmatprep.subr.mxu0 0.0
        %2859 = vmatpush1.msra.mxu0 0.0
        %2860 = vmatprep.mubr.f32.mxu0 0.0
        %2861 = vmatmul.mubr.f32.gmra.mrb[0].mxu0 %v2791
        %v2862 = vpop.f32.mrb[0].mxu0
        %v2863 = vadd.f32 %v2789, %v2862
        %v2864 = vpop.f32.mrb[0].mxu0
        %2865 = vdwg.mxu0
        %v2866 = vxor.u32 %v2863, 2147483648
        %v2867 = vmul.f32 %v2866, 1.442695
        %v2868 = vpow.pop %v2867
        %v2869 = vadd.f32 %v2868, 1.0
        %v2870 = vrcp.pop %v2869
        %v2871 = vmul.f32 1.0, %v2870
        %v2872 = vlaneseq
        %v2873 = vshrl.u32 %v2872, 7
        %v2874 = vsub.s32 0, %v2873
        %v2875 = vrot.slane %v2871, %v2874
        %v2876 = vmul.f32 %v2693, %v2875
        %v2877 = vmul.f32 %v2694, %v2875
        %v2878 = vpack.c.bf16 %v2877, %v2876
        %v2879 = vld [vmem:[%s41] sm:$0xf]
        %v2880 = vld [vmem:[%s41 + $0x4] sm:$0xf]
        %v2881 = vld [vmem:[%s43] sm:$0x1]
        %v2883 = vlaneseq
        %v2884 = vshrl.u32 %v2883, 7
        %v2885 = vsub.s32 0, %v2884
        %v2886 = vrot.slane %v2881, %v2885
        %v2890 = vunpack.c.l.b16 %v2879
        %v2891 = vunpack.c.l.b16 %v2880
        %v2892 = vpack.c.b16 %v2891, %v2890
        %v2895 = vsel %vm2277, %v2878, 0
        %2897 = vmatprep.subr.bf16.mxu0 0
        %2898 = vmatpush1.bf16.msra.mxu0 %v2892
        %2899 = vmatprep.subr.bf16.mxu0 0
        %2900 = vmatpush1.bf16.msra.mxu0 0
        %2901 = vmatprep.subr.bf16.mxu0 0
        %2902 = vmatpush1.bf16.msra.mxu0 0
        %2903 = vmatprep.subr.bf16.mxu0 0
        %2904 = vmatpush1.bf16.msra.mxu0 0
        %2905 = vmatprep.subr.bf16.mxu0 0
        %2906 = vmatpush1.bf16.msra.mxu0 0
        %2907 = vmatprep.subr.bf16.mxu0 0
        %2908 = vmatpush1.bf16.msra.mxu0 0
        %2909 = vmatprep.subr.bf16.mxu0 0
        %2910 = vmatpush1.bf16.msra.mxu0 0
        %2911 = vmatprep.subr.bf16.mxu0 0
        %2912 = vmatpush1.bf16.msra.mxu0 0
        %2913 = vmatprep.subr.bf16.mxu0 0
        %2914 = vmatpush1.bf16.msra.mxu0 0
        %2915 = vmatprep.subr.bf16.mxu0 0
        %2916 = vmatpush1.bf16.msra.mxu0 0
        %2917 = vmatprep.subr.bf16.mxu0 0
        %2918 = vmatpush1.bf16.msra.mxu0 0
        %2919 = vmatprep.subr.bf16.mxu0 0
        %2920 = vmatpush1.bf16.msra.mxu0 0
        %2921 = vmatprep.subr.bf16.mxu0 0
        %2922 = vmatpush1.bf16.msra.mxu0 0
        %2923 = vmatprep.subr.bf16.mxu0 0
        %2924 = vmatpush1.bf16.msra.mxu0 0
        %2925 = vmatprep.subr.bf16.mxu0 0
        %2926 = vmatpush1.bf16.msra.mxu0 0
        %2927 = vmatprep.subr.bf16.mxu0 0
        %2928 = vmatpush1.bf16.msra.mxu0 0
        %2929 = vmatprep.mubr.bf16.mxu0 0
        %2930 = vmatmul.mubr.bf16.gmra.mrb[0].mxu0 %v2895
        %v2931 = vpop.f32.mrb[0].mxu0
        %v2932 = vadd.f32 %v2886, %v2931
        %v2933 = vpop.f32.mrb[0].mxu0
        %v2934 = vpop.f32.mrb[0].mxu0
        %v2935 = vadd.f32 %v2886, %v2934
        %v2936 = vpop.f32.mrb[0].mxu0
        %2937 = vdwg.mxu0
        %v2938 = vpack.c.bf16 %v2935, %v2932
        %v2939 = vld [vmem:[%s45] sm:$0xf]
        %v2940 = vld [vmem:[%s45 + $0x4] sm:$0xf]
        %v2941 = vld [vmem:[%s47] sm:$0x1]
        %v2943 = vlaneseq
        %v2944 = vshrl.u32 %v2943, 7
        %v2945 = vsub.s32 0, %v2944
        %v2946 = vrot.slane %v2941, %v2945
        %v2950 = vunpack.c.l.b16 %v2939
        %v2951 = vunpack.c.l.b16 %v2940
        %v2952 = vpack.c.b16 %v2951, %v2950
        %v2955 = vsel %vm2277, %v2938, 0
        %2957 = vmatprep.subr.bf16.mxu0 0
        %2958 = vmatpush1.bf16.msra.mxu0 %v2952
        %2959 = vmatprep.subr.bf16.mxu0 0
        %2960 = vmatpush1.bf16.msra.mxu0 0
        %2961 = vmatprep.subr.bf16.mxu0 0
        %2962 = vmatpush1.bf16.msra.mxu0 0
        %2963 = vmatprep.subr.bf16.mxu0 0
        %2964 = vmatpush1.bf16.msra.mxu0 0
        %2965 = vmatprep.subr.bf16.mxu0 0
        %2966 = vmatpush1.bf16.msra.mxu0 0
        %2967 = vmatprep.subr.bf16.mxu0 0
        %2968 = vmatpush1.bf16.msra.mxu0 0
        %2969 = vmatprep.subr.bf16.mxu0 0
        %2970 = vmatpush1.bf16.msra.mxu0 0
        %2971 = vmatprep.subr.bf16.mxu0 0
        %2972 = vmatpush1.bf16.msra.mxu0 0
        %2973 = vmatprep.subr.bf16.mxu0 0
        %2974 = vmatpush1.bf16.msra.mxu0 0
        %2975 = vmatprep.subr.bf16.mxu0 0
        %2976 = vmatpush1.bf16.msra.mxu0 0
        %2977 = vmatprep.subr.bf16.mxu0 0
        %2978 = vmatpush1.bf16.msra.mxu0 0
        %2979 = vmatprep.subr.bf16.mxu0 0
        %2980 = vmatpush1.bf16.msra.mxu0 0
        %2981 = vmatprep.subr.bf16.mxu0 0
        %2982 = vmatpush1.bf16.msra.mxu0 0
        %2983 = vmatprep.subr.bf16.mxu0 0
        %2984 = vmatpush1.bf16.msra.mxu0 0
        %2985 = vmatprep.subr.bf16.mxu0 0
        %2986 = vmatpush1.bf16.msra.mxu0 0
        %2987 = vmatprep.subr.bf16.mxu0 0
        %2988 = vmatpush1.bf16.msra.mxu0 0
        %2989 = vmatprep.mubr.bf16.mxu0 0
        %2990 = vmatmul.mubr.bf16.gmra.mrb[0].mxu0 %v2955
        %v2991 = vpop.f32.mrb[0].mxu0
        %v2992 = vadd.f32 %v2946, %v2991
        %v2993 = vpop.f32.mrb[0].mxu0
        %v2994 = vpop.f32.mrb[0].mxu0
        %v2995 = vadd.f32 %v2946, %v2994
        %v2996 = vpop.f32.mrb[0].mxu0
        %2997 = vdwg.mxu0
        %v2998 = vxor.u32 %v2992, 2147483648
        %v2999 = vxor.u32 %v2995, 2147483648
        %v3000 = vmul.f32 %v2998, 1.442695
        %v3001 = vpow.pop %v3000
        %v3002 = vmul.f32 %v2999, 1.442695
        %v3003 = vpow.pop %v3002
        %v3004 = vadd.f32 %v3001, 1.0
        %v3005 = vadd.f32 %v3003, 1.0
        %v3006 = vrcp.pop %v3004
        %v3007 = vmul.f32 1.0, %v3006
        %v3008 = vrcp.pop %v3005
        %v3009 = vmul.f32 1.0, %v3008
        %v3010 = vmul.f32 %v2992, %v3007
        %v3011 = vmul.f32 %v2995, %v3009
        %vm3012 = vcmask 258048
        %3013 = vst.msk [vmem:[#allocation4] sm:$0x1f] %vm3012, 0.0
        %vm3014 = vcmask 261120
        %3015 = vst.msk [vmem:[#allocation4 + $0x5] sm:$0xff] %vm3014, %v3010
        %3016 = vst.msk [vmem:[#allocation4 + $0xd] sm:$0xff] %vm3014, %v3011
        %3017 = vst.msk [vmem:[#allocation4 + $0x15] sm:$0x1f] %vm3012, 0.0
        %v3018 = vld [vmem:[%s49] sm:$0xff]
        %v3019 = vld [vmem:[%s49 + $0x8] sm:$0x1]
        %vm3020 = vcmp.lt.s32.totalorder %v1305, 0
        %v3021 = vsub.s32 0, %v1305
        %v3022 = vsel %vm3020, %v3021, %v1305
        %v3023 = vshrl.u32 %v3022, 2
        %v3024 = vand.u32 %v3022, 3
        %v3025 = vsub.s32 0, %v3024
        %v3026 = vsel %vm3020, %v3025, %v3024
        %vm3027 = vcmp.lt.s32.totalorder %v1306, 0
        %v3028 = vsub.s32 0, %v1306
        %v3029 = vsel %vm3027, %v3028, %v1306
        %v3030 = vshrl.u32 %v3029, 2
        %v3031 = vand.u32 %v3029, 3
        %v3032 = vsub.s32 0, %v3031
        %v3033 = vsel %vm3027, %v3032, %v3031
        %vm3034 = vcmp.ne.s32.totalorder %v3026, 0
        %vm3035 = vcmp.ne.s32.totalorder %v3033, 0
        %vm3036 = vcmp.lt.s32.totalorder %v3026, 0
        %vm3037 = vcmp.lt.s32.totalorder %v3033, 0
        %vm3038 = vmand %vm3036, %vm3034
        %vm3039 = vmand %vm3037, %vm3035
        %v3040 = vadd.s32 %v3026, 4
        %v3041 = vadd.s32 %v3033, 4
        %v3042 = vsel %vm3038, %v3040, %v3026
        %v3043 = vsel %vm3039, %v3041, %v3033
        %v3044 = vld [vmem:[#allocation4] sm:$0xff]
        %v3045 = vld [vmem:[#allocation4 + $0x8] sm:$0xff]
        %v3046 = vlaneseq
        %v3047 = vshrl.u32 %v3046, 7
        %v3048 = vsub.s32 0, %v3047
        %v3049 = vrot.slane %v3018, %v3048
        %v3050 = vmul.f32 %v3044, %v3049
        %v3051 = vmul.f32 %v3045, %v3049
        %v3052 = vadd.s32 %v3042, 4294967295
        %v3053 = vadd.s32 %v3043, 4294967295
        %vm3054 = vcmp.ge.s32.totalorder %v3052, 0
        %vm3055 = vcmp.ge.s32.totalorder %v3053, 0
        %vm3056 = vcmp.lt.s32.totalorder %v3052, 4
        %vm3057 = vcmp.lt.s32.totalorder %v3053, 4
        %vm3058 = vmand %vm3054, %vm3056
        %vm3059 = vmand %vm3055, %vm3057
        %v3060 = vsel %vm3058, 1, 0
        %v3061 = vsel %vm3059, 1, 0
        %vm3062 = vcmp.eq.s32.totalorder %v3060, 1
        %vm3063 = vcmp.eq.s32.totalorder %v3061, 1
        %v3064 = vsel %vm3062, %v3050, 0.0
        %v3065 = vsel %vm3063, %v3051, 0.0
        %v3066 = vld [vmem:[#allocation4 + $0x1] sm:$0xff]
        %v3067 = vld [vmem:[#allocation4 + $0x9] sm:$0xff]
        %v3068 = vlaneseq
        %v3069 = vshrl.u32 %v3068, 7
        %v3070 = vsub.s32 1, %v3069
        %v3071 = vrot.slane %v3018, %v3070
        %v3072 = vmul.f32 %v3066, %v3071
        %v3073 = vmul.f32 %v3067, %v3071
        %v3074 = vadd.f32 %v3064, %v3072
        %v3075 = vadd.f32 %v3065, %v3073
        %v3076 = vld [vmem:[#allocation4 + $0x2] sm:$0xff]
        %v3077 = vld [vmem:[#allocation4 + $0xa] sm:$0xff]
        %v3078 = vlaneseq
        %v3079 = vshrl.u32 %v3078, 7
        %v3080 = vsub.s32 2, %v3079
        %v3081 = vrot.slane %v3018, %v3080
        %v3082 = vmul.f32 %v3076, %v3081
        %v3083 = vmul.f32 %v3077, %v3081
        %v3084 = vadd.s32 %v3042, 1
        %v3085 = vadd.s32 %v3043, 1
        %vm3086 = vcmp.ge.s32.totalorder %v3084, 0
        %vm3087 = vcmp.ge.s32.totalorder %v3085, 0
        %vm3088 = vcmp.lt.s32.totalorder %v3084, 4
        %vm3089 = vcmp.lt.s32.totalorder %v3085, 4
        %vm3090 = vmand %vm3086, %vm3088
        %vm3091 = vmand %vm3087, %vm3089
        %v3092 = vsel %vm3090, 1, 0
        %v3093 = vsel %vm3091, 1, 0
        %vm3094 = vcmp.eq.s32.totalorder %v3092, 1
        %vm3095 = vcmp.eq.s32.totalorder %v3093, 1
        %v3096 = vsel %vm3094, %v3082, 0.0
        %v3097 = vsel %vm3095, %v3083, 0.0
        %v3098 = vadd.f32 %v3074, %v3096
        %v3099 = vadd.f32 %v3075, %v3097
        %v3100 = vld [vmem:[#allocation4 + $0x4] sm:$0xff]
        %v3101 = vld [vmem:[#allocation4 + $0xc] sm:$0xff]
        %v3102 = vlaneseq
        %v3103 = vshrl.u32 %v3102, 7
        %v3104 = vsub.s32 3, %v3103
        %v3105 = vrot.slane %v3018, %v3104
        %v3106 = vmul.f32 %v3100, %v3105
        %v3107 = vmul.f32 %v3101, %v3105
        %v3108 = vsel %vm3062, %v3106, 0.0
        %v3109 = vsel %vm3063, %v3107, 0.0
        %v3110 = vadd.f32 %v3098, %v3108
        %v3111 = vadd.f32 %v3099, %v3109
        %v3112 = vld [vmem:[#allocation4 + $0x5] sm:$0xff]
        %v3113 = vld [vmem:[#allocation4 + $0xd] sm:$0xff]
        %v3114 = vlaneseq
        %v3115 = vshrl.u32 %v3114, 7
        %v3116 = vsub.s32 4, %v3115
        %v3117 = vrot.slane %v3018, %v3116
        %v3118 = vmul.f32 %v3112, %v3117
        %v3119 = vmul.f32 %v3113, %v3117
        %v3120 = vadd.f32 %v3110, %v3118
        %v3121 = vadd.f32 %v3111, %v3119
        %v3122 = vld [vmem:[#allocation4 + $0x6] sm:$0xff]
        %v3123 = vld [vmem:[#allocation4 + $0xe] sm:$0xff]
        %v3124 = vlaneseq
        %v3125 = vshrl.u32 %v3124, 7
        %v3126 = vsub.s32 5, %v3125
        %v3127 = vrot.slane %v3018, %v3126
        %v3128 = vmul.f32 %v3122, %v3127
        %v3129 = vmul.f32 %v3123, %v3127
        %v3130 = vsel %vm3094, %v3128, 0.0
        %v3131 = vsel %vm3095, %v3129, 0.0
        %v3132 = vadd.f32 %v3120, %v3130
        %v3133 = vadd.f32 %v3121, %v3131
        %v3134 = vld [vmem:[#allocation4 + $0x10] sm:$0xff]
        %v3135 = vlaneseq
        %v3136 = vshrl.u32 %v3135, 7
        %v3137 = vsub.s32 6, %v3136
        %v3138 = vrot.slane %v3018, %v3137
        %v3139 = vmul.f32 %v3045, %v3138
        %v3140 = vmul.f32 %v3134, %v3138
        %v3141 = vsel %vm3062, %v3139, 0.0
        %v3142 = vsel %vm3063, %v3140, 0.0
        %v3143 = vadd.f32 %v3132, %v3141
        %v3144 = vadd.f32 %v3133, %v3142
        %v3145 = vld [vmem:[#allocation4 + $0x11] sm:$0xff]
        %v3146 = vlaneseq
        %v3147 = vshrl.u32 %v3146, 7
        %v3148 = vsub.s32 7, %v3147
        %v3149 = vrot.slane %v3018, %v3148
        %v3150 = vmul.f32 %v3067, %v3149
        %v3151 = vmul.f32 %v3145, %v3149
        %v3152 = vadd.f32 %v3143, %v3150
        %v3153 = vadd.f32 %v3144, %v3151
        %v3154 = vld [vmem:[#allocation4 + $0x12] sm:$0xff]
        %v3155 = vlaneseq
        %v3156 = vshrl.u32 %v3155, 7
        %v3157 = vsub.s32 0, %v3156
        %v3158 = vrot.slane %v3019, %v3157
        %v3159 = vmul.f32 %v3077, %v3158
        %v3160 = vmul.f32 %v3154, %v3158
        %v3161 = vsel %vm3094, %v3159, 0.0
        %v3162 = vsel %vm3095, %v3160, 0.0
        %v3163 = vadd.f32 %v3152, %v3161
        %v3164 = vadd.f32 %v3153, %v3162
        %v3165 = vld [vmem:[%s51] sm:$0x1]
        %v3167 = vlaneseq
        %v3168 = vshrl.u32 %v3167, 7
        %v3169 = vsub.s32 0, %v3168
        %v3170 = vrot.slane %v3165, %v3169
        %v3172 = vadd.f32 %v3163, %v3170
        %v3173 = vadd.f32 %v3164, %v3170
        %v3174 = vxor.u32 %v3172, 2147483648
        %v3175 = vxor.u32 %v3173, 2147483648
        %v3176 = vmul.f32 %v3174, 1.442695
        %v3177 = vpow.pop %v3176
        %v3178 = vmul.f32 %v3175, 1.442695
        %v3179 = vpow.pop %v3178
        %v3180 = vadd.f32 %v3177, 1.0
        %v3181 = vadd.f32 %v3179, 1.0
        %v3182 = vrcp.pop %v3180
        %v3183 = vmul.f32 1.0, %v3182
        %v3184 = vrcp.pop %v3181
        %v3185 = vmul.f32 1.0, %v3184
        %v3186 = vmul.f32 %v3172, %v3183
        %v3187 = vmul.f32 %v3173, %v3185
        %v3188 = vsel %vm3014, %v3186, 0.0
        %v3189 = vsel %vm3014, %v3187, 0.0
        %v3190 = vadd.f32 %v3188, %v3189
        %v3191 = vrot.slane %v3190, 4
        %v3192 = vadd.f32 %v3190, %v3191
        %v3193 = vrot.slane %v3192, 2
        %v3194 = vadd.f32 %v3192, %v3193
        %v3195 = vrot.slane %v3194, 1
        %v3196 = vadd.f32 %v3194, %v3195
        %v3197 = vmul.f32 %v3196, 0.0625
        %v3198 = vld [vmem:[%s53] sm:$0xff]
        %v3199 = vld [vmem:[%s53 + $0x8] sm:$0xff]
        %v3200 = vld [vmem:[%s53 + $0x10] sm:$0xff]
        %v3201 = vld [vmem:[%s53 + $0x18] sm:$0xff]
        %v3202 = vld [vmem:[%s55] sm:$0x1]
        %v3204 = vsel %vm3014, %v3197, 0
        %3206 = vmatprep.subr.mxu0 0.0
        %3207 = vmatpush1.msra.mxu0 %v3198
        %3208 = vmatprep.subr.mxu0 0.0
        %3209 = vmatpush1.msra.mxu0 %v3199
        %3210 = vmatprep.subr.mxu0 0.0
        %3211 = vmatpush1.msra.mxu0 %v3200
        %3212 = vmatprep.subr.mxu0 0.0
        %3213 = vmatpush1.msra.mxu0 %v3201
        %3214 = vmatprep.subr.mxu0 0.0
        %3215 = vmatpush1.msra.mxu0 0.0
        %3216 = vmatprep.subr.mxu0 0.0
        %3217 = vmatpush1.msra.mxu0 0.0
        %3218 = vmatprep.subr.mxu0 0.0
        %3219 = vmatpush1.msra.mxu0 0.0
        %3220 = vmatprep.subr.mxu0 0.0
        %3221 = vmatpush1.msra.mxu0 0.0
        %3222 = vmatprep.subr.mxu0 0.0
        %3223 = vmatpush1.msra.mxu0 0.0
        %3224 = vmatprep.subr.mxu0 0.0
        %3225 = vmatpush1.msra.mxu0 0.0
        %3226 = vmatprep.subr.mxu0 0.0
        %3227 = vmatpush1.msra.mxu0 0.0
        %3228 = vmatprep.subr.mxu0 0.0
        %3229 = vmatpush1.msra.mxu0 0.0
        %3230 = vmatprep.subr.mxu0 0.0
        %3231 = vmatpush1.msra.mxu0 0.0
        %3232 = vmatprep.subr.mxu0 0.0
        %3233 = vmatpush1.msra.mxu0 0.0
        %3234 = vmatprep.subr.mxu0 0.0
        %3235 = vmatpush1.msra.mxu0 0.0
        %3236 = vmatprep.subr.mxu0 0.0
        %3237 = vmatpush1.msra.mxu0 0.0
        %3238 = vmatprep.subr.mxu0 0.0
        %3239 = vmatpush1.msra.mxu0 0.0
        %3240 = vmatprep.subr.mxu0 0.0
        %3241 = vmatpush1.msra.mxu0 0.0
        %3242 = vmatprep.subr.mxu0 0.0
        %3243 = vmatpush1.msra.mxu0 0.0
        %3244 = vmatprep.subr.mxu0 0.0
        %3245 = vmatpush1.msra.mxu0 0.0
        %3246 = vmatprep.subr.mxu0 0.0
        %3247 = vmatpush1.msra.mxu0 0.0
        %3248 = vmatprep.subr.mxu0 0.0
        %3249 = vmatpush1.msra.mxu0 0.0
        %3250 = vmatprep.subr.mxu0 0.0
        %3251 = vmatpush1.msra.mxu0 0.0
        %3252 = vmatprep.subr.mxu0 0.0
        %3253 = vmatpush1.msra.mxu0 0.0
        %3254 = vmatprep.subr.mxu0 0.0
        %3255 = vmatpush1.msra.mxu0 0.0
        %3256 = vmatprep.subr.mxu0 0.0
        %3257 = vmatpush1.msra.mxu0 0.0
        %3258 = vmatprep.subr.mxu0 0.0
        %3259 = vmatpush1.msra.mxu0 0.0
        %3260 = vmatprep.subr.mxu0 0.0
        %3261 = vmatpush1.msra.mxu0 0.0
        %3262 = vmatprep.subr.mxu0 0.0
        %3263 = vmatpush1.msra.mxu0 0.0
        %3264 = vmatprep.subr.mxu0 0.0
        %3265 = vmatpush1.msra.mxu0 0.0
        %3266 = vmatprep.subr.mxu0 0.0
        %3267 = vmatpush1.msra.mxu0 0.0
        %3268 = vmatprep.subr.mxu0 0.0
        %3269 = vmatpush1.msra.mxu0 0.0
        %3270 = vmatprep.mubr.f32.mxu0 0.0
        %3271 = vmatmul.mubr.f32.gmra.mrb[0].mxu0 %v3204
        %v3272 = vpop.f32.mrb[0].mxu0
        %v3273 = vadd.f32 %v3202, %v3272
        %v3274 = vpop.f32.mrb[0].mxu0
        %3275 = vdwg.mxu0
        %v3276 = vxor.u32 %v3273, 2147483648
        %v3277 = vmul.f32 %v3276, 1.442695
        %v3278 = vpow.pop %v3277
        %v3279 = vadd.f32 %v3278, 1.0
        %v3280 = vrcp.pop %v3279
        %v3281 = vmul.f32 1.0, %v3280
        %v3282 = vmul.f32 %v3273, %v3281
        %v3283 = vld [vmem:[%s57] sm:$0xf]
        %v3284 = vld [vmem:[%s59] sm:$0x1]
        %vm3285 = vcmask 31744
        %v3287 = vsel %vm3285, %v3282, 0
        %v3290 = vsel %vm2052, %v3283, 0
        %3292 = vmatprep.subr.mxu0 0.0
        %3293 = vmatpush1.msra.mxu0 %v3290
        %3294 = vmatprep.subr.mxu0 0.0
        %3295 = vmatpush1.msra.mxu0 0.0
        %3296 = vmatprep.subr.mxu0 0.0
        %3297 = vmatpush1.msra.mxu0 0.0
        %3298 = vmatprep.subr.mxu0 0.0
        %3299 = vmatpush1.msra.mxu0 0.0
        %3300 = vmatprep.subr.mxu0 0.0
        %3301 = vmatpush1.msra.mxu0 0.0
        %3302 = vmatprep.subr.mxu0 0.0
        %3303 = vmatpush1.msra.mxu0 0.0
        %3304 = vmatprep.subr.mxu0 0.0
        %3305 = vmatpush1.msra.mxu0 0.0
        %3306 = vmatprep.subr.mxu0 0.0
        %3307 = vmatpush1.msra.mxu0 0.0
        %3308 = vmatprep.subr.mxu0 0.0
        %3309 = vmatpush1.msra.mxu0 0.0
        %3310 = vmatprep.subr.mxu0 0.0
        %3311 = vmatpush1.msra.mxu0 0.0
        %3312 = vmatprep.subr.mxu0 0.0
        %3313 = vmatpush1.msra.mxu0 0.0
        %3314 = vmatprep.subr.mxu0 0.0
        %3315 = vmatpush1.msra.mxu0 0.0
        %3316 = vmatprep.subr.mxu0 0.0
        %3317 = vmatpush1.msra.mxu0 0.0
        %3318 = vmatprep.subr.mxu0 0.0
        %3319 = vmatpush1.msra.mxu0 0.0
        %3320 = vmatprep.subr.mxu0 0.0
        %3321 = vmatpush1.msra.mxu0 0.0
        %3322 = vmatprep.subr.mxu0 0.0
        %3323 = vmatpush1.msra.mxu0 0.0
        %3324 = vmatprep.subr.mxu0 0.0
        %3325 = vmatpush1.msra.mxu0 0.0
        %3326 = vmatprep.subr.mxu0 0.0
        %3327 = vmatpush1.msra.mxu0 0.0
        %3328 = vmatprep.subr.mxu0 0.0
        %3329 = vmatpush1.msra.mxu0 0.0
        %3330 = vmatprep.subr.mxu0 0.0
        %3331 = vmatpush1.msra.mxu0 0.0
        %3332 = vmatprep.subr.mxu0 0.0
        %3333 = vmatpush1.msra.mxu0 0.0
        %3334 = vmatprep.subr.mxu0 0.0
        %3335 = vmatpush1.msra.mxu0 0.0
        %3336 = vmatprep.subr.mxu0 0.0
        %3337 = vmatpush1.msra.mxu0 0.0
        %3338 = vmatprep.subr.mxu0 0.0
        %3339 = vmatpush1.msra.mxu0 0.0
        %3340 = vmatprep.subr.mxu0 0.0
        %3341 = vmatpush1.msra.mxu0 0.0
        %3342 = vmatprep.subr.mxu0 0.0
        %3343 = vmatpush1.msra.mxu0 0.0
        %3344 = vmatprep.subr.mxu0 0.0
        %3345 = vmatpush1.msra.mxu0 0.0
        %3346 = vmatprep.subr.mxu0 0.0
        %3347 = vmatpush1.msra.mxu0 0.0
        %3348 = vmatprep.subr.mxu0 0.0
        %3349 = vmatpush1.msra.mxu0 0.0
        %3350 = vmatprep.subr.mxu0 0.0
        %3351 = vmatpush1.msra.mxu0 0.0
        %3352 = vmatprep.subr.mxu0 0.0
        %3353 = vmatpush1.msra.mxu0 0.0
        %3354 = vmatprep.subr.mxu0 0.0
        %3355 = vmatpush1.msra.mxu0 0.0
        %3356 = vmatprep.mubr.f32.mxu0 0.0
        %3357 = vmatmul.mubr.f32.gmra.mrb[0].mxu0 %v3287
        %v3358 = vpop.f32.mrb[0].mxu0
        %v3359 = vadd.f32 %v3284, %v3358
        %v3360 = vpop.f32.mrb[0].mxu0
        %3361 = vdwg.mxu0
        %v3362 = vxor.u32 %v3359, 2147483648
        %v3363 = vmul.f32 %v3362, 1.442695
        %v3364 = vpow.pop %v3363
        %v3365 = vadd.f32 %v3364, 1.0
        %v3366 = vrcp.pop %v3365
        %v3367 = vmul.f32 1.0, %v3366
        %v3368 = vlaneseq
        %v3369 = vshrl.u32 %v3368, 7
        %v3370 = vsub.s32 0, %v3369
        %v3371 = vrot.slane %v3367, %v3370
        %v3372 = vmul.f32 %v3186, %v3371
        %v3373 = vmul.f32 %v3187, %v3371
        %v3374 = vpack.c.bf16 %v3373, %v3372
        %v3375 = vld [vmem:[%s61] sm:$0xf]
        %v3376 = vld [vmem:[%s61 + $0x4] sm:$0xf]
        %v3377 = vld [vmem:[%s61 + $0x8] sm:$0xf]
        %v3378 = vld [vmem:[%s61 + $0xc] sm:$0xf]
        %v3379 = vld [vmem:[%s63] sm:$0x1]
        %v3381 = vlaneseq
        %v3382 = vshrl.u32 %v3381, 7
        %v3383 = vsub.s32 0, %v3382
        %v3384 = vrot.slane %v3379, %v3383
        %v3390 = vunpack.c.l.b16 %v3375
        %v3391 = vunpack.c.l.b16 %v3376
        %v3392 = vunpack.c.l.b16 %v3377
        %v3393 = vunpack.c.l.b16 %v3378
        %v3394 = vpack.c.b16 %v3391, %v3390
        %v3395 = vpack.c.b16 %v3393, %v3392
        %v3399 = vsel %vm3014, %v3374, 0
        %3401 = vmatprep.subr.bf16.mxu0 0
        %3402 = vmatpush1.bf16.msra.mxu0 %v3394
        %3403 = vmatprep.subr.bf16.mxu0 0
        %3404 = vmatpush1.bf16.msra.mxu0 %v3395
        %3405 = vmatprep.subr.bf16.mxu0 0
        %3406 = vmatpush1.bf16.msra.mxu0 0
        %3407 = vmatprep.subr.bf16.mxu0 0
        %3408 = vmatpush1.bf16.msra.mxu0 0
        %3409 = vmatprep.subr.bf16.mxu0 0
        %3410 = vmatpush1.bf16.msra.mxu0 0
        %3411 = vmatprep.subr.bf16.mxu0 0
        %3412 = vmatpush1.bf16.msra.mxu0 0
        %3413 = vmatprep.subr.bf16.mxu0 0
        %3414 = vmatpush1.bf16.msra.mxu0 0
        %3415 = vmatprep.subr.bf16.mxu0 0
        %3416 = vmatpush1.bf16.msra.mxu0 0
        %3417 = vmatprep.subr.bf16.mxu0 0
        %3418 = vmatpush1.bf16.msra.mxu0 0
        %3419 = vmatprep.subr.bf16.mxu0 0
        %3420 = vmatpush1.bf16.msra.mxu0 0
        %3421 = vmatprep.subr.bf16.mxu0 0
        %3422 = vmatpush1.bf16.msra.mxu0 0
        %3423 = vmatprep.subr.bf16.mxu0 0
        %3424 = vmatpush1.bf16.msra.mxu0 0
        %3425 = vmatprep.subr.bf16.mxu0 0
        %3426 = vmatpush1.bf16.msra.mxu0 0
        %3427 = vmatprep.subr.bf16.mxu0 0
        %3428 = vmatpush1.bf16.msra.mxu0 0
        %3429 = vmatprep.subr.bf16.mxu0 0
        %3430 = vmatpush1.bf16.msra.mxu0 0
        %3431 = vmatprep.subr.bf16.mxu0 0
        %3432 = vmatpush1.bf16.msra.mxu0 0
        %3433 = vmatprep.mubr.bf16.mxu0 0
        %3434 = vmatmul.mubr.bf16.gmra.mrb[0].mxu0 %v3399
        %v3435 = vpop.f32.mrb[0].mxu0
        %v3436 = vadd.f32 %v3384, %v3435
        %v3437 = vpop.f32.mrb[0].mxu0
        %v3438 = vpop.f32.mrb[0].mxu0
        %v3439 = vadd.f32 %v3384, %v3438
        %v3440 = vpop.f32.mrb[0].mxu0
        %3441 = vdwg.mxu0
        %v3442 = vadd.f32 %v3436, %v2932
        %v3443 = vadd.f32 %v3439, %v2935
        %v3444 = vpack.c.bf16 %v3443, %v3442
        %v3445 = vld [vmem:[%s65] sm:$0xf]
        %v3446 = vld [vmem:[%s65 + $0x4] sm:$0xf]
        %v3447 = vld [vmem:[%s67] sm:$0x1]
        %v3449 = vlaneseq
        %v3450 = vshrl.u32 %v3449, 7
        %v3451 = vsub.s32 0, %v3450
        %v3452 = vrot.slane %v3447, %v3451
        %v3456 = vunpack.c.l.b16 %v3445
        %v3457 = vunpack.c.l.b16 %v3446
        %v3458 = vpack.c.b16 %v3457, %v3456
        %v3461 = vsel %vm2277, %v3444, 0
        %3463 = vmatprep.subr.bf16.mxu0 0
        %3464 = vmatpush1.bf16.msra.mxu0 %v3458
        %3465 = vmatprep.subr.bf16.mxu0 0
        %3466 = vmatpush1.bf16.msra.mxu0 0
        %3467 = vmatprep.subr.bf16.mxu0 0
        %3468 = vmatpush1.bf16.msra.mxu0 0
        %3469 = vmatprep.subr.bf16.mxu0 0
        %3470 = vmatpush1.bf16.msra.mxu0 0
        %3471 = vmatprep.subr.bf16.mxu0 0
        %3472 = vmatpush1.bf16.msra.mxu0 0
        %3473 = vmatprep.subr.bf16.mxu0 0
        %3474 = vmatpush1.bf16.msra.mxu0 0
        %3475 = vmatprep.subr.bf16.mxu0 0
        %3476 = vmatpush1.bf16.msra.mxu0 0
        %3477 = vmatprep.subr.bf16.mxu0 0
        %3478 = vmatpush1.bf16.msra.mxu0 0
        %3479 = vmatprep.subr.bf16.mxu0 0
        %3480 = vmatpush1.bf16.msra.mxu0 0
        %3481 = vmatprep.subr.bf16.mxu0 0
        %3482 = vmatpush1.bf16.msra.mxu0 0
        %3483 = vmatprep.subr.bf16.mxu0 0
        %3484 = vmatpush1.bf16.msra.mxu0 0
        %3485 = vmatprep.subr.bf16.mxu0 0
        %3486 = vmatpush1.bf16.msra.mxu0 0
        %3487 = vmatprep.subr.bf16.mxu0 0
        %3488 = vmatpush1.bf16.msra.mxu0 0
        %3489 = vmatprep.subr.bf16.mxu0 0
        %3490 = vmatpush1.bf16.msra.mxu0 0
        %3491 = vmatprep.subr.bf16.mxu0 0
        %3492 = vmatpush1.bf16.msra.mxu0 0
        %3493 = vmatprep.subr.bf16.mxu0 0
        %3494 = vmatpush1.bf16.msra.mxu0 0
        %3495 = vmatprep.mubr.bf16.mxu0 0
        %3496 = vmatmul.mubr.bf16.gmra.mrb[0].mxu0 %v3461
        %v3497 = vpop.f32.mrb[0].mxu0
        %v3498 = vadd.f32 %v3452, %v3497
        %v3499 = vpop.f32.mrb[0].mxu0
        %v3500 = vpop.f32.mrb[0].mxu0
        %v3501 = vadd.f32 %v3452, %v3500
        %v3502 = vpop.f32.mrb[0].mxu0
        %3503 = vdwg.mxu0
        %v3504 = vxor.u32 %v3498, 2147483648
        %v3505 = vxor.u32 %v3501, 2147483648
        %v3506 = vmul.f32 %v3504, 1.442695
        %v3507 = vpow.pop %v3506
        %v3508 = vmul.f32 %v3505, 1.442695
        %v3509 = vpow.pop %v3508
        %v3510 = vadd.f32 %v3507, 1.0
        %v3511 = vadd.f32 %v3509, 1.0
        %v3512 = vrcp.pop %v3510
        %v3513 = vmul.f32 1.0, %v3512
        %v3514 = vrcp.pop %v3511
        %v3515 = vmul.f32 1.0, %v3514
        %v3516 = vmul.f32 %v3498, %v3513
        %v3517 = vmul.f32 %v3501, %v3515
        %v3518 = vsel %vm3014, %v3516, 0.0
        %v3519 = vsel %vm3014, %v3517, 0.0
        %v3520 = vadd.f32 %v3518, %v3519
        %v3521 = vrot.slane %v3520, 4
        %v3522 = vadd.f32 %v3520, %v3521
        %v3523 = vrot.slane %v3522, 2
        %v3524 = vadd.f32 %v3522, %v3523
        %v3525 = vrot.slane %v3524, 1
        %v3526 = vadd.f32 %v3524, %v3525
        %v3527 = vmul.f32 %v3526, 0.0625
        %v3528 = vld [vmem:[%s69] sm:$0xff]
        %v3529 = vld [vmem:[%s69 + $0x8] sm:$0xff]
        %v3530 = vld [vmem:[%s69 + $0x10] sm:$0xff]
        %v3531 = vld [vmem:[%s69 + $0x18] sm:$0xff]
        %v3532 = vld [vmem:[%s71] sm:$0x1]
        %v3534 = vsel %vm3014, %v3527, 0
        %3536 = vmatprep.subr.mxu0 0.0
        %3537 = vmatpush1.msra.mxu0 %v3528
        %3538 = vmatprep.subr.mxu0 0.0
        %3539 = vmatpush1.msra.mxu0 %v3529
        %3540 = vmatprep.subr.mxu0 0.0
        %3541 = vmatpush1.msra.mxu0 %v3530
        %3542 = vmatprep.subr.mxu0 0.0
        %3543 = vmatpush1.msra.mxu0 %v3531
        %3544 = vmatprep.subr.mxu0 0.0
        %3545 = vmatpush1.msra.mxu0 0.0
        %3546 = vmatprep.subr.mxu0 0.0
        %3547 = vmatpush1.msra.mxu0 0.0
        %3548 = vmatprep.subr.mxu0 0.0
        %3549 = vmatpush1.msra.mxu0 0.0
        %3550 = vmatprep.subr.mxu0 0.0
        %3551 = vmatpush1.msra.mxu0 0.0
        %3552 = vmatprep.subr.mxu0 0.0
        %3553 = vmatpush1.msra.mxu0 0.0
        %3554 = vmatprep.subr.mxu0 0.0
        %3555 = vmatpush1.msra.mxu0 0.0
        %3556 = vmatprep.subr.mxu0 0.0
        %3557 = vmatpush1.msra.mxu0 0.0
        %3558 = vmatprep.subr.mxu0 0.0
        %3559 = vmatpush1.msra.mxu0 0.0
        %3560 = vmatprep.subr.mxu0 0.0
        %3561 = vmatpush1.msra.mxu0 0.0
        %3562 = vmatprep.subr.mxu0 0.0
        %3563 = vmatpush1.msra.mxu0 0.0
        %3564 = vmatprep.subr.mxu0 0.0
        %3565 = vmatpush1.msra.mxu0 0.0
        %3566 = vmatprep.subr.mxu0 0.0
        %3567 = vmatpush1.msra.mxu0 0.0
        %3568 = vmatprep.subr.mxu0 0.0
        %3569 = vmatpush1.msra.mxu0 0.0
        %3570 = vmatprep.subr.mxu0 0.0
        %3571 = vmatpush1.msra.mxu0 0.0
        %3572 = vmatprep.subr.mxu0 0.0
        %3573 = vmatpush1.msra.mxu0 0.0
        %3574 = vmatprep.subr.mxu0 0.0
        %3575 = vmatpush1.msra.mxu0 0.0
        %3576 = vmatprep.subr.mxu0 0.0
        %3577 = vmatpush1.msra.mxu0 0.0
        %3578 = vmatprep.subr.mxu0 0.0
        %3579 = vmatpush1.msra.mxu0 0.0
        %3580 = vmatprep.subr.mxu0 0.0
        %3581 = vmatpush1.msra.mxu0 0.0
        %3582 = vmatprep.subr.mxu0 0.0
        %3583 = vmatpush1.msra.mxu0 0.0
        %3584 = vmatprep.subr.mxu0 0.0
        %3585 = vmatpush1.msra.mxu0 0.0
        %3586 = vmatprep.subr.mxu0 0.0
        %3587 = vmatpush1.msra.mxu0 0.0
        %3588 = vmatprep.subr.mxu0 0.0
        %3589 = vmatpush1.msra.mxu0 0.0
        %3590 = vmatprep.subr.mxu0 0.0
        %3591 = vmatpush1.msra.mxu0 0.0
        %3592 = vmatprep.subr.mxu0 0.0
        %3593 = vmatpush1.msra.mxu0 0.0
        %3594 = vmatprep.subr.mxu0 0.0
        %3595 = vmatpush1.msra.mxu0 0.0
        %3596 = vmatprep.subr.mxu0 0.0
        %3597 = vmatpush1.msra.mxu0 0.0
        %3598 = vmatprep.subr.mxu0 0.0
        %3599 = vmatpush1.msra.mxu0 0.0
        %3600 = vmatprep.mubr.f32.mxu0 0.0
        %3601 = vmatmul.mubr.f32.gmra.mrb[0].mxu0 %v3534
        %v3602 = vpop.f32.mrb[0].mxu0
        %v3603 = vadd.f32 %v3532, %v3602
        %v3604 = vpop.f32.mrb[0].mxu0
        %3605 = vdwg.mxu0
        %vm3606 = vcmask 73728
        %3607 = vst.msk [vmem:[%s1090] sm:$0x1] %vm3606, %v3603
        %s3608 = sand.u32 %s856, 1
        %s3609 = scalar_lea.sflag [#allocation6], %s3608
        %s3610 = sand.u32 %s856, 1
        %s3611 = scalar_lea.vmem [#allocation5], %s3610
        // Predicated region
        $region165: #{_lambda_.1} parent=163 // pred_check
          %p3612 = pneg %p866
        $region166: #{_lambda_.1} parent=163 // pred_check_branch
          %3614 = sbr.rel (%p3612) target = $region168
        $region167: #{_lambda_.1} parent=163 // pred_region
          %s3616 = ssub.s32 16, 16
          %3617 = vsyncadd %s3609, %s3616
          %s3618 = smul.addr %s87, 16
          %s3619 = scalar_lea.hbm %s73, %s3618
          %s3621 = sshll.u32 %s3611, 4
          %s3622 = int_to_ptr.vmem [resolvable:$true] %s3621
          %3624 = dma.vmem_to_hbm [thread:$0]  %s3622, 16, %s3619, %s3609
        $region168: #{_lambda_.1} parent=163 // pred_fallthru
          _
      $region164: #{_lambda_.1} parent=5 // pred_fallthru
        _
      %p3625 = scmp.le.s32.totalorder 2, %s82
      // Predicated region
      $region169: #{_lambda_.1} parent=5 // pred_check
        %p3626 = pneg %p3625
      $region170: #{_lambda_.1} parent=5 // pred_check_branch
        %3628 = sbr.rel (%p3626) target = $region172
      $region171: #{_lambda_.1} parent=5 // pred_region
        %s3629 = ssub.s32 %s82, 2
        // Predicated region
        $region173: #{_lambda_.1} parent=171 // pred_check
          %p3630 = pneg %p872
        $region174: #{_lambda_.1} parent=171 // pred_check_branch
          %3632 = sbr.rel (%p3630) target = $region176
        $region175: #{_lambda_.1} parent=171 // pred_region
          %s3633 = sand.u32 %s857, 1
          %s3634 = scalar_lea.sflag [#allocation6], %s3633
          %s3635 = sand.u32 %s857, 1
          %s3636 = scalar_lea.vmem [#allocation5], %s3635
          %3637 = dma.done %s3634, 16
        $region176: #{_lambda_.1} parent=171 // pred_fallthru
          _
      $region172: #{_lambda_.1} parent=5 // pred_fallthru
        _
    $region6: #{_lambda_.1} parent=1 // loop_footer
      %s86 = sadd.s32 1, %s82
    $region7: #{_lambda_.1} parent=1 // loop_footer_branch
      %81 = sbr.rel target = $region3
    $region8: #{_lambda_.1} parent=1 // loop_exit
      _
    %3638 = vsyncpa [#allocation6], 1
    %s3639 = scalar_lea.sflag [#allocation6], 1
    %3640 = vsyncpa %s3639, 1

</llo_original>
